<compile_context>
chip_gen: v7x
topology: tpu7x:2x2x1
jax: 0.10.0
libtpu: 0.0.40
codegen_flags: <defaults>
</compile_context>

<pallas_src>
import functools

import jax
import jax.numpy as jnp
from jax.experimental import pallas as pl
from jax.experimental.pallas import tpu as pltpu


# ------------------------------- Pallas kernel -------------------------------

def vq_kernel(z_ref, embT_ref, emb_ref, e2_ref, zq_ref, idx_ref, err_ref):
    """One TM-row block of the vector-quantizer.

    z_ref:    (TM, D)   f32   flattened input vectors
    embT_ref: (D, n_e)  bf16  codebook transposed (resident, distance matmul)
    emb_ref:  (n_e, D)  bf16  codebook (resident, one-hot gather matmul)
    e2_ref:   (1, n_e)  f32   per-code squared norms
    zq_ref:   (TM, D)   f32   quantized vectors (output)
    idx_ref:  (TM, 1)   i32   argmin code indices (output)
    err_ref:  (TM, 1)   f32   per-row sum of squared error (output, for the loss)
    """
    z = z_ref[...]                                   # (TM, D) f32
    zb = z.astype(jnp.bfloat16)

    # d = ||z||^2 + ||e||^2 - 2 z.e ; the ||z||^2 term is constant per row and
    # does not affect the argmin, so it is dropped from the score.
    cross = jnp.dot(zb, embT_ref[...],
                    preferred_element_type=jnp.float32)          # (TM, n_e) f32
    scores = e2_ref[...] - 2.0 * cross                           # (TM, n_e)

    n_e = scores.shape[-1]
    min_val = jnp.min(scores, axis=-1, keepdims=True)            # (TM, 1)
    iota = jax.lax.broadcasted_iota(jnp.int32, scores.shape, 1).astype(jnp.float32)
    # first index attaining the minimum (matches torch.argmin tie-breaking)
    idx_f = jnp.min(jnp.where(scores <= min_val, iota, jnp.float32(n_e)),
                    axis=-1, keepdims=True)                      # (TM, 1)

    # Gather the selected codes via a one-hot matmul (MXU, no dynamic gather).
    onehot = (iota == idx_f).astype(jnp.bfloat16)                # (TM, n_e)
    zq = jnp.dot(onehot, emb_ref[...],
                 preferred_element_type=jnp.float32)             # (TM, D) f32

    zq_ref[...] = zq
    idx_ref[...] = idx_f.astype(jnp.int32)
    diff = zq - z
    err_ref[...] = jnp.sum(diff * diff, axis=-1, keepdims=True)


# --------------------------------- wrapper -----------------------------------

def _round_up(x, m):
    return (x + m - 1) // m * m


def _pick_tile(m):
    if m >= 4096:
        return 512
    if m >= 1024:
        return 256
    if m >= 128:
        return 128
    return _round_up(m, 8)


@functools.partial(jax.jit, static_argnames=("beta",))
def vq_forward(z, emb, *, beta=0.25):
    """VectorQuantizer2.forward (legacy=False, remap=None, sane_index_shape=False).

    z:   (B, T, C, H, W) float, C == e_dim
    emb: (n_e, e_dim)    float codebook
    returns (z_q (B,T,C,H,W), loss, (None, None, min_encoding_indices))
    """
    B, T, C, H, W = z.shape
    n_e, D = emb.shape
    assert C == D, (C, D)
    assert D % 128 == 0 and n_e % 128 == 0, "e_dim and n_e must be multiples of 128"

    # b t c h w -> b t h w c -> (M, C)
    zt = jnp.transpose(z, (0, 1, 3, 4, 2))
    zf = zt.reshape(-1, C).astype(jnp.float32)
    M = zf.shape[0]

    TM = _pick_tile(M)
    Mp = _round_up(M, TM)
    if Mp != M:
        zf = jnp.pad(zf, ((0, Mp - M), (0, 0)))

    emb_b = emb.astype(jnp.bfloat16)          # (n_e, D)
    embT_b = emb_b.T                          # (D, n_e)
    e2 = jnp.sum(emb.astype(jnp.float32) ** 2, axis=1)[None, :]  # (1, n_e)

    zq_flat, idx2d, err2d = pl.pallas_call(
        vq_kernel,
        out_shape=(
            jax.ShapeDtypeStruct((Mp, D), jnp.float32),
            jax.ShapeDtypeStruct((Mp, 1), jnp.int32),
            jax.ShapeDtypeStruct((Mp, 1), jnp.float32),
        ),
        grid_spec=pltpu.PrefetchScalarGridSpec(
            num_scalar_prefetch=0,
            grid=(Mp // TM,),
            in_specs=[
                pl.BlockSpec((TM, D), lambda i: (i, 0)),     # z block
                pl.BlockSpec((D, n_e), lambda i: (0, 0)),    # codebook^T (resident)
                pl.BlockSpec((n_e, D), lambda i: (0, 0)),    # codebook   (resident)
                pl.BlockSpec((1, n_e), lambda i: (0, 0)),    # ||e||^2    (resident)
            ],
            out_specs=[
                pl.BlockSpec((TM, D), lambda i: (i, 0)),
                pl.BlockSpec((TM, 1), lambda i: (i, 0)),
                pl.BlockSpec((TM, 1), lambda i: (i, 0)),
            ],
        ),
        compiler_params=pltpu.CompilerParams(
            dimension_semantics=("parallel",),
            vmem_limit_bytes=64 << 20),
    )(zf, embT_b, emb_b, e2)

    zq_flat = zq_flat[:M]
    idx = idx2d[:M, 0]
    err = err2d[:M, 0]

    # loss = beta * mean((sg(z_q) - z)^2) + mean((z_q - sg(z))^2)   (legacy=False)
    # Forward value of both terms is the same MSE.
    mse = jnp.sum(err) / (M * C)
    loss = beta * mse + mse

    # Straight-through z_q = z + sg(z_q - z): forward value is z_q itself.
    zq = zq_flat.reshape(B, T, H, W, C)
    zq = jnp.transpose(zq, (0, 1, 4, 2, 3))   # back to (B, T, C, H, W)

    # TODO(synk): remap / unknown_index re-indexing path (remap=None default) not implemented.
    return zq, loss, (None, None, idx)


# ----------------------------- pure-JAX reference ----------------------------

def vq_reference(z, emb, beta=0.25):
    B, T, C, H, W = z.shape
    zt = jnp.transpose(z, (0, 1, 3, 4, 2))
    zf = zt.reshape(-1, C).astype(jnp.float32)
    e2 = jnp.sum(emb.astype(jnp.float32) ** 2, axis=1)[None, :]
    cross = jnp.dot(zf.astype(jnp.bfloat16), emb.astype(jnp.bfloat16).T,
                    preferred_element_type=jnp.float32)
    # ||z||^2 is row-constant -> omitted, does not change the argmin.
    scores = e2 - 2.0 * cross
    idx = jnp.argmin(scores, axis=1).astype(jnp.int32)
    zq = jnp.take(emb.astype(jnp.float32), idx, axis=0).reshape(zt.shape)
    mse = jnp.mean((zq - zt) ** 2)
    loss = beta * mse + mse
    zq_out = jnp.transpose(zq, (0, 1, 4, 2, 3))
    return zq_out, loss, idx


# ----------------------------------- main ------------------------------------

if __name__ == "__main__":
    # Small shapes consistent with the module defaults (e_dim=256, n_e=1024).
    B, T, C, H, W = 2, 2, 256, 8, 8
    n_e, beta = 1024, 0.25

    key = jax.random.PRNGKey(0)
    kz, ke = jax.random.split(key)
    z = jax.random.normal(kz, (B, T, C, H, W), jnp.float32)
    emb = jax.random.uniform(ke, (n_e, C), jnp.float32,
                             minval=-1.0 / n_e, maxval=1.0 / n_e)

    zq, loss, (_, _, idx) = vq_forward(z, emb, beta=beta)
    zq = jax.block_until_ready(zq)

    zq_ref, loss_ref, idx_ref = vq_reference(z, emb, beta)

    assert zq.shape == z.shape, zq.shape
    assert idx.shape == (B * T * H * W,), idx.shape
    n_mismatch = int(jnp.sum(idx != idx_ref))
    assert n_mismatch == 0, f"argmin index mismatches: {n_mismatch}"
    max_err = float(jnp.max(jnp.abs(zq - zq_ref)))
    assert max_err < 1e-3, f"z_q max abs error too large: {max_err}"
    loss_err = abs(float(loss) - float(loss_ref))
    assert loss_err < 1e-4, f"loss error too large: {loss_err}"
    print("KERNEL_OK")
</pallas_src>

<mosaic_0001>
module attributes {stable_mosaic.version = 11 : i64} {
  func.func @vq_kernel(%arg0: i32, %arg1: memref<128x256xf32, #tpu.memory_space<vmem>>, %arg2: memref<256x1024xbf16, #tpu.memory_space<vmem>>, %arg3: memref<1024x256xbf16, #tpu.memory_space<vmem>>, %arg4: memref<1x1024xf32, #tpu.memory_space<vmem>>, %arg5: memref<128x256xf32, #tpu.memory_space<vmem>>, %arg6: memref<128x1xi32, #tpu.memory_space<vmem>>, %arg7: memref<128x1xf32, #tpu.memory_space<vmem>>) attributes {dimension_semantics = [#tpu.dimension_semantics<parallel>], iteration_bounds = array<i64: 2>, scalar_prefetch = 0 : i64, scratch_operands = 0 : i64, tpu.core_type = #tpu.core_type<tc>, window_params = [{transform_indices = @transform_0, window_bounds = array<i64: 128, 256>}, {pipeline_mode = #tpu.pipeline_mode<synchronous>, transform_indices = @transform_1, window_bounds = array<i64: 256, 1024>}, {pipeline_mode = #tpu.pipeline_mode<synchronous>, transform_indices = @transform_2, window_bounds = array<i64: 1024, 256>}, {pipeline_mode = #tpu.pipeline_mode<synchronous>, transform_indices = @transform_3, window_bounds = array<i64: 1, 1024>}, {transform_indices = @transform_4, window_bounds = array<i64: 128, 256>}, {transform_indices = @transform_5, window_bounds = array<i64: 128, 1>}, {transform_indices = @transform_6, window_bounds = array<i64: 128, 1>}]} {
    %c0 = arith.constant 0 : index
    %c0_0 = arith.constant 0 : index
    %0 = vector.load %arg1[%c0, %c0_0] : memref<128x256xf32, #tpu.memory_space<vmem>>, vector<128x256xf32>
    %1 = arith.truncf %0 : vector<128x256xf32> to vector<128x256xbf16>
    %c0_1 = arith.constant 0 : index
    %c0_2 = arith.constant 0 : index
    %2 = vector.load %arg2[%c0_1, %c0_2] : memref<256x1024xbf16, #tpu.memory_space<vmem>>, vector<256x1024xbf16>
    %cst = arith.constant dense<0.000000e+00> : vector<128x1024xf32>
    %3 = tpu.matmul %1, %2, %cst {dimension_numbers = #tpu.dot_dimension_numbers<[1], [0], [0], [1], [0, 0, 1, 1], [], []>} : vector<128x256xbf16>, vector<256x1024xbf16>, vector<128x1024xf32> -> vector<128x1024xf32>
    %c0_3 = arith.constant 0 : index
    %c0_4 = arith.constant 0 : index
    %4 = vector.load %arg4[%c0_3, %c0_4] : memref<1x1024xf32, #tpu.memory_space<vmem>>, vector<1x1024xf32>
    %cst_5 = arith.constant 2.000000e+00 : f32
    %5 = vector.broadcast %cst_5 : f32 to vector<128x1024xf32>
    %6 = arith.mulf %5, %3 : vector<128x1024xf32>
    %7 = vector.broadcast %4 : vector<1x1024xf32> to vector<128x1024xf32>
    %8 = arith.subf %7, %6 : vector<128x1024xf32>
    %cst_6 = arith.constant dense<0x7F800000> : vector<128xf32>
    %9 = vector.multi_reduction <minimumf>, %8, %cst_6 [1] : vector<128x1024xf32> to vector<128xf32>
    %10 = vector.shape_cast %9 : vector<128xf32> to vector<128x1xf32>
    %11 = tpu.iota {dimensions = array<i32: 1>} : vector<128x1024xi32>
    %12 = arith.sitofp %11 : vector<128x1024xi32> to vector<128x1024xf32>
    %13 = vector.broadcast %10 : vector<128x1xf32> to vector<128x1024xf32>
    %14 = arith.cmpf ole, %8, %13 : vector<128x1024xf32>
    %cst_7 = arith.constant 1.024000e+03 : f32
    %15 = vector.broadcast %cst_7 : f32 to vector<128x1024xf32>
    %16 = arith.select %14, %12, %15 : vector<128x1024xi1>, vector<128x1024xf32>
    %cst_8 = arith.constant dense<0x7F800000> : vector<128xf32>
    %17 = vector.multi_reduction <minimumf>, %16, %cst_8 [1] : vector<128x1024xf32> to vector<128xf32>
    %18 = vector.shape_cast %17 : vector<128xf32> to vector<128x1xf32>
    %19 = vector.broadcast %18 : vector<128x1xf32> to vector<128x1024xf32>
    %20 = arith.cmpf oeq, %12, %19 : vector<128x1024xf32>
    %21 = arith.extui %20 : vector<128x1024xi1> to vector<128x1024xi32>
    %22 = arith.sitofp %21 : vector<128x1024xi32> to vector<128x1024xf32>
    %23 = arith.truncf %22 : vector<128x1024xf32> to vector<128x1024xbf16>
    %c0_9 = arith.constant 0 : index
    %c0_10 = arith.constant 0 : index
    %24 = vector.load %arg3[%c0_9, %c0_10] : memref<1024x256xbf16, #tpu.memory_space<vmem>>, vector<1024x256xbf16>
    %cst_11 = arith.constant dense<0.000000e+00> : vector<128x256xf32>
    %25 = tpu.matmul %23, %24, %cst_11 {dimension_numbers = #tpu.dot_dimension_numbers<[1], [0], [0], [1], [0, 0, 1, 1], [], []>} : vector<128x1024xbf16>, vector<1024x256xbf16>, vector<128x256xf32> -> vector<128x256xf32>
    %c0_12 = arith.constant 0 : index
    %c0_13 = arith.constant 0 : index
    %26 = vector.load %arg5[%c0_12, %c0_13] : memref<128x256xf32, #tpu.memory_space<vmem>>, vector<128x256xf32>
    tpu.vector_store %arg5[%c0_12, %c0_13], %25 {strides = array<i32>} : memref<128x256xf32, #tpu.memory_space<vmem>>, vector<128x256xf32>,
    %27 = arith.fptosi %18 : vector<128x1xf32> to vector<128x1xi32>
    %c0_14 = arith.constant 0 : index
    %c0_15 = arith.constant 0 : index
    %28 = vector.load %arg6[%c0_14, %c0_15] : memref<128x1xi32, #tpu.memory_space<vmem>>, vector<128x1xi32>
    tpu.vector_store %arg6[%c0_14, %c0_15], %27 {strides = array<i32>} : memref<128x1xi32, #tpu.memory_space<vmem>>, vector<128x1xi32>,
    %29 = arith.subf %25, %0 : vector<128x256xf32>
    %30 = arith.mulf %29, %29 : vector<128x256xf32>
    %cst_16 = arith.constant dense<0.000000e+00> : vector<128xf32>
    %31 = vector.multi_reduction <add>, %30, %cst_16 [1] : vector<128x256xf32> to vector<128xf32>
    %32 = vector.shape_cast %31 : vector<128xf32> to vector<128x1xf32>
    %c0_17 = arith.constant 0 : index
    %c0_18 = arith.constant 0 : index
    %33 = vector.load %arg7[%c0_17, %c0_18] : memref<128x1xf32, #tpu.memory_space<vmem>>, vector<128x1xf32>
    tpu.vector_store %arg7[%c0_17, %c0_18], %32 {strides = array<i32>} : memref<128x1xf32, #tpu.memory_space<vmem>>, vector<128x1xf32>,
    return
  }
  func.func @transform_0(%arg0: i32) -> (i32, i32) {
    %c0_i32 = arith.constant 0 : i32
    %c0_i32_0 = arith.constant 0 : i32
    return %arg0, %c0_i32 : i32, i32
  }
  func.func @transform_1(%arg0: i32) -> (i32, i32) {
    %c0_i32 = arith.constant 0 : i32
    %c0_i32_0 = arith.constant 0 : i32
    %c0_i32_1 = arith.constant 0 : i32
    return %c0_i32, %c0_i32_0 : i32, i32
  }
  func.func @transform_2(%arg0: i32) -> (i32, i32) {
    %c0_i32 = arith.constant 0 : i32
    %c0_i32_0 = arith.constant 0 : i32
    %c0_i32_1 = arith.constant 0 : i32
    return %c0_i32, %c0_i32_0 : i32, i32
  }
  func.func @transform_3(%arg0: i32) -> (i32, i32) {
    %c0_i32 = arith.constant 0 : i32
    %c0_i32_0 = arith.constant 0 : i32
    %c0_i32_1 = arith.constant 0 : i32
    return %c0_i32, %c0_i32_0 : i32, i32
  }
  func.func @transform_4(%arg0: i32) -> (i32, i32) {
    %c0_i32 = arith.constant 0 : i32
    %c0_i32_0 = arith.constant 0 : i32
    return %arg0, %c0_i32 : i32, i32
  }
  func.func @transform_5(%arg0: i32) -> (i32, i32) {
    %c0_i32 = arith.constant 0 : i32
    %c0_i32_0 = arith.constant 0 : i32
    return %arg0, %c0_i32 : i32, i32
  }
  func.func @transform_6(%arg0: i32) -> (i32, i32) {
    %c0_i32 = arith.constant 0 : i32
    %c0_i32_0 = arith.constant 0 : i32
    return %arg0, %c0_i32 : i32, i32
  }
}

</mosaic_0001>

<llo_original>
// kernel: vq_forward.1
$region0: #{vq_forward.1}
  #allocation0 [shape = 'u32[]', space=smem, size = 0x4, offset = 0x4, fixed_abs, tag = 'smem constant byte address 0x4 - core index']
  #allocation1 [shape = 'u32[144,128]{1,0:T(1,128)}', space=vmem, size = 0x12000, scoped, tag = 'internal scratch']
  %s0 = inlined_call_operand.hbm [shape: f32[256,256], index: 0, kind: input, shape index: {}]
  %s1 = inlined_call_operand.hbm [shape: bf16[256,1024], index: 1, kind: input, shape index: {}]
  %s2 = inlined_call_operand.hbm [shape: bf16[1024,256], index: 2, kind: input, shape index: {}]
  %s3 = inlined_call_operand.hbm [shape: f32[1,1024], index: 3, kind: input, shape index: {}]
  %s4 = inlined_call_operand.hbm [shape: f32[256,256], index: 4, kind: output, shape index: {0}]
  %s5 = inlined_call_operand.hbm [shape: s32[256,1], index: 5, kind: output, shape index: {1}]
  %s6 = inlined_call_operand.hbm [shape: f32[256,1], index: 6, kind: output, shape index: {2}]
  %7 = xla_tuple %s4, %s5, %s6
  %s8 = sld [smem:[#allocation0]]
  $region81: #{vq_forward.1} parent=0
    _
  %s10 = ssub.s32 1, %s8
  %s11 = scalar_select 0, %s10, %s8
  $region1: #{vq_forward.1} parent=0
    #allocation2 [shape = 'u8[262144]{0}', space=vmem, size = 0x40000, scoped, tag = 'input window, operand 0']
    #allocation3 [shape = 's32[2]{0}', space=sflag, size = 0x8, scoped, tag = 'scoped memory for vq_forward.1']
    #allocation4 [shape = 's32[2]{0}', space=sflag, size = 0x8, scoped, tag = 'scoped memory for vq_forward.1']
    #allocation5 [shape = 'u8[524288]{0}', space=vmem, size = 0x80000, scoped, tag = 'input window, operand 1, single buffered']
    #allocation6 [shape = 's32[1]{0}', space=sflag, size = 0x4, scoped, tag = 'scoped memory for vq_forward.1']
    #allocation7 [shape = 'u8[524288]{0}', space=vmem, size = 0x80000, scoped, tag = 'input window, operand 2, single buffered']
    #allocation8 [shape = 'u8[4096]{0}', space=vmem, size = 0x1000, scoped, tag = 'input window, operand 3, single buffered']
    #allocation9 [shape = 's32[1]{0}', space=sflag, size = 0x4, scoped, tag = 'scoped memory for vq_forward.1']
    #allocation10 [shape = 'u8[262144]{0}', space=vmem, size = 0x40000, scoped, tag = 'output window, operand 0']
    #allocation11 [shape = 'u8[131072]{0}', space=vmem, size = 0x20000, scoped, tag = 'output window, operand 1']
    #allocation12 [shape = 's32[2]{0}', space=sflag, size = 0x8, scoped, tag = 'scoped memory for vq_forward.1']
    #allocation13 [shape = 'u8[131072]{0}', space=vmem, size = 0x20000, scoped, tag = 'output window, operand 2']
    %12 = vsyncpa [#allocation3], 0
    %s13 = scalar_lea.sflag [#allocation3], 1
    %14 = vsyncpa %s13, 0
    %15 = vsyncpa [#allocation6], 0
    %16 = vsyncpa [#allocation9], 0
    %17 = vsyncpa [#allocation4], 0
    %s18 = scalar_lea.sflag [#allocation4], 1
    %19 = vsyncpa %s18, 0
    %20 = vsyncpa [#allocation12], 0
    %s21 = scalar_lea.sflag [#allocation12], 1
    %22 = vsyncpa %s21, 0
    loop: start=0, step=1, limit=4
    $region2: #{vq_forward.1} parent=1 // loop_pre_header
      _
    $region3: #{vq_forward.1} parent=1 // loop_header
      %s24 = sphi 0, %s28
      %p25 = scmp.ge.s32.totalorder %s24, 4
      %s34 = sphi 0, %s36
      %s37 = sphi 0, %s34
      %s38 = sphi 0, %s37
      %s54 = sphi 0, %s38
      %s58 = sphi 0, %s58
      %s60 = sphi 0, %s58
      %s61 = sphi 0, %s60
      %s75 = sphi 0, %s61
      %s79 = sphi 0, %s79
      %s81 = sphi 0, %s79
      %s82 = sphi 0, %s81
      %s96 = sphi 0, %s82
      %s100 = sphi 0, %s100
      %s102 = sphi 0, %s100
      %s103 = sphi 0, %s102
      %s117 = sphi 0, %s103
      %s123 = sphi 0, %s125
      %s126 = sphi 0, %s123
      %s127 = sphi 0, %s126
      %s143 = sphi 0, %s127
      %s149 = sphi 0, %s151
      %s152 = sphi 0, %s149
      %s153 = sphi 0, %s152
      %s169 = sphi 0, %s153
      %s175 = sphi 0, %s177
      %s178 = sphi 0, %s175
      %s179 = sphi 0, %s178
      %s195 = sphi 0, %s179
    $region4: #{vq_forward.1} parent=1 // loop_header_branch
      %27 = sbr.rel (%p25) target = $region8
    $region5: #{vq_forward.1} parent=1 // loop_body
      %s29 = ssub.s32 %s24, 1
      %s30 = ssub.s32 %s24, 2
      %s31 = sadd.s32 %s24, 1
      %s32 = ssub.s32 %s24, %s31
      %p33 = scmp.eq.s32.totalorder %s32, 0
      %s35 = sadd.s32 %s34, 1
      %s36 = scalar_select %p33, %s34, %s35
      %p39 = pneg %p33
      %p40 = scmp.eq.s32.totalorder %s24, 1
      %p41 = por %p39, %p40
      %p42 = scmp.ne.s32.totalorder %s34, %s37
      %p43 = scmp.eq.s32.totalorder %s24, 0
      %p44 = por %p42, %p43
      %p45 = scmp.ne.s32.totalorder %s34, %s37
      %p46 = scmp.eq.s32.totalorder %s29, 1
      %p47 = por %p45, %p46
      %p48 = scmp.ne.s32.totalorder %s37, %s38
      %p49 = scmp.eq.s32.totalorder %s29, 0
      %p50 = por %p48, %p49
      %p51 = scmp.ne.s32.totalorder %s37, %s38
      %p52 = scmp.eq.s32.totalorder %s30, 1
      %p53 = por %p51, %p52
      %p55 = scmp.ne.s32.totalorder %s38, %s54
      %p56 = scmp.eq.s32.totalorder %s30, 0
      %p57 = por %p55, %p56
      %s59 = sadd.s32 %s58, 1
      %p62 = scmp.eq.s32.totalorder %s24, 1
      %p63 = scmp.ne.s32.totalorder %s58, %s60
      %p64 = scmp.eq.s32.totalorder %s24, 0
      %p65 = por %p63, %p64
      %p66 = scmp.ne.s32.totalorder %s58, %s60
      %p67 = scmp.eq.s32.totalorder %s29, 1
      %p68 = por %p66, %p67
      %p69 = scmp.ne.s32.totalorder %s60, %s61
      %p70 = scmp.eq.s32.totalorder %s29, 0
      %p71 = por %p69, %p70
      %p72 = scmp.ne.s32.totalorder %s60, %s61
      %p73 = scmp.eq.s32.totalorder %s30, 1
      %p74 = por %p72, %p73
      %p76 = scmp.ne.s32.totalorder %s61, %s75
      %p77 = scmp.eq.s32.totalorder %s30, 0
      %p78 = por %p76, %p77
      %s80 = sadd.s32 %s79, 1
      %p83 = scmp.eq.s32.totalorder %s24, 1
      %p84 = scmp.ne.s32.totalorder %s79, %s81
      %p85 = scmp.eq.s32.totalorder %s24, 0
      %p86 = por %p84, %p85
      %p87 = scmp.ne.s32.totalorder %s79, %s81
      %p88 = scmp.eq.s32.totalorder %s29, 1
      %p89 = por %p87, %p88
      %p90 = scmp.ne.s32.totalorder %s81, %s82
      %p91 = scmp.eq.s32.totalorder %s29, 0
      %p92 = por %p90, %p91
      %p93 = scmp.ne.s32.totalorder %s81, %s82
      %p94 = scmp.eq.s32.totalorder %s30, 1
      %p95 = por %p93, %p94
      %p97 = scmp.ne.s32.totalorder %s82, %s96
      %p98 = scmp.eq.s32.totalorder %s30, 0
      %p99 = por %p97, %p98
      %s101 = sadd.s32 %s100, 1
      %p104 = scmp.eq.s32.totalorder %s24, 1
      %p105 = scmp.ne.s32.totalorder %s100, %s102
      %p106 = scmp.eq.s32.totalorder %s24, 0
      %p107 = por %p105, %p106
      %p108 = scmp.ne.s32.totalorder %s100, %s102
      %p109 = scmp.eq.s32.totalorder %s29, 1
      %p110 = por %p108, %p109
      %p111 = scmp.ne.s32.totalorder %s102, %s103
      %p112 = scmp.eq.s32.totalorder %s29, 0
      %p113 = por %p111, %p112
      %p114 = scmp.ne.s32.totalorder %s102, %s103
      %p115 = scmp.eq.s32.totalorder %s30, 1
      %p116 = por %p114, %p115
      %p118 = scmp.ne.s32.totalorder %s103, %s117
      %p119 = scmp.eq.s32.totalorder %s30, 0
      %p120 = por %p118, %p119
      %s121 = ssub.s32 %s24, %s31
      %p122 = scmp.eq.s32.totalorder %s121, 0
      %s124 = sadd.s32 %s123, 1
      %s125 = scalar_select %p122, %s123, %s124
      %p128 = pneg %p122
      %p129 = scmp.eq.s32.totalorder %s24, 1
      %p130 = por %p128, %p129
      %p131 = scmp.ne.s32.totalorder %s123, %s126
      %p132 = scmp.eq.s32.totalorder %s24, 0
      %p133 = por %p131, %p132
      %p134 = scmp.ne.s32.totalorder %s123, %s126
      %p135 = scmp.eq.s32.totalorder %s29, 1
      %p136 = por %p134, %p135
      %p137 = scmp.ne.s32.totalorder %s126, %s127
      %p138 = scmp.eq.s32.totalorder %s29, 0
      %p139 = por %p137, %p138
      %p140 = scmp.ne.s32.totalorder %s126, %s127
      %p141 = scmp.eq.s32.totalorder %s30, 1
      %p142 = por %p140, %p141
      %p144 = scmp.ne.s32.totalorder %s127, %s143
      %p145 = scmp.eq.s32.totalorder %s30, 0
      %p146 = por %p144, %p145
      %s147 = ssub.s32 %s24, %s31
      %p148 = scmp.eq.s32.totalorder %s147, 0
      %s150 = sadd.s32 %s149, 1
      %s151 = scalar_select %p148, %s149, %s150
      %p154 = pneg %p148
      %p155 = scmp.eq.s32.totalorder %s24, 1
      %p156 = por %p154, %p155
      %p157 = scmp.ne.s32.totalorder %s149, %s152
      %p158 = scmp.eq.s32.totalorder %s24, 0
      %p159 = por %p157, %p158
      %p160 = scmp.ne.s32.totalorder %s149, %s152
      %p161 = scmp.eq.s32.totalorder %s29, 1
      %p162 = por %p160, %p161
      %p163 = scmp.ne.s32.totalorder %s152, %s153
      %p164 = scmp.eq.s32.totalorder %s29, 0
      %p165 = por %p163, %p164
      %p166 = scmp.ne.s32.totalorder %s152, %s153
      %p167 = scmp.eq.s32.totalorder %s30, 1
      %p168 = por %p166, %p167
      %p170 = scmp.ne.s32.totalorder %s153, %s169
      %p171 = scmp.eq.s32.totalorder %s30, 0
      %p172 = por %p170, %p171
      %s173 = ssub.s32 %s24, %s31
      %p174 = scmp.eq.s32.totalorder %s173, 0
      %s176 = sadd.s32 %s175, 1
      %s177 = scalar_select %p174, %s175, %s176
      %p180 = pneg %p174
      %p181 = scmp.eq.s32.totalorder %s24, 1
      %p182 = por %p180, %p181
      %p183 = scmp.ne.s32.totalorder %s175, %s178
      %p184 = scmp.eq.s32.totalorder %s24, 0
      %p185 = por %p183, %p184
      %p186 = scmp.ne.s32.totalorder %s175, %s178
      %p187 = scmp.eq.s32.totalorder %s29, 1
      %p188 = por %p186, %p187
      %p189 = scmp.ne.s32.totalorder %s178, %s179
      %p190 = scmp.eq.s32.totalorder %s29, 0
      %p191 = por %p189, %p190
      %p192 = scmp.ne.s32.totalorder %s178, %s179
      %p193 = scmp.eq.s32.totalorder %s30, 1
      %p194 = por %p192, %p193
      %p196 = scmp.ne.s32.totalorder %s179, %s195
      %p197 = scmp.eq.s32.totalorder %s30, 0
      %p198 = por %p196, %p197
      %p199 = scmp.le.s32.totalorder 1, %s24
      %p200 = scmp.lt.s32.totalorder %s24, 3
      %p201 = pnand %p199, %p200
      %p202 = pneg %p201
      // Predicated region
      $region9: #{vq_forward.1} parent=5 // pred_check
        _
      $region10: #{vq_forward.1} parent=5 // pred_check_branch
        %204 = sbr.rel (%p201) target = $region12
      $region11: #{vq_forward.1} parent=5 // pred_region
        %s205 = ssub.s32 %s24, 1
        // Predicated region
        $region13: #{vq_forward.1} parent=11 // pred_check
          %p206 = pneg %p71
        $region14: #{vq_forward.1} parent=11 // pred_check_branch
          %208 = sbr.rel (%p206) target = $region16
        $region15: #{vq_forward.1} parent=11 // pred_region
          %s210 = ssub.s32 16384, 16384
          %211 = vsyncadd [#allocation6], %s210
          %s212 = sshll.u32 [#allocation5], 4
          %s213 = int_to_ptr.vmem [resolvable:$true] %s212
          %218 = dma.hbm_to_vmem [thread:$0]  %s1, 16384, %s213, [#allocation6], 512, 512, 32
        $region16: #{vq_forward.1} parent=11 // pred_fallthru
          _
        // Predicated region
        $region17: #{vq_forward.1} parent=11 // pred_check
          %p219 = pneg %p92
        $region18: #{vq_forward.1} parent=11 // pred_check_branch
          %221 = sbr.rel (%p219) target = $region20
        $region19: #{vq_forward.1} parent=11 // pred_region
          %s223 = ssub.s32 16384, 16384
          %224 = vsyncadd [#allocation6], %s223
          %s225 = sshll.u32 [#allocation7], 4
          %s226 = int_to_ptr.vmem [resolvable:$true] %s225
          %231 = dma.hbm_to_vmem [thread:$0]  %s2, 16384, %s226, [#allocation6], 128, 128, 8
        $region20: #{vq_forward.1} parent=11 // pred_fallthru
          _
        // Predicated region
        $region21: #{vq_forward.1} parent=11 // pred_check
          %p232 = pneg %p113
        $region22: #{vq_forward.1} parent=11 // pred_check_branch
          %234 = sbr.rel (%p232) target = $region24
        $region23: #{vq_forward.1} parent=11 // pred_region
          %s236 = ssub.s32 128, 128
          %237 = vsyncadd [#allocation9], %s236
          %s239 = sshll.u32 [#allocation8], 4
          %s240 = int_to_ptr.vmem [resolvable:$true] %s239
          %242 = dma.hbm_to_vmem [thread:$0]  %s3, 128, %s240, [#allocation9]
        $region24: #{vq_forward.1} parent=11 // pred_fallthru
          _
      $region12: #{vq_forward.1} parent=5 // pred_fallthru
        _
      %p243 = scmp.lt.s32.totalorder %s24, 2
      // Predicated region
      $region25: #{vq_forward.1} parent=5 // pred_check
        %p244 = pneg %p243
      $region26: #{vq_forward.1} parent=5 // pred_check_branch
        %246 = sbr.rel (%p244) target = $region28
      $region27: #{vq_forward.1} parent=5 // pred_region
        // Predicated region
        $region29: #{vq_forward.1} parent=27 // pred_check
          %p247 = pneg %p44
        $region30: #{vq_forward.1} parent=27 // pred_check_branch
          %249 = sbr.rel (%p247) target = $region32
        $region31: #{vq_forward.1} parent=27 // pred_region
          %s250 = sand.u32 %s34, 1
          %s251 = scalar_lea.sflag [#allocation3], %s250
          %s252 = sand.u32 %s34, 1
          %s253 = smul.addr %s252, 256
          %s254 = scalar_lea.vmem [#allocation2], %s253
          %s255 = smul.u32 16, %s24
          %s257 = ssub.s32 4096, 4096
          %258 = vsyncadd %s251, %s257
          %s259 = smul.addr %s255, 2
          %s260 = smul.addr %s259, 128
          %s261 = scalar_lea.hbm %s0, %s260
          %s262 = sshll.u32 %s254, 4
          %s263 = int_to_ptr.vmem [resolvable:$true] %s262
          %268 = dma.hbm_to_vmem [thread:$0]  %s261, 4096, %s263, %s251, 256, 256, 16
        $region32: #{vq_forward.1} parent=27 // pred_fallthru
          _
      $region28: #{vq_forward.1} parent=5 // pred_fallthru
        _
      %p269 = scmp.le.s32.totalorder 1, %s24
      %p270 = scmp.lt.s32.totalorder %s24, 3
      %p271 = pnand %p269, %p270
      %p272 = pneg %p271
      // Predicated region
      $region33: #{vq_forward.1} parent=5 // pred_check
        _
      $region34: #{vq_forward.1} parent=5 // pred_check_branch
        %274 = sbr.rel (%p271) target = $region36
      $region35: #{vq_forward.1} parent=5 // pred_region
        %s275 = ssub.s32 %s24, 1
        %s276 = sand.u32 %s37, 1
        %s277 = scalar_lea.sflag [#allocation3], %s276
        %s278 = sand.u32 %s37, 1
        %s279 = smul.addr %s278, 256
        %s280 = scalar_lea.vmem [#allocation2], %s279
        // Predicated region
        $region37: #{vq_forward.1} parent=35 // pred_check
          %p281 = pneg %p50
        $region38: #{vq_forward.1} parent=35 // pred_check_branch
          %283 = sbr.rel (%p281) target = $region40
        $region39: #{vq_forward.1} parent=35 // pred_region
          %284 = dma.done %s277, 4096
        $region40: #{vq_forward.1} parent=35 // pred_fallthru
          _
        // Predicated region
        $region41: #{vq_forward.1} parent=35 // pred_check
          %p285 = pneg %p71
        $region42: #{vq_forward.1} parent=35 // pred_check_branch
          %287 = sbr.rel (%p285) target = $region44
        $region43: #{vq_forward.1} parent=35 // pred_region
          %288 = dma.done [#allocation6], 16384
        $region44: #{vq_forward.1} parent=35 // pred_fallthru
          _
        // Predicated region
        $region45: #{vq_forward.1} parent=35 // pred_check
          %p289 = pneg %p92
        $region46: #{vq_forward.1} parent=35 // pred_check_branch
          %291 = sbr.rel (%p289) target = $region48
        $region47: #{vq_forward.1} parent=35 // pred_region
          %292 = dma.done [#allocation6], 16384
        $region48: #{vq_forward.1} parent=35 // pred_fallthru
          _
        // Predicated region
        $region49: #{vq_forward.1} parent=35 // pred_check
          %p293 = pneg %p113
        $region50: #{vq_forward.1} parent=35 // pred_check_branch
          %295 = sbr.rel (%p293) target = $region52
        $region51: #{vq_forward.1} parent=35 // pred_region
          %296 = dma.done [#allocation9], 128
        $region52: #{vq_forward.1} parent=35 // pred_fallthru
          _
        %s297 = sand.u32 %s37, 1
        %s298 = scalar_lea.sflag [#allocation3], %s297
        %s299 = sand.u32 %s37, 1
        %s300 = smul.addr %s299, 256
        %s301 = scalar_lea.vmem [#allocation2], %s300
        %p302 = pneg %p50
        %p303 = pneg %p47
        %p304 = pneg %p71
        %p305 = pneg %p68
        %p306 = pneg %p92
        %p307 = pneg %p89
        %p308 = pneg %p113
        %p309 = pneg %p110
        %p310 = pneg %p139
        %p311 = pneg %p136
        %s312 = sand.u32 %s126, 1
        %s313 = scalar_lea.sflag [#allocation4], %s312
        %s314 = sand.u32 %s126, 1
        %s315 = smul.addr %s314, 256
        %s316 = scalar_lea.vmem [#allocation10], %s315
        %p317 = pneg %p165
        %p318 = pneg %p162
        %s319 = sand.u32 %s29, 1
        %s320 = scalar_lea.sflag [#allocation12], %s319
        %s321 = sand.u32 %s152, 1
        %s322 = smul.addr %s321, 128
        %s323 = scalar_lea.vmem [#allocation11], %s322
        %p324 = pneg %p191
        %p325 = pneg %p188
        %s326 = sand.u32 %s29, 1
        %s327 = scalar_lea.sflag [#allocation12], %s326
        %s328 = sand.u32 %s178, 1
        %s329 = smul.addr %s328, 128
        %s330 = scalar_lea.vmem [#allocation13], %s329
        %s331 = smul.u32 16, %s29
        %s332 = smul.u32 16, %s29
        %s333 = smul.u32 16, %s29
        %s334 = smul.u32 16, %s29
        %v335 = vld [vmem:[%s280] sm:$0xff]
        %v336 = vld [vmem:[%s280 + $0x8] sm:$0xff]
        %v337 = vld [vmem:[%s280 + $0x10] sm:$0xff]
        %v338 = vld [vmem:[%s280 + $0x18] sm:$0xff]
        %v339 = vld [vmem:[%s280 + $0x20] sm:$0xff]
        %v340 = vld [vmem:[%s280 + $0x28] sm:$0xff]
        %v341 = vld [vmem:[%s280 + $0x30] sm:$0xff]
        %v342 = vld [vmem:[%s280 + $0x38] sm:$0xff]
        %v343 = vld [vmem:[%s280 + $0x40] sm:$0xff]
        %v344 = vld [vmem:[%s280 + $0x48] sm:$0xff]
        %v345 = vld [vmem:[%s280 + $0x50] sm:$0xff]
        %v346 = vld [vmem:[%s280 + $0x58] sm:$0xff]
        %v347 = vld [vmem:[%s280 + $0x60] sm:$0xff]
        %v348 = vld [vmem:[%s280 + $0x68] sm:$0xff]
        %v349 = vld [vmem:[%s280 + $0x70] sm:$0xff]
        %v350 = vld [vmem:[%s280 + $0x78] sm:$0xff]
        %v351 = vld [vmem:[%s280 + $0x80] sm:$0xff]
        %v352 = vld [vmem:[%s280 + $0x88] sm:$0xff]
        %v353 = vld [vmem:[%s280 + $0x90] sm:$0xff]
        %v354 = vld [vmem:[%s280 + $0x98] sm:$0xff]
        %v355 = vld [vmem:[%s280 + $0xa0] sm:$0xff]
        %v356 = vld [vmem:[%s280 + $0xa8] sm:$0xff]
        %v357 = vld [vmem:[%s280 + $0xb0] sm:$0xff]
        %v358 = vld [vmem:[%s280 + $0xb8] sm:$0xff]
        %v359 = vld [vmem:[%s280 + $0xc0] sm:$0xff]
        %v360 = vld [vmem:[%s280 + $0xc8] sm:$0xff]
        %v361 = vld [vmem:[%s280 + $0xd0] sm:$0xff]
        %v362 = vld [vmem:[%s280 + $0xd8] sm:$0xff]
        %v363 = vld [vmem:[%s280 + $0xe0] sm:$0xff]
        %v364 = vld [vmem:[%s280 + $0xe8] sm:$0xff]
        %v365 = vld [vmem:[%s280 + $0xf0] sm:$0xff]
        %v366 = vld [vmem:[%s280 + $0xf8] sm:$0xff]
        %v367 = vpack.c.bf16 %v337, %v335
        %v368 = vpack.c.bf16 %v338, %v336
        %v369 = vpack.c.bf16 %v341, %v339
        %v370 = vpack.c.bf16 %v342, %v340
        %v371 = vpack.c.bf16 %v345, %v343
        %v372 = vpack.c.bf16 %v346, %v344
        %v373 = vpack.c.bf16 %v349, %v347
        %v374 = vpack.c.bf16 %v350, %v348
        %v375 = vpack.c.bf16 %v353, %v351
        %v376 = vpack.c.bf16 %v354, %v352
        %v377 = vpack.c.bf16 %v357, %v355
        %v378 = vpack.c.bf16 %v358, %v356
        %v379 = vpack.c.bf16 %v361, %v359
        %v380 = vpack.c.bf16 %v362, %v360
        %v381 = vpack.c.bf16 %v365, %v363
        %v382 = vpack.c.bf16 %v366, %v364
        %v383 = vld [vmem:[#allocation5] sm:$0xff]
        %v384 = vld [vmem:[#allocation5 + $0x8] sm:$0xff]
        %v385 = vld [vmem:[#allocation5 + $0x10] sm:$0xff]
        %v386 = vld [vmem:[#allocation5 + $0x18] sm:$0xff]
        %v387 = vld [vmem:[#allocation5 + $0x20] sm:$0xff]
        %v388 = vld [vmem:[#allocation5 + $0x28] sm:$0xff]
        %v389 = vld [vmem:[#allocation5 + $0x30] sm:$0xff]
        %v390 = vld [vmem:[#allocation5 + $0x38] sm:$0xff]
        %v391 = vld [vmem:[#allocation5 + $0x40] sm:$0xff]
        %v392 = vld [vmem:[#allocation5 + $0x48] sm:$0xff]
        %v393 = vld [vmem:[#allocation5 + $0x50] sm:$0xff]
        %v394 = vld [vmem:[#allocation5 + $0x58] sm:$0xff]
        %v395 = vld [vmem:[#allocation5 + $0x60] sm:$0xff]
        %v396 = vld [vmem:[#allocation5 + $0x68] sm:$0xff]
        %v397 = vld [vmem:[#allocation5 + $0x70] sm:$0xff]
        %v398 = vld [vmem:[#allocation5 + $0x78] sm:$0xff]
        %v399 = vld [vmem:[#allocation5 + $0x80] sm:$0xff]
        %v400 = vld [vmem:[#allocation5 + $0x88] sm:$0xff]
        %v401 = vld [vmem:[#allocation5 + $0x90] sm:$0xff]
        %v402 = vld [vmem:[#allocation5 + $0x98] sm:$0xff]
        %v403 = vld [vmem:[#allocation5 + $0xa0] sm:$0xff]
        %v404 = vld [vmem:[#allocation5 + $0xa8] sm:$0xff]
        %v405 = vld [vmem:[#allocation5 + $0xb0] sm:$0xff]
        %v406 = vld [vmem:[#allocation5 + $0xb8] sm:$0xff]
        %v407 = vld [vmem:[#allocation5 + $0xc0] sm:$0xff]
        %v408 = vld [vmem:[#allocation5 + $0xc8] sm:$0xff]
        %v409 = vld [vmem:[#allocation5 + $0xd0] sm:$0xff]
        %v410 = vld [vmem:[#allocation5 + $0xd8] sm:$0xff]
        %v411 = vld [vmem:[#allocation5 + $0xe0] sm:$0xff]
        %v412 = vld [vmem:[#allocation5 + $0xe8] sm:$0xff]
        %v413 = vld [vmem:[#allocation5 + $0xf0] sm:$0xff]
        %v414 = vld [vmem:[#allocation5 + $0xf8] sm:$0xff]
        %v415 = vld [vmem:[#allocation5 + $0x100] sm:$0xff]
        %v416 = vld [vmem:[#allocation5 + $0x108] sm:$0xff]
        %v417 = vld [vmem:[#allocation5 + $0x110] sm:$0xff]
        %v418 = vld [vmem:[#allocation5 + $0x118] sm:$0xff]
        %v419 = vld [vmem:[#allocation5 + $0x120] sm:$0xff]
        %v420 = vld [vmem:[#allocation5 + $0x128] sm:$0xff]
        %v421 = vld [vmem:[#allocation5 + $0x130] sm:$0xff]
        %v422 = vld [vmem:[#allocation5 + $0x138] sm:$0xff]
        %v423 = vld [vmem:[#allocation5 + $0x140] sm:$0xff]
        %v424 = vld [vmem:[#allocation5 + $0x148] sm:$0xff]
        %v425 = vld [vmem:[#allocation5 + $0x150] sm:$0xff]
        %v426 = vld [vmem:[#allocation5 + $0x158] sm:$0xff]
        %v427 = vld [vmem:[#allocation5 + $0x160] sm:$0xff]
        %v428 = vld [vmem:[#allocation5 + $0x168] sm:$0xff]
        %v429 = vld [vmem:[#allocation5 + $0x170] sm:$0xff]
        %v430 = vld [vmem:[#allocation5 + $0x178] sm:$0xff]
        %v431 = vld [vmem:[#allocation5 + $0x180] sm:$0xff]
        %v432 = vld [vmem:[#allocation5 + $0x188] sm:$0xff]
        %v433 = vld [vmem:[#allocation5 + $0x190] sm:$0xff]
        %v434 = vld [vmem:[#allocation5 + $0x198] sm:$0xff]
        %v435 = vld [vmem:[#allocation5 + $0x1a0] sm:$0xff]
        %v436 = vld [vmem:[#allocation5 + $0x1a8] sm:$0xff]
        %v437 = vld [vmem:[#allocation5 + $0x1b0] sm:$0xff]
        %v438 = vld [vmem:[#allocation5 + $0x1b8] sm:$0xff]
        %v439 = vld [vmem:[#allocation5 + $0x1c0] sm:$0xff]
        %v440 = vld [vmem:[#allocation5 + $0x1c8] sm:$0xff]
        %v441 = vld [vmem:[#allocation5 + $0x1d0] sm:$0xff]
        %v442 = vld [vmem:[#allocation5 + $0x1d8] sm:$0xff]
        %v443 = vld [vmem:[#allocation5 + $0x1e0] sm:$0xff]
        %v444 = vld [vmem:[#allocation5 + $0x1e8] sm:$0xff]
        %v445 = vld [vmem:[#allocation5 + $0x1f0] sm:$0xff]
        %v446 = vld [vmem:[#allocation5 + $0x1f8] sm:$0xff]
        %v447 = vld [vmem:[#allocation5 + $0x200] sm:$0xff]
        %v448 = vld [vmem:[#allocation5 + $0x208] sm:$0xff]
        %v449 = vld [vmem:[#allocation5 + $0x210] sm:$0xff]
        %v450 = vld [vmem:[#allocation5 + $0x218] sm:$0xff]
        %v451 = vld [vmem:[#allocation5 + $0x220] sm:$0xff]
        %v452 = vld [vmem:[#allocation5 + $0x228] sm:$0xff]
        %v453 = vld [vmem:[#allocation5 + $0x230] sm:$0xff]
        %v454 = vld [vmem:[#allocation5 + $0x238] sm:$0xff]
        %v455 = vld [vmem:[#allocation5 + $0x240] sm:$0xff]
        %v456 = vld [vmem:[#allocation5 + $0x248] sm:$0xff]
        %v457 = vld [vmem:[#allocation5 + $0x250] sm:$0xff]
        %v458 = vld [vmem:[#allocation5 + $0x258] sm:$0xff]
        %v459 = vld [vmem:[#allocation5 + $0x260] sm:$0xff]
        %v460 = vld [vmem:[#allocation5 + $0x268] sm:$0xff]
        %v461 = vld [vmem:[#allocation5 + $0x270] sm:$0xff]
        %v462 = vld [vmem:[#allocation5 + $0x278] sm:$0xff]
        %v463 = vld [vmem:[#allocation5 + $0x280] sm:$0xff]
        %v464 = vld [vmem:[#allocation5 + $0x288] sm:$0xff]
        %v465 = vld [vmem:[#allocation5 + $0x290] sm:$0xff]
        %v466 = vld [vmem:[#allocation5 + $0x298] sm:$0xff]
        %v467 = vld [vmem:[#allocation5 + $0x2a0] sm:$0xff]
        %v468 = vld [vmem:[#allocation5 + $0x2a8] sm:$0xff]
        %v469 = vld [vmem:[#allocation5 + $0x2b0] sm:$0xff]
        %v470 = vld [vmem:[#allocation5 + $0x2b8] sm:$0xff]
        %v471 = vld [vmem:[#allocation5 + $0x2c0] sm:$0xff]
        %v472 = vld [vmem:[#allocation5 + $0x2c8] sm:$0xff]
        %v473 = vld [vmem:[#allocation5 + $0x2d0] sm:$0xff]
        %v474 = vld [vmem:[#allocation5 + $0x2d8] sm:$0xff]
        %v475 = vld [vmem:[#allocation5 + $0x2e0] sm:$0xff]
        %v476 = vld [vmem:[#allocation5 + $0x2e8] sm:$0xff]
        %v477 = vld [vmem:[#allocation5 + $0x2f0] sm:$0xff]
        %v478 = vld [vmem:[#allocation5 + $0x2f8] sm:$0xff]
        %v479 = vld [vmem:[#allocation5 + $0x300] sm:$0xff]
        %v480 = vld [vmem:[#allocation5 + $0x308] sm:$0xff]
        %v481 = vld [vmem:[#allocation5 + $0x310] sm:$0xff]
        %v482 = vld [vmem:[#allocation5 + $0x318] sm:$0xff]
        %v483 = vld [vmem:[#allocation5 + $0x320] sm:$0xff]
        %v484 = vld [vmem:[#allocation5 + $0x328] sm:$0xff]
        %v485 = vld [vmem:[#allocation5 + $0x330] sm:$0xff]
        %v486 = vld [vmem:[#allocation5 + $0x338] sm:$0xff]
        %v487 = vld [vmem:[#allocation5 + $0x340] sm:$0xff]
        %v488 = vld [vmem:[#allocation5 + $0x348] sm:$0xff]
        %v489 = vld [vmem:[#allocation5 + $0x350] sm:$0xff]
        %v490 = vld [vmem:[#allocation5 + $0x358] sm:$0xff]
        %v491 = vld [vmem:[#allocation5 + $0x360] sm:$0xff]
        %v492 = vld [vmem:[#allocation5 + $0x368] sm:$0xff]
        %v493 = vld [vmem:[#allocation5 + $0x370] sm:$0xff]
        %v494 = vld [vmem:[#allocation5 + $0x378] sm:$0xff]
        %v495 = vld [vmem:[#allocation5 + $0x380] sm:$0xff]
        %v496 = vld [vmem:[#allocation5 + $0x388] sm:$0xff]
        %v497 = vld [vmem:[#allocation5 + $0x390] sm:$0xff]
        %v498 = vld [vmem:[#allocation5 + $0x398] sm:$0xff]
        %v499 = vld [vmem:[#allocation5 + $0x3a0] sm:$0xff]
        %v500 = vld [vmem:[#allocation5 + $0x3a8] sm:$0xff]
        %v501 = vld [vmem:[#allocation5 + $0x3b0] sm:$0xff]
        %v502 = vld [vmem:[#allocation5 + $0x3b8] sm:$0xff]
        %v503 = vld [vmem:[#allocation5 + $0x3c0] sm:$0xff]
        %v504 = vld [vmem:[#allocation5 + $0x3c8] sm:$0xff]
        %v505 = vld [vmem:[#allocation5 + $0x3d0] sm:$0xff]
        %v506 = vld [vmem:[#allocation5 + $0x3d8] sm:$0xff]
        %v507 = vld [vmem:[#allocation5 + $0x3e0] sm:$0xff]
        %v508 = vld [vmem:[#allocation5 + $0x3e8] sm:$0xff]
        %v509 = vld [vmem:[#allocation5 + $0x3f0] sm:$0xff]
        %v510 = vld [vmem:[#allocation5 + $0x3f8] sm:$0xff]
        %v639 = vunpack.c.l.b16 %v383
        %v640 = vunpack.c.h.b16 %v383
        %v641 = vunpack.c.l.b16 %v384
        %v642 = vunpack.c.h.b16 %v384
        %v643 = vunpack.c.l.b16 %v385
        %v644 = vunpack.c.h.b16 %v385
        %v645 = vunpack.c.l.b16 %v386
        %v646 = vunpack.c.h.b16 %v386
        %v647 = vunpack.c.l.b16 %v387
        %v648 = vunpack.c.h.b16 %v387
        %v649 = vunpack.c.l.b16 %v388
        %v650 = vunpack.c.h.b16 %v388
        %v651 = vunpack.c.l.b16 %v389
        %v652 = vunpack.c.h.b16 %v389
        %v653 = vunpack.c.l.b16 %v390
        %v654 = vunpack.c.h.b16 %v390
        %v655 = vunpack.c.l.b16 %v391
        %v656 = vunpack.c.h.b16 %v391
        %v657 = vunpack.c.l.b16 %v392
        %v658 = vunpack.c.h.b16 %v392
        %v659 = vunpack.c.l.b16 %v393
        %v660 = vunpack.c.h.b16 %v393
        %v661 = vunpack.c.l.b16 %v394
        %v662 = vunpack.c.h.b16 %v394
        %v663 = vunpack.c.l.b16 %v395
        %v664 = vunpack.c.h.b16 %v395
        %v665 = vunpack.c.l.b16 %v396
        %v666 = vunpack.c.h.b16 %v396
        %v667 = vunpack.c.l.b16 %v397
        %v668 = vunpack.c.h.b16 %v397
        %v669 = vunpack.c.l.b16 %v398
        %v670 = vunpack.c.h.b16 %v398
        %v671 = vunpack.c.l.b16 %v399
        %v672 = vunpack.c.h.b16 %v399
        %v673 = vunpack.c.l.b16 %v400
        %v674 = vunpack.c.h.b16 %v400
        %v675 = vunpack.c.l.b16 %v401
        %v676 = vunpack.c.h.b16 %v401
        %v677 = vunpack.c.l.b16 %v402
        %v678 = vunpack.c.h.b16 %v402
        %v679 = vunpack.c.l.b16 %v403
        %v680 = vunpack.c.h.b16 %v403
        %v681 = vunpack.c.l.b16 %v404
        %v682 = vunpack.c.h.b16 %v404
        %v683 = vunpack.c.l.b16 %v405
        %v684 = vunpack.c.h.b16 %v405
        %v685 = vunpack.c.l.b16 %v406
        %v686 = vunpack.c.h.b16 %v406
        %v687 = vunpack.c.l.b16 %v407
        %v688 = vunpack.c.h.b16 %v407
        %v689 = vunpack.c.l.b16 %v408
        %v690 = vunpack.c.h.b16 %v408
        %v691 = vunpack.c.l.b16 %v409
        %v692 = vunpack.c.h.b16 %v409
        %v693 = vunpack.c.l.b16 %v410
        %v694 = vunpack.c.h.b16 %v410
        %v695 = vunpack.c.l.b16 %v411
        %v696 = vunpack.c.h.b16 %v411
        %v697 = vunpack.c.l.b16 %v412
        %v698 = vunpack.c.h.b16 %v412
        %v699 = vunpack.c.l.b16 %v413
        %v700 = vunpack.c.h.b16 %v413
        %v701 = vunpack.c.l.b16 %v414
        %v702 = vunpack.c.h.b16 %v414
        %v703 = vunpack.c.l.b16 %v415
        %v704 = vunpack.c.h.b16 %v415
        %v705 = vunpack.c.l.b16 %v416
        %v706 = vunpack.c.h.b16 %v416
        %v707 = vunpack.c.l.b16 %v417
        %v708 = vunpack.c.h.b16 %v417
        %v709 = vunpack.c.l.b16 %v418
        %v710 = vunpack.c.h.b16 %v418
        %v711 = vunpack.c.l.b16 %v419
        %v712 = vunpack.c.h.b16 %v419
        %v713 = vunpack.c.l.b16 %v420
        %v714 = vunpack.c.h.b16 %v420
        %v715 = vunpack.c.l.b16 %v421
        %v716 = vunpack.c.h.b16 %v421
        %v717 = vunpack.c.l.b16 %v422
        %v718 = vunpack.c.h.b16 %v422
        %v719 = vunpack.c.l.b16 %v423
        %v720 = vunpack.c.h.b16 %v423
        %v721 = vunpack.c.l.b16 %v424
        %v722 = vunpack.c.h.b16 %v424
        %v723 = vunpack.c.l.b16 %v425
        %v724 = vunpack.c.h.b16 %v425
        %v725 = vunpack.c.l.b16 %v426
        %v726 = vunpack.c.h.b16 %v426
        %v727 = vunpack.c.l.b16 %v427
        %v728 = vunpack.c.h.b16 %v427
        %v729 = vunpack.c.l.b16 %v428
        %v730 = vunpack.c.h.b16 %v428
        %v731 = vunpack.c.l.b16 %v429
        %v732 = vunpack.c.h.b16 %v429
        %v733 = vunpack.c.l.b16 %v430
        %v734 = vunpack.c.h.b16 %v430
        %v735 = vunpack.c.l.b16 %v431
        %v736 = vunpack.c.h.b16 %v431
        %v737 = vunpack.c.l.b16 %v432
        %v738 = vunpack.c.h.b16 %v432
        %v739 = vunpack.c.l.b16 %v433
        %v740 = vunpack.c.h.b16 %v433
        %v741 = vunpack.c.l.b16 %v434
        %v742 = vunpack.c.h.b16 %v434
        %v743 = vunpack.c.l.b16 %v435
        %v744 = vunpack.c.h.b16 %v435
        %v745 = vunpack.c.l.b16 %v436
        %v746 = vunpack.c.h.b16 %v436
        %v747 = vunpack.c.l.b16 %v437
        %v748 = vunpack.c.h.b16 %v437
        %v749 = vunpack.c.l.b16 %v438
        %v750 = vunpack.c.h.b16 %v438
        %v751 = vunpack.c.l.b16 %v439
        %v752 = vunpack.c.h.b16 %v439
        %v753 = vunpack.c.l.b16 %v440
        %v754 = vunpack.c.h.b16 %v440
        %v755 = vunpack.c.l.b16 %v441
        %v756 = vunpack.c.h.b16 %v441
        %v757 = vunpack.c.l.b16 %v442
        %v758 = vunpack.c.h.b16 %v442
        %v759 = vunpack.c.l.b16 %v443
        %v760 = vunpack.c.h.b16 %v443
        %v761 = vunpack.c.l.b16 %v444
        %v762 = vunpack.c.h.b16 %v444
        %v763 = vunpack.c.l.b16 %v445
        %v764 = vunpack.c.h.b16 %v445
        %v765 = vunpack.c.l.b16 %v446
        %v766 = vunpack.c.h.b16 %v446
        %v767 = vunpack.c.l.b16 %v447
        %v768 = vunpack.c.h.b16 %v447
        %v769 = vunpack.c.l.b16 %v448
        %v770 = vunpack.c.h.b16 %v448
        %v771 = vunpack.c.l.b16 %v449
        %v772 = vunpack.c.h.b16 %v449
        %v773 = vunpack.c.l.b16 %v450
        %v774 = vunpack.c.h.b16 %v450
        %v775 = vunpack.c.l.b16 %v451
        %v776 = vunpack.c.h.b16 %v451
        %v777 = vunpack.c.l.b16 %v452
        %v778 = vunpack.c.h.b16 %v452
        %v779 = vunpack.c.l.b16 %v453
        %v780 = vunpack.c.h.b16 %v453
        %v781 = vunpack.c.l.b16 %v454
        %v782 = vunpack.c.h.b16 %v454
        %v783 = vunpack.c.l.b16 %v455
        %v784 = vunpack.c.h.b16 %v455
        %v785 = vunpack.c.l.b16 %v456
        %v786 = vunpack.c.h.b16 %v456
        %v787 = vunpack.c.l.b16 %v457
        %v788 = vunpack.c.h.b16 %v457
        %v789 = vunpack.c.l.b16 %v458
        %v790 = vunpack.c.h.b16 %v458
        %v791 = vunpack.c.l.b16 %v459
        %v792 = vunpack.c.h.b16 %v459
        %v793 = vunpack.c.l.b16 %v460
        %v794 = vunpack.c.h.b16 %v460
        %v795 = vunpack.c.l.b16 %v461
        %v796 = vunpack.c.h.b16 %v461
        %v797 = vunpack.c.l.b16 %v462
        %v798 = vunpack.c.h.b16 %v462
        %v799 = vunpack.c.l.b16 %v463
        %v800 = vunpack.c.h.b16 %v463
        %v801 = vunpack.c.l.b16 %v464
        %v802 = vunpack.c.h.b16 %v464
        %v803 = vunpack.c.l.b16 %v465
        %v804 = vunpack.c.h.b16 %v465
        %v805 = vunpack.c.l.b16 %v466
        %v806 = vunpack.c.h.b16 %v466
        %v807 = vunpack.c.l.b16 %v467
        %v808 = vunpack.c.h.b16 %v467
        %v809 = vunpack.c.l.b16 %v468
        %v810 = vunpack.c.h.b16 %v468
        %v811 = vunpack.c.l.b16 %v469
        %v812 = vunpack.c.h.b16 %v469
        %v813 = vunpack.c.l.b16 %v470
        %v814 = vunpack.c.h.b16 %v470
        %v815 = vunpack.c.l.b16 %v471
        %v816 = vunpack.c.h.b16 %v471
        %v817 = vunpack.c.l.b16 %v472
        %v818 = vunpack.c.h.b16 %v472
        %v819 = vunpack.c.l.b16 %v473
        %v820 = vunpack.c.h.b16 %v473
        %v821 = vunpack.c.l.b16 %v474
        %v822 = vunpack.c.h.b16 %v474
        %v823 = vunpack.c.l.b16 %v475
        %v824 = vunpack.c.h.b16 %v475
        %v825 = vunpack.c.l.b16 %v476
        %v826 = vunpack.c.h.b16 %v476
        %v827 = vunpack.c.l.b16 %v477
        %v828 = vunpack.c.h.b16 %v477
        %v829 = vunpack.c.l.b16 %v478
        %v830 = vunpack.c.h.b16 %v478
        %v831 = vunpack.c.l.b16 %v479
        %v832 = vunpack.c.h.b16 %v479
        %v833 = vunpack.c.l.b16 %v480
        %v834 = vunpack.c.h.b16 %v480
        %v835 = vunpack.c.l.b16 %v481
        %v836 = vunpack.c.h.b16 %v481
        %v837 = vunpack.c.l.b16 %v482
        %v838 = vunpack.c.h.b16 %v482
        %v839 = vunpack.c.l.b16 %v483
        %v840 = vunpack.c.h.b16 %v483
        %v841 = vunpack.c.l.b16 %v484
        %v842 = vunpack.c.h.b16 %v484
        %v843 = vunpack.c.l.b16 %v485
        %v844 = vunpack.c.h.b16 %v485
        %v845 = vunpack.c.l.b16 %v486
        %v846 = vunpack.c.h.b16 %v486
        %v847 = vunpack.c.l.b16 %v487
        %v848 = vunpack.c.h.b16 %v487
        %v849 = vunpack.c.l.b16 %v488
        %v850 = vunpack.c.h.b16 %v488
        %v851 = vunpack.c.l.b16 %v489
        %v852 = vunpack.c.h.b16 %v489
        %v853 = vunpack.c.l.b16 %v490
        %v854 = vunpack.c.h.b16 %v490
        %v855 = vunpack.c.l.b16 %v491
        %v856 = vunpack.c.h.b16 %v491
        %v857 = vunpack.c.l.b16 %v492
        %v858 = vunpack.c.h.b16 %v492
        %v859 = vunpack.c.l.b16 %v493
        %v860 = vunpack.c.h.b16 %v493
        %v861 = vunpack.c.l.b16 %v494
        %v862 = vunpack.c.h.b16 %v494
        %v863 = vunpack.c.l.b16 %v495
        %v864 = vunpack.c.h.b16 %v495
        %v865 = vunpack.c.l.b16 %v496
        %v866 = vunpack.c.h.b16 %v496
        %v867 = vunpack.c.l.b16 %v497
        %v868 = vunpack.c.h.b16 %v497
        %v869 = vunpack.c.l.b16 %v498
        %v870 = vunpack.c.h.b16 %v498
        %v871 = vunpack.c.l.b16 %v499
        %v872 = vunpack.c.h.b16 %v499
        %v873 = vunpack.c.l.b16 %v500
        %v874 = vunpack.c.h.b16 %v500
        %v875 = vunpack.c.l.b16 %v501
        %v876 = vunpack.c.h.b16 %v501
        %v877 = vunpack.c.l.b16 %v502
        %v878 = vunpack.c.h.b16 %v502
        %v879 = vunpack.c.l.b16 %v503
        %v880 = vunpack.c.h.b16 %v503
        %v881 = vunpack.c.l.b16 %v504
        %v882 = vunpack.c.h.b16 %v504
        %v883 = vunpack.c.l.b16 %v505
        %v884 = vunpack.c.h.b16 %v505
        %v885 = vunpack.c.l.b16 %v506
        %v886 = vunpack.c.h.b16 %v506
        %v887 = vunpack.c.l.b16 %v507
        %v888 = vunpack.c.h.b16 %v507
        %v889 = vunpack.c.l.b16 %v508
        %v890 = vunpack.c.h.b16 %v508
        %v891 = vunpack.c.l.b16 %v509
        %v892 = vunpack.c.h.b16 %v509
        %v893 = vunpack.c.l.b16 %v510
        %v894 = vunpack.c.h.b16 %v510
        %v895 = vpack.c.b16 %v647, %v639
        %v896 = vpack.c.b16 %v648, %v640
        %v897 = vpack.c.b16 %v649, %v641
        %v898 = vpack.c.b16 %v650, %v642
        %v899 = vpack.c.b16 %v651, %v643
        %v900 = vpack.c.b16 %v652, %v644
        %v901 = vpack.c.b16 %v653, %v645
        %v902 = vpack.c.b16 %v654, %v646
        %v903 = vpack.c.b16 %v663, %v655
        %v904 = vpack.c.b16 %v664, %v656
        %v905 = vpack.c.b16 %v665, %v657
        %v906 = vpack.c.b16 %v666, %v658
        %v907 = vpack.c.b16 %v667, %v659
        %v908 = vpack.c.b16 %v668, %v660
        %v909 = vpack.c.b16 %v669, %v661
        %v910 = vpack.c.b16 %v670, %v662
        %v911 = vpack.c.b16 %v679, %v671
        %v912 = vpack.c.b16 %v680, %v672
        %v913 = vpack.c.b16 %v681, %v673
        %v914 = vpack.c.b16 %v682, %v674
        %v915 = vpack.c.b16 %v683, %v675
        %v916 = vpack.c.b16 %v684, %v676
        %v917 = vpack.c.b16 %v685, %v677
        %v918 = vpack.c.b16 %v686, %v678
        %v919 = vpack.c.b16 %v695, %v687
        %v920 = vpack.c.b16 %v696, %v688
        %v921 = vpack.c.b16 %v697, %v689
        %v922 = vpack.c.b16 %v698, %v690
        %v923 = vpack.c.b16 %v699, %v691
        %v924 = vpack.c.b16 %v700, %v692
        %v925 = vpack.c.b16 %v701, %v693
        %v926 = vpack.c.b16 %v702, %v694
        %v927 = vpack.c.b16 %v711, %v703
        %v928 = vpack.c.b16 %v712, %v704
        %v929 = vpack.c.b16 %v713, %v705
        %v930 = vpack.c.b16 %v714, %v706
        %v931 = vpack.c.b16 %v715, %v707
        %v932 = vpack.c.b16 %v716, %v708
        %v933 = vpack.c.b16 %v717, %v709
        %v934 = vpack.c.b16 %v718, %v710
        %v935 = vpack.c.b16 %v727, %v719
        %v936 = vpack.c.b16 %v728, %v720
        %v937 = vpack.c.b16 %v729, %v721
        %v938 = vpack.c.b16 %v730, %v722
        %v939 = vpack.c.b16 %v731, %v723
        %v940 = vpack.c.b16 %v732, %v724
        %v941 = vpack.c.b16 %v733, %v725
        %v942 = vpack.c.b16 %v734, %v726
        %v943 = vpack.c.b16 %v743, %v735
        %v944 = vpack.c.b16 %v744, %v736
        %v945 = vpack.c.b16 %v745, %v737
        %v946 = vpack.c.b16 %v746, %v738
        %v947 = vpack.c.b16 %v747, %v739
        %v948 = vpack.c.b16 %v748, %v740
        %v949 = vpack.c.b16 %v749, %v741
        %v950 = vpack.c.b16 %v750, %v742
        %v951 = vpack.c.b16 %v759, %v751
        %v952 = vpack.c.b16 %v760, %v752
        %v953 = vpack.c.b16 %v761, %v753
        %v954 = vpack.c.b16 %v762, %v754
        %v955 = vpack.c.b16 %v763, %v755
        %v956 = vpack.c.b16 %v764, %v756
        %v957 = vpack.c.b16 %v765, %v757
        %v958 = vpack.c.b16 %v766, %v758
        %v959 = vpack.c.b16 %v775, %v767
        %v960 = vpack.c.b16 %v776, %v768
        %v961 = vpack.c.b16 %v777, %v769
        %v962 = vpack.c.b16 %v778, %v770
        %v963 = vpack.c.b16 %v779, %v771
        %v964 = vpack.c.b16 %v780, %v772
        %v965 = vpack.c.b16 %v781, %v773
        %v966 = vpack.c.b16 %v782, %v774
        %v967 = vpack.c.b16 %v791, %v783
        %v968 = vpack.c.b16 %v792, %v784
        %v969 = vpack.c.b16 %v793, %v785
        %v970 = vpack.c.b16 %v794, %v786
        %v971 = vpack.c.b16 %v795, %v787
        %v972 = vpack.c.b16 %v796, %v788
        %v973 = vpack.c.b16 %v797, %v789
        %v974 = vpack.c.b16 %v798, %v790
        %v975 = vpack.c.b16 %v807, %v799
        %v976 = vpack.c.b16 %v808, %v800
        %v977 = vpack.c.b16 %v809, %v801
        %v978 = vpack.c.b16 %v810, %v802
        %v979 = vpack.c.b16 %v811, %v803
        %v980 = vpack.c.b16 %v812, %v804
        %v981 = vpack.c.b16 %v813, %v805
        %v982 = vpack.c.b16 %v814, %v806
        %v983 = vpack.c.b16 %v823, %v815
        %v984 = vpack.c.b16 %v824, %v816
        %v985 = vpack.c.b16 %v825, %v817
        %v986 = vpack.c.b16 %v826, %v818
        %v987 = vpack.c.b16 %v827, %v819
        %v988 = vpack.c.b16 %v828, %v820
        %v989 = vpack.c.b16 %v829, %v821
        %v990 = vpack.c.b16 %v830, %v822
        %v991 = vpack.c.b16 %v839, %v831
        %v992 = vpack.c.b16 %v840, %v832
        %v993 = vpack.c.b16 %v841, %v833
        %v994 = vpack.c.b16 %v842, %v834
        %v995 = vpack.c.b16 %v843, %v835
        %v996 = vpack.c.b16 %v844, %v836
        %v997 = vpack.c.b16 %v845, %v837
        %v998 = vpack.c.b16 %v846, %v838
        %v999 = vpack.c.b16 %v855, %v847
        %v1000 = vpack.c.b16 %v856, %v848
        %v1001 = vpack.c.b16 %v857, %v849
        %v1002 = vpack.c.b16 %v858, %v850
        %v1003 = vpack.c.b16 %v859, %v851
        %v1004 = vpack.c.b16 %v860, %v852
        %v1005 = vpack.c.b16 %v861, %v853
        %v1006 = vpack.c.b16 %v862, %v854
        %v1007 = vpack.c.b16 %v871, %v863
        %v1008 = vpack.c.b16 %v872, %v864
        %v1009 = vpack.c.b16 %v873, %v865
        %v1010 = vpack.c.b16 %v874, %v866
        %v1011 = vpack.c.b16 %v875, %v867
        %v1012 = vpack.c.b16 %v876, %v868
        %v1013 = vpack.c.b16 %v877, %v869
        %v1014 = vpack.c.b16 %v878, %v870
        %v1015 = vpack.c.b16 %v887, %v879
        %v1016 = vpack.c.b16 %v888, %v880
        %v1017 = vpack.c.b16 %v889, %v881
        %v1018 = vpack.c.b16 %v890, %v882
        %v1019 = vpack.c.b16 %v891, %v883
        %v1020 = vpack.c.b16 %v892, %v884
        %v1021 = vpack.c.b16 %v893, %v885
        %v1022 = vpack.c.b16 %v894, %v886
        %1151 = vmatprep.subr.bf16.mxu0 %v896
        %1152 = vmatpush1.bf16.msra.mxu0 %v895
        %1153 = vmatprep.subr.bf16.mxu0 %v904
        %1154 = vmatpush1.bf16.msra.mxu0 %v903
        %1155 = vmatprep.subr.bf16.mxu0 %v912
        %1156 = vmatpush1.bf16.msra.mxu0 %v911
        %1157 = vmatprep.subr.bf16.mxu0 %v920
        %1158 = vmatpush1.bf16.msra.mxu0 %v919
        %1159 = vmatprep.subr.bf16.mxu0 %v928
        %1160 = vmatpush1.bf16.msra.mxu0 %v927
        %1161 = vmatprep.subr.bf16.mxu0 %v936
        %1162 = vmatpush1.bf16.msra.mxu0 %v935
        %1163 = vmatprep.subr.bf16.mxu0 %v944
        %1164 = vmatpush1.bf16.msra.mxu0 %v943
        %1165 = vmatprep.subr.bf16.mxu0 %v952
        %1166 = vmatpush1.bf16.msra.mxu0 %v951
        %1167 = vmatprep.subr.bf16.mxu0 %v960
        %1168 = vmatpush1.bf16.msra.mxu0 %v959
        %1169 = vmatprep.subr.bf16.mxu0 %v968
        %1170 = vmatpush1.bf16.msra.mxu0 %v967
        %1171 = vmatprep.subr.bf16.mxu0 %v976
        %1172 = vmatpush1.bf16.msra.mxu0 %v975
        %1173 = vmatprep.subr.bf16.mxu0 %v984
        %1174 = vmatpush1.bf16.msra.mxu0 %v983
        %1175 = vmatprep.subr.bf16.mxu0 %v992
        %1176 = vmatpush1.bf16.msra.mxu0 %v991
        %1177 = vmatprep.subr.bf16.mxu0 %v1000
        %1178 = vmatpush1.bf16.msra.mxu0 %v999
        %1179 = vmatprep.subr.bf16.mxu0 %v1008
        %1180 = vmatpush1.bf16.msra.mxu0 %v1007
        %1181 = vmatprep.subr.bf16.mxu0 %v1016
        %1182 = vmatpush1.bf16.msra.mxu0 %v1015
        %1183 = vmatprep.mubr.bf16.mxu0 %v368
        %1184 = vmatmul.mubr.bf16.gmra.mrb[0].mxu0 %v367
        %v1185 = vpop.f32.mrb[0].mxu0
        %v1186 = vadd.f32 0.0, %v1185
        %v1187 = vpop.f32.mrb[0].mxu0
        %v1188 = vadd.f32 0.0, %v1187
        %v1189 = vpop.f32.mrb[0].mxu0
        %v1190 = vadd.f32 0.0, %v1189
        %v1191 = vpop.f32.mrb[0].mxu0
        %v1192 = vadd.f32 0.0, %v1191
        %1193 = vmatprep.mubr.bf16.mxu0 %v370
        %1194 = vmatmul.mubr.bf16.gmra.mrb[0].mxu0 %v369
        %v1195 = vpop.f32.mrb[0].mxu0
        %v1196 = vadd.f32 0.0, %v1195
        %v1197 = vpop.f32.mrb[0].mxu0
        %v1198 = vadd.f32 0.0, %v1197
        %v1199 = vpop.f32.mrb[0].mxu0
        %v1200 = vadd.f32 0.0, %v1199
        %v1201 = vpop.f32.mrb[0].mxu0
        %v1202 = vadd.f32 0.0, %v1201
        %1203 = vmatprep.mubr.bf16.mxu0 %v372
        %1204 = vmatmul.mubr.bf16.gmra.mrb[0].mxu0 %v371
        %v1205 = vpop.f32.mrb[0].mxu0
        %v1206 = vadd.f32 0.0, %v1205
        %v1207 = vpop.f32.mrb[0].mxu0
        %v1208 = vadd.f32 0.0, %v1207
        %v1209 = vpop.f32.mrb[0].mxu0
        %v1210 = vadd.f32 0.0, %v1209
        %v1211 = vpop.f32.mrb[0].mxu0
        %v1212 = vadd.f32 0.0, %v1211
        %1213 = vmatprep.mubr.bf16.mxu0 %v374
        %1214 = vmatmul.mubr.bf16.gmra.mrb[0].mxu0 %v373
        %v1215 = vpop.f32.mrb[0].mxu0
        %v1216 = vadd.f32 0.0, %v1215
        %v1217 = vpop.f32.mrb[0].mxu0
        %v1218 = vadd.f32 0.0, %v1217
        %v1219 = vpop.f32.mrb[0].mxu0
        %v1220 = vadd.f32 0.0, %v1219
        %v1221 = vpop.f32.mrb[0].mxu0
        %v1222 = vadd.f32 0.0, %v1221
        %1223 = vmatprep.mubr.bf16.mxu0 %v376
        %1224 = vmatmul.mubr.bf16.gmra.mrb[0].mxu0 %v375
        %v1225 = vpop.f32.mrb[0].mxu0
        %v1226 = vadd.f32 0.0, %v1225
        %v1227 = vpop.f32.mrb[0].mxu0
        %v1228 = vadd.f32 0.0, %v1227
        %v1229 = vpop.f32.mrb[0].mxu0
        %v1230 = vadd.f32 0.0, %v1229
        %v1231 = vpop.f32.mrb[0].mxu0
        %v1232 = vadd.f32 0.0, %v1231
        %1233 = vmatprep.mubr.bf16.mxu0 %v378
        %1234 = vmatmul.mubr.bf16.gmra.mrb[0].mxu0 %v377
        %v1235 = vpop.f32.mrb[0].mxu0
        %v1236 = vadd.f32 0.0, %v1235
        %v1237 = vpop.f32.mrb[0].mxu0
        %v1238 = vadd.f32 0.0, %v1237
        %v1239 = vpop.f32.mrb[0].mxu0
        %v1240 = vadd.f32 0.0, %v1239
        %v1241 = vpop.f32.mrb[0].mxu0
        %v1242 = vadd.f32 0.0, %v1241
        %1243 = vmatprep.mubr.bf16.mxu0 %v380
        %1244 = vmatmul.mubr.bf16.gmra.mrb[0].mxu0 %v379
        %v1245 = vpop.f32.mrb[0].mxu0
        %v1246 = vadd.f32 0.0, %v1245
        %v1247 = vpop.f32.mrb[0].mxu0
        %v1248 = vadd.f32 0.0, %v1247
        %v1249 = vpop.f32.mrb[0].mxu0
        %v1250 = vadd.f32 0.0, %v1249
        %v1251 = vpop.f32.mrb[0].mxu0
        %v1252 = vadd.f32 0.0, %v1251
        %1253 = vmatprep.mubr.bf16.mxu0 %v382
        %1254 = vmatmul.mubr.bf16.gmra.mrb[0].mxu0 %v381
        %v1255 = vpop.f32.mrb[0].mxu0
        %v1256 = vadd.f32 0.0, %v1255
        %v1257 = vpop.f32.mrb[0].mxu0
        %v1258 = vadd.f32 0.0, %v1257
        %v1259 = vpop.f32.mrb[0].mxu0
        %v1260 = vadd.f32 0.0, %v1259
        %v1261 = vpop.f32.mrb[0].mxu0
        %v1262 = vadd.f32 0.0, %v1261
        %1263 = vdwg.mxu0
        %1264 = vmatprep.subr.bf16.mxu0 %v898
        %1265 = vmatpush1.bf16.msra.mxu0 %v897
        %1266 = vmatprep.subr.bf16.mxu0 %v906
        %1267 = vmatpush1.bf16.msra.mxu0 %v905
        %1268 = vmatprep.subr.bf16.mxu0 %v914
        %1269 = vmatpush1.bf16.msra.mxu0 %v913
        %1270 = vmatprep.subr.bf16.mxu0 %v922
        %1271 = vmatpush1.bf16.msra.mxu0 %v921
        %1272 = vmatprep.subr.bf16.mxu0 %v930
        %1273 = vmatpush1.bf16.msra.mxu0 %v929
        %1274 = vmatprep.subr.bf16.mxu0 %v938
        %1275 = vmatpush1.bf16.msra.mxu0 %v937
        %1276 = vmatprep.subr.bf16.mxu0 %v946
        %1277 = vmatpush1.bf16.msra.mxu0 %v945
        %1278 = vmatprep.subr.bf16.mxu0 %v954
        %1279 = vmatpush1.bf16.msra.mxu0 %v953
        %1280 = vmatprep.subr.bf16.mxu0 %v962
        %1281 = vmatpush1.bf16.msra.mxu0 %v961
        %1282 = vmatprep.subr.bf16.mxu0 %v970
        %1283 = vmatpush1.bf16.msra.mxu0 %v969
        %1284 = vmatprep.subr.bf16.mxu0 %v978
        %1285 = vmatpush1.bf16.msra.mxu0 %v977
        %1286 = vmatprep.subr.bf16.mxu0 %v986
        %1287 = vmatpush1.bf16.msra.mxu0 %v985
        %1288 = vmatprep.subr.bf16.mxu0 %v994
        %1289 = vmatpush1.bf16.msra.mxu0 %v993
        %1290 = vmatprep.subr.bf16.mxu0 %v1002
        %1291 = vmatpush1.bf16.msra.mxu0 %v1001
        %1292 = vmatprep.subr.bf16.mxu0 %v1010
        %1293 = vmatpush1.bf16.msra.mxu0 %v1009
        %1294 = vmatprep.subr.bf16.mxu0 %v1018
        %1295 = vmatpush1.bf16.msra.mxu0 %v1017
        %1296 = vmatprep.mubr.bf16.mxu0 %v368
        %1297 = vmatmul.mubr.bf16.gmra.mrb[0].mxu0 %v367
        %v1298 = vpop.f32.mrb[0].mxu0
        %v1299 = vadd.f32 0.0, %v1298
        %v1300 = vpop.f32.mrb[0].mxu0
        %v1301 = vadd.f32 0.0, %v1300
        %v1302 = vpop.f32.mrb[0].mxu0
        %v1303 = vadd.f32 0.0, %v1302
        %v1304 = vpop.f32.mrb[0].mxu0
        %v1305 = vadd.f32 0.0, %v1304
        %1306 = vmatprep.mubr.bf16.mxu0 %v370
        %1307 = vmatmul.mubr.bf16.gmra.mrb[0].mxu0 %v369
        %v1308 = vpop.f32.mrb[0].mxu0
        %v1309 = vadd.f32 0.0, %v1308
        %v1310 = vpop.f32.mrb[0].mxu0
        %v1311 = vadd.f32 0.0, %v1310
        %v1312 = vpop.f32.mrb[0].mxu0
        %v1313 = vadd.f32 0.0, %v1312
        %v1314 = vpop.f32.mrb[0].mxu0
        %v1315 = vadd.f32 0.0, %v1314
        %1316 = vmatprep.mubr.bf16.mxu0 %v372
        %1317 = vmatmul.mubr.bf16.gmra.mrb[0].mxu0 %v371
        %v1318 = vpop.f32.mrb[0].mxu0
        %v1319 = vadd.f32 0.0, %v1318
        %v1320 = vpop.f32.mrb[0].mxu0
        %v1321 = vadd.f32 0.0, %v1320
        %v1322 = vpop.f32.mrb[0].mxu0
        %v1323 = vadd.f32 0.0, %v1322
        %v1324 = vpop.f32.mrb[0].mxu0
        %v1325 = vadd.f32 0.0, %v1324
        %1326 = vmatprep.mubr.bf16.mxu0 %v374
        %1327 = vmatmul.mubr.bf16.gmra.mrb[0].mxu0 %v373
        %v1328 = vpop.f32.mrb[0].mxu0
        %v1329 = vadd.f32 0.0, %v1328
        %v1330 = vpop.f32.mrb[0].mxu0
        %v1331 = vadd.f32 0.0, %v1330
        %v1332 = vpop.f32.mrb[0].mxu0
        %v1333 = vadd.f32 0.0, %v1332
        %v1334 = vpop.f32.mrb[0].mxu0
        %v1335 = vadd.f32 0.0, %v1334
        %1336 = vmatprep.mubr.bf16.mxu0 %v376
        %1337 = vmatmul.mubr.bf16.gmra.mrb[0].mxu0 %v375
        %v1338 = vpop.f32.mrb[0].mxu0
        %v1339 = vadd.f32 0.0, %v1338
        %v1340 = vpop.f32.mrb[0].mxu0
        %v1341 = vadd.f32 0.0, %v1340
        %v1342 = vpop.f32.mrb[0].mxu0
        %v1343 = vadd.f32 0.0, %v1342
        %v1344 = vpop.f32.mrb[0].mxu0
        %v1345 = vadd.f32 0.0, %v1344
        %1346 = vmatprep.mubr.bf16.mxu0 %v378
        %1347 = vmatmul.mubr.bf16.gmra.mrb[0].mxu0 %v377
        %v1348 = vpop.f32.mrb[0].mxu0
        %v1349 = vadd.f32 0.0, %v1348
        %v1350 = vpop.f32.mrb[0].mxu0
        %v1351 = vadd.f32 0.0, %v1350
        %v1352 = vpop.f32.mrb[0].mxu0
        %v1353 = vadd.f32 0.0, %v1352
        %v1354 = vpop.f32.mrb[0].mxu0
        %v1355 = vadd.f32 0.0, %v1354
        %1356 = vmatprep.mubr.bf16.mxu0 %v380
        %1357 = vmatmul.mubr.bf16.gmra.mrb[0].mxu0 %v379
        %v1358 = vpop.f32.mrb[0].mxu0
        %v1359 = vadd.f32 0.0, %v1358
        %v1360 = vpop.f32.mrb[0].mxu0
        %v1361 = vadd.f32 0.0, %v1360
        %v1362 = vpop.f32.mrb[0].mxu0
        %v1363 = vadd.f32 0.0, %v1362
        %v1364 = vpop.f32.mrb[0].mxu0
        %v1365 = vadd.f32 0.0, %v1364
        %1366 = vmatprep.mubr.bf16.mxu0 %v382
        %1367 = vmatmul.mubr.bf16.gmra.mrb[0].mxu0 %v381
        %v1368 = vpop.f32.mrb[0].mxu0
        %v1369 = vadd.f32 0.0, %v1368
        %v1370 = vpop.f32.mrb[0].mxu0
        %v1371 = vadd.f32 0.0, %v1370
        %v1372 = vpop.f32.mrb[0].mxu0
        %v1373 = vadd.f32 0.0, %v1372
        %v1374 = vpop.f32.mrb[0].mxu0
        %v1375 = vadd.f32 0.0, %v1374
        %1376 = vdwg.mxu0
        %1377 = vmatprep.subr.bf16.mxu0 %v900
        %1378 = vmatpush1.bf16.msra.mxu0 %v899
        %1379 = vmatprep.subr.bf16.mxu0 %v908
        %1380 = vmatpush1.bf16.msra.mxu0 %v907
        %1381 = vmatprep.subr.bf16.mxu0 %v916
        %1382 = vmatpush1.bf16.msra.mxu0 %v915
        %1383 = vmatprep.subr.bf16.mxu0 %v924
        %1384 = vmatpush1.bf16.msra.mxu0 %v923
        %1385 = vmatprep.subr.bf16.mxu0 %v932
        %1386 = vmatpush1.bf16.msra.mxu0 %v931
        %1387 = vmatprep.subr.bf16.mxu0 %v940
        %1388 = vmatpush1.bf16.msra.mxu0 %v939
        %1389 = vmatprep.subr.bf16.mxu0 %v948
        %1390 = vmatpush1.bf16.msra.mxu0 %v947
        %1391 = vmatprep.subr.bf16.mxu0 %v956
        %1392 = vmatpush1.bf16.msra.mxu0 %v955
        %1393 = vmatprep.subr.bf16.mxu0 %v964
        %1394 = vmatpush1.bf16.msra.mxu0 %v963
        %1395 = vmatprep.subr.bf16.mxu0 %v972
        %1396 = vmatpush1.bf16.msra.mxu0 %v971
        %1397 = vmatprep.subr.bf16.mxu0 %v980
        %1398 = vmatpush1.bf16.msra.mxu0 %v979
        %1399 = vmatprep.subr.bf16.mxu0 %v988
        %1400 = vmatpush1.bf16.msra.mxu0 %v987
        %1401 = vmatprep.subr.bf16.mxu0 %v996
        %1402 = vmatpush1.bf16.msra.mxu0 %v995
        %1403 = vmatprep.subr.bf16.mxu0 %v1004
        %1404 = vmatpush1.bf16.msra.mxu0 %v1003
        %1405 = vmatprep.subr.bf16.mxu0 %v1012
        %1406 = vmatpush1.bf16.msra.mxu0 %v1011
        %1407 = vmatprep.subr.bf16.mxu0 %v1020
        %1408 = vmatpush1.bf16.msra.mxu0 %v1019
        %1409 = vmatprep.mubr.bf16.mxu0 %v368
        %1410 = vmatmul.mubr.bf16.gmra.mrb[0].mxu0 %v367
        %v1411 = vpop.f32.mrb[0].mxu0
        %v1412 = vadd.f32 0.0, %v1411
        %v1413 = vpop.f32.mrb[0].mxu0
        %v1414 = vadd.f32 0.0, %v1413
        %v1415 = vpop.f32.mrb[0].mxu0
        %v1416 = vadd.f32 0.0, %v1415
        %v1417 = vpop.f32.mrb[0].mxu0
        %v1418 = vadd.f32 0.0, %v1417
        %1419 = vmatprep.mubr.bf16.mxu0 %v370
        %1420 = vmatmul.mubr.bf16.gmra.mrb[0].mxu0 %v369
        %v1421 = vpop.f32.mrb[0].mxu0
        %v1422 = vadd.f32 0.0, %v1421
        %v1423 = vpop.f32.mrb[0].mxu0
        %v1424 = vadd.f32 0.0, %v1423
        %v1425 = vpop.f32.mrb[0].mxu0
        %v1426 = vadd.f32 0.0, %v1425
        %v1427 = vpop.f32.mrb[0].mxu0
        %v1428 = vadd.f32 0.0, %v1427
        %1429 = vmatprep.mubr.bf16.mxu0 %v372
        %1430 = vmatmul.mubr.bf16.gmra.mrb[0].mxu0 %v371
        %v1431 = vpop.f32.mrb[0].mxu0
        %v1432 = vadd.f32 0.0, %v1431
        %v1433 = vpop.f32.mrb[0].mxu0
        %v1434 = vadd.f32 0.0, %v1433
        %v1435 = vpop.f32.mrb[0].mxu0
        %v1436 = vadd.f32 0.0, %v1435
        %v1437 = vpop.f32.mrb[0].mxu0
        %v1438 = vadd.f32 0.0, %v1437
        %1439 = vmatprep.mubr.bf16.mxu0 %v374
        %1440 = vmatmul.mubr.bf16.gmra.mrb[0].mxu0 %v373
        %v1441 = vpop.f32.mrb[0].mxu0
        %v1442 = vadd.f32 0.0, %v1441
        %v1443 = vpop.f32.mrb[0].mxu0
        %v1444 = vadd.f32 0.0, %v1443
        %v1445 = vpop.f32.mrb[0].mxu0
        %v1446 = vadd.f32 0.0, %v1445
        %v1447 = vpop.f32.mrb[0].mxu0
        %v1448 = vadd.f32 0.0, %v1447
        %1449 = vmatprep.mubr.bf16.mxu0 %v376
        %1450 = vmatmul.mubr.bf16.gmra.mrb[0].mxu0 %v375
        %v1451 = vpop.f32.mrb[0].mxu0
        %v1452 = vadd.f32 0.0, %v1451
        %v1453 = vpop.f32.mrb[0].mxu0
        %v1454 = vadd.f32 0.0, %v1453
        %v1455 = vpop.f32.mrb[0].mxu0
        %v1456 = vadd.f32 0.0, %v1455
        %v1457 = vpop.f32.mrb[0].mxu0
        %v1458 = vadd.f32 0.0, %v1457
        %1459 = vmatprep.mubr.bf16.mxu0 %v378
        %1460 = vmatmul.mubr.bf16.gmra.mrb[0].mxu0 %v377
        %v1461 = vpop.f32.mrb[0].mxu0
        %v1462 = vadd.f32 0.0, %v1461
        %v1463 = vpop.f32.mrb[0].mxu0
        %v1464 = vadd.f32 0.0, %v1463
        %v1465 = vpop.f32.mrb[0].mxu0
        %v1466 = vadd.f32 0.0, %v1465
        %v1467 = vpop.f32.mrb[0].mxu0
        %v1468 = vadd.f32 0.0, %v1467
        %1469 = vmatprep.mubr.bf16.mxu0 %v380
        %1470 = vmatmul.mubr.bf16.gmra.mrb[0].mxu0 %v379
        %v1471 = vpop.f32.mrb[0].mxu0
        %v1472 = vadd.f32 0.0, %v1471
        %v1473 = vpop.f32.mrb[0].mxu0
        %v1474 = vadd.f32 0.0, %v1473
        %v1475 = vpop.f32.mrb[0].mxu0
        %v1476 = vadd.f32 0.0, %v1475
        %v1477 = vpop.f32.mrb[0].mxu0
        %v1478 = vadd.f32 0.0, %v1477
        %1479 = vmatprep.mubr.bf16.mxu0 %v382
        %1480 = vmatmul.mubr.bf16.gmra.mrb[0].mxu0 %v381
        %v1481 = vpop.f32.mrb[0].mxu0
        %v1482 = vadd.f32 0.0, %v1481
        %v1483 = vpop.f32.mrb[0].mxu0
        %v1484 = vadd.f32 0.0, %v1483
        %v1485 = vpop.f32.mrb[0].mxu0
        %v1486 = vadd.f32 0.0, %v1485
        %v1487 = vpop.f32.mrb[0].mxu0
        %v1488 = vadd.f32 0.0, %v1487
        %1489 = vdwg.mxu0
        %1490 = vmatprep.subr.bf16.mxu0 %v902
        %1491 = vmatpush1.bf16.msra.mxu0 %v901
        %1492 = vmatprep.subr.bf16.mxu0 %v910
        %1493 = vmatpush1.bf16.msra.mxu0 %v909
        %1494 = vmatprep.subr.bf16.mxu0 %v918
        %1495 = vmatpush1.bf16.msra.mxu0 %v917
        %1496 = vmatprep.subr.bf16.mxu0 %v926
        %1497 = vmatpush1.bf16.msra.mxu0 %v925
        %1498 = vmatprep.subr.bf16.mxu0 %v934
        %1499 = vmatpush1.bf16.msra.mxu0 %v933
        %1500 = vmatprep.subr.bf16.mxu0 %v942
        %1501 = vmatpush1.bf16.msra.mxu0 %v941
        %1502 = vmatprep.subr.bf16.mxu0 %v950
        %1503 = vmatpush1.bf16.msra.mxu0 %v949
        %1504 = vmatprep.subr.bf16.mxu0 %v958
        %1505 = vmatpush1.bf16.msra.mxu0 %v957
        %1506 = vmatprep.subr.bf16.mxu0 %v966
        %1507 = vmatpush1.bf16.msra.mxu0 %v965
        %1508 = vmatprep.subr.bf16.mxu0 %v974
        %1509 = vmatpush1.bf16.msra.mxu0 %v973
        %1510 = vmatprep.subr.bf16.mxu0 %v982
        %1511 = vmatpush1.bf16.msra.mxu0 %v981
        %1512 = vmatprep.subr.bf16.mxu0 %v990
        %1513 = vmatpush1.bf16.msra.mxu0 %v989
        %1514 = vmatprep.subr.bf16.mxu0 %v998
        %1515 = vmatpush1.bf16.msra.mxu0 %v997
        %1516 = vmatprep.subr.bf16.mxu0 %v1006
        %1517 = vmatpush1.bf16.msra.mxu0 %v1005
        %1518 = vmatprep.subr.bf16.mxu0 %v1014
        %1519 = vmatpush1.bf16.msra.mxu0 %v1013
        %1520 = vmatprep.subr.bf16.mxu0 %v1022
        %1521 = vmatpush1.bf16.msra.mxu0 %v1021
        %1522 = vmatprep.mubr.bf16.mxu0 %v368
        %1523 = vmatmul.mubr.bf16.gmra.mrb[0].mxu0 %v367
        %v1524 = vpop.f32.mrb[0].mxu0
        %v1525 = vadd.f32 0.0, %v1524
        %v1526 = vpop.f32.mrb[0].mxu0
        %v1527 = vadd.f32 0.0, %v1526
        %v1528 = vpop.f32.mrb[0].mxu0
        %v1529 = vadd.f32 0.0, %v1528
        %v1530 = vpop.f32.mrb[0].mxu0
        %v1531 = vadd.f32 0.0, %v1530
        %1532 = vmatprep.mubr.bf16.mxu0 %v370
        %1533 = vmatmul.mubr.bf16.gmra.mrb[0].mxu0 %v369
        %v1534 = vpop.f32.mrb[0].mxu0
        %v1535 = vadd.f32 0.0, %v1534
        %v1536 = vpop.f32.mrb[0].mxu0
        %v1537 = vadd.f32 0.0, %v1536
        %v1538 = vpop.f32.mrb[0].mxu0
        %v1539 = vadd.f32 0.0, %v1538
        %v1540 = vpop.f32.mrb[0].mxu0
        %v1541 = vadd.f32 0.0, %v1540
        %1542 = vmatprep.mubr.bf16.mxu0 %v372
        %1543 = vmatmul.mubr.bf16.gmra.mrb[0].mxu0 %v371
        %v1544 = vpop.f32.mrb[0].mxu0
        %v1545 = vadd.f32 0.0, %v1544
        %v1546 = vpop.f32.mrb[0].mxu0
        %v1547 = vadd.f32 0.0, %v1546
        %v1548 = vpop.f32.mrb[0].mxu0
        %v1549 = vadd.f32 0.0, %v1548
        %v1550 = vpop.f32.mrb[0].mxu0
        %v1551 = vadd.f32 0.0, %v1550
        %1552 = vmatprep.mubr.bf16.mxu0 %v374
        %1553 = vmatmul.mubr.bf16.gmra.mrb[0].mxu0 %v373
        %v1554 = vpop.f32.mrb[0].mxu0
        %v1555 = vadd.f32 0.0, %v1554
        %v1556 = vpop.f32.mrb[0].mxu0
        %v1557 = vadd.f32 0.0, %v1556
        %v1558 = vpop.f32.mrb[0].mxu0
        %v1559 = vadd.f32 0.0, %v1558
        %v1560 = vpop.f32.mrb[0].mxu0
        %v1561 = vadd.f32 0.0, %v1560
        %1562 = vmatprep.mubr.bf16.mxu0 %v376
        %1563 = vmatmul.mubr.bf16.gmra.mrb[0].mxu0 %v375
        %v1564 = vpop.f32.mrb[0].mxu0
        %v1565 = vadd.f32 0.0, %v1564
        %v1566 = vpop.f32.mrb[0].mxu0
        %v1567 = vadd.f32 0.0, %v1566
        %v1568 = vpop.f32.mrb[0].mxu0
        %v1569 = vadd.f32 0.0, %v1568
        %v1570 = vpop.f32.mrb[0].mxu0
        %v1571 = vadd.f32 0.0, %v1570
        %1572 = vmatprep.mubr.bf16.mxu0 %v378
        %1573 = vmatmul.mubr.bf16.gmra.mrb[0].mxu0 %v377
        %v1574 = vpop.f32.mrb[0].mxu0
        %v1575 = vadd.f32 0.0, %v1574
        %v1576 = vpop.f32.mrb[0].mxu0
        %v1577 = vadd.f32 0.0, %v1576
        %v1578 = vpop.f32.mrb[0].mxu0
        %v1579 = vadd.f32 0.0, %v1578
        %v1580 = vpop.f32.mrb[0].mxu0
        %v1581 = vadd.f32 0.0, %v1580
        %1582 = vmatprep.mubr.bf16.mxu0 %v380
        %1583 = vmatmul.mubr.bf16.gmra.mrb[0].mxu0 %v379
        %v1584 = vpop.f32.mrb[0].mxu0
        %v1585 = vadd.f32 0.0, %v1584
        %v1586 = vpop.f32.mrb[0].mxu0
        %v1587 = vadd.f32 0.0, %v1586
        %v1588 = vpop.f32.mrb[0].mxu0
        %v1589 = vadd.f32 0.0, %v1588
        %v1590 = vpop.f32.mrb[0].mxu0
        %v1591 = vadd.f32 0.0, %v1590
        %1592 = vmatprep.mubr.bf16.mxu0 %v382
        %1593 = vmatmul.mubr.bf16.gmra.mrb[0].mxu0 %v381
        %v1594 = vpop.f32.mrb[0].mxu0
        %v1595 = vadd.f32 0.0, %v1594
        %v1596 = vpop.f32.mrb[0].mxu0
        %v1597 = vadd.f32 0.0, %v1596
        %v1598 = vpop.f32.mrb[0].mxu0
        %v1599 = vadd.f32 0.0, %v1598
        %v1600 = vpop.f32.mrb[0].mxu0
        %v1601 = vadd.f32 0.0, %v1600
        %1602 = vdwg.mxu0
        %v1603 = vld [vmem:[#allocation8] sm:$0xff]
        %v1604 = vmul.f32 %v1186, 2.0
        %v1605 = vmul.f32 %v1188, 2.0
        %v1606 = vmul.f32 %v1299, 2.0
        %v1607 = vmul.f32 %v1301, 2.0
        %v1608 = vmul.f32 %v1412, 2.0
        %v1609 = vmul.f32 %v1414, 2.0
        %v1610 = vmul.f32 %v1525, 2.0
        %v1611 = vmul.f32 %v1527, 2.0
        %v1612 = vmul.f32 %v1190, 2.0
        %v1613 = vmul.f32 %v1192, 2.0
        %v1614 = vmul.f32 %v1303, 2.0
        %v1615 = vmul.f32 %v1305, 2.0
        %v1616 = vmul.f32 %v1416, 2.0
        %v1617 = vmul.f32 %v1418, 2.0
        %v1618 = vmul.f32 %v1529, 2.0
        %v1619 = vmul.f32 %v1531, 2.0
        %v1620 = vmul.f32 %v1196, 2.0
        %v1621 = vmul.f32 %v1198, 2.0
        %v1622 = vmul.f32 %v1309, 2.0
        %v1623 = vmul.f32 %v1311, 2.0
        %v1624 = vmul.f32 %v1422, 2.0
        %v1625 = vmul.f32 %v1424, 2.0
        %v1626 = vmul.f32 %v1535, 2.0
        %v1627 = vmul.f32 %v1537, 2.0
        %v1628 = vmul.f32 %v1200, 2.0
        %v1629 = vmul.f32 %v1202, 2.0
        %v1630 = vmul.f32 %v1313, 2.0
        %v1631 = vmul.f32 %v1315, 2.0
        %v1632 = vmul.f32 %v1426, 2.0
        %v1633 = vmul.f32 %v1428, 2.0
        %v1634 = vmul.f32 %v1539, 2.0
        %v1635 = vmul.f32 %v1541, 2.0
        %v1636 = vmul.f32 %v1206, 2.0
        %v1637 = vmul.f32 %v1208, 2.0
        %v1638 = vmul.f32 %v1319, 2.0
        %v1639 = vmul.f32 %v1321, 2.0
        %v1640 = vmul.f32 %v1432, 2.0
        %v1641 = vmul.f32 %v1434, 2.0
        %v1642 = vmul.f32 %v1545, 2.0
        %v1643 = vmul.f32 %v1547, 2.0
        %v1644 = vmul.f32 %v1210, 2.0
        %v1645 = vmul.f32 %v1212, 2.0
        %v1646 = vmul.f32 %v1323, 2.0
        %v1647 = vmul.f32 %v1325, 2.0
        %v1648 = vmul.f32 %v1436, 2.0
        %v1649 = vmul.f32 %v1438, 2.0
        %v1650 = vmul.f32 %v1549, 2.0
        %v1651 = vmul.f32 %v1551, 2.0
        %v1652 = vmul.f32 %v1216, 2.0
        %v1653 = vmul.f32 %v1218, 2.0
        %v1654 = vmul.f32 %v1329, 2.0
        %v1655 = vmul.f32 %v1331, 2.0
        %v1656 = vmul.f32 %v1442, 2.0
        %v1657 = vmul.f32 %v1444, 2.0
        %v1658 = vmul.f32 %v1555, 2.0
        %v1659 = vmul.f32 %v1557, 2.0
        %v1660 = vmul.f32 %v1220, 2.0
        %v1661 = vmul.f32 %v1222, 2.0
        %v1662 = vmul.f32 %v1333, 2.0
        %v1663 = vmul.f32 %v1335, 2.0
        %v1664 = vmul.f32 %v1446, 2.0
        %v1665 = vmul.f32 %v1448, 2.0
        %v1666 = vmul.f32 %v1559, 2.0
        %v1667 = vmul.f32 %v1561, 2.0
        %v1668 = vmul.f32 %v1226, 2.0
        %v1669 = vmul.f32 %v1228, 2.0
        %v1670 = vmul.f32 %v1339, 2.0
        %v1671 = vmul.f32 %v1341, 2.0
        %v1672 = vmul.f32 %v1452, 2.0
        %v1673 = vmul.f32 %v1454, 2.0
        %v1674 = vmul.f32 %v1565, 2.0
        %v1675 = vmul.f32 %v1567, 2.0
        %v1676 = vmul.f32 %v1230, 2.0
        %v1677 = vmul.f32 %v1232, 2.0
        %v1678 = vmul.f32 %v1343, 2.0
        %v1679 = vmul.f32 %v1345, 2.0
        %v1680 = vmul.f32 %v1456, 2.0
        %v1681 = vmul.f32 %v1458, 2.0
        %v1682 = vmul.f32 %v1569, 2.0
        %v1683 = vmul.f32 %v1571, 2.0
        %v1684 = vmul.f32 %v1236, 2.0
        %v1685 = vmul.f32 %v1238, 2.0
        %v1686 = vmul.f32 %v1349, 2.0
        %v1687 = vmul.f32 %v1351, 2.0
        %v1688 = vmul.f32 %v1462, 2.0
        %v1689 = vmul.f32 %v1464, 2.0
        %v1690 = vmul.f32 %v1575, 2.0
        %v1691 = vmul.f32 %v1577, 2.0
        %v1692 = vmul.f32 %v1240, 2.0
        %v1693 = vmul.f32 %v1242, 2.0
        %v1694 = vmul.f32 %v1353, 2.0
        %v1695 = vmul.f32 %v1355, 2.0
        %v1696 = vmul.f32 %v1466, 2.0
        %v1697 = vmul.f32 %v1468, 2.0
        %v1698 = vmul.f32 %v1579, 2.0
        %v1699 = vmul.f32 %v1581, 2.0
        %v1700 = vmul.f32 %v1246, 2.0
        %v1701 = vmul.f32 %v1248, 2.0
        %v1702 = vmul.f32 %v1359, 2.0
        %v1703 = vmul.f32 %v1361, 2.0
        %v1704 = vmul.f32 %v1472, 2.0
        %v1705 = vmul.f32 %v1474, 2.0
        %v1706 = vmul.f32 %v1585, 2.0
        %v1707 = vmul.f32 %v1587, 2.0
        %v1708 = vmul.f32 %v1250, 2.0
        %v1709 = vmul.f32 %v1252, 2.0
        %v1710 = vmul.f32 %v1363, 2.0
        %v1711 = vmul.f32 %v1365, 2.0
        %v1712 = vmul.f32 %v1476, 2.0
        %v1713 = vmul.f32 %v1478, 2.0
        %v1714 = vmul.f32 %v1589, 2.0
        %v1715 = vmul.f32 %v1591, 2.0
        %v1716 = vmul.f32 %v1256, 2.0
        %v1717 = vmul.f32 %v1258, 2.0
        %v1718 = vmul.f32 %v1369, 2.0
        %v1719 = vmul.f32 %v1371, 2.0
        %v1720 = vmul.f32 %v1482, 2.0
        %v1721 = vmul.f32 %v1484, 2.0
        %v1722 = vmul.f32 %v1595, 2.0
        %v1723 = vmul.f32 %v1597, 2.0
        %v1724 = vmul.f32 %v1260, 2.0
        %v1725 = vmul.f32 %v1262, 2.0
        %v1726 = vmul.f32 %v1373, 2.0
        %v1727 = vmul.f32 %v1375, 2.0
        %v1728 = vmul.f32 %v1486, 2.0
        %v1729 = vmul.f32 %v1488, 2.0
        %v1730 = vmul.f32 %v1599, 2.0
        %v1731 = vmul.f32 %v1601, 2.0
        %v1733 = vlaneseq
        %v1734 = vshrl.u32 %v1733, 7
        %v1735 = vsub.s32 0, %v1734
        %v1736 = vrot.slane %v1603, %v1735
        %v1737 = vlaneseq
        %v1738 = vshrl.u32 %v1737, 7
        %v1739 = vsub.s32 1, %v1738
        %v1740 = vrot.slane %v1603, %v1739
        %v1741 = vlaneseq
        %v1742 = vshrl.u32 %v1741, 7
        %v1743 = vsub.s32 2, %v1742
        %v1744 = vrot.slane %v1603, %v1743
        %v1745 = vlaneseq
        %v1746 = vshrl.u32 %v1745, 7
        %v1747 = vsub.s32 3, %v1746
        %v1748 = vrot.slane %v1603, %v1747
        %v1749 = vlaneseq
        %v1750 = vshrl.u32 %v1749, 7
        %v1751 = vsub.s32 4, %v1750
        %v1752 = vrot.slane %v1603, %v1751
        %v1753 = vlaneseq
        %v1754 = vshrl.u32 %v1753, 7
        %v1755 = vsub.s32 5, %v1754
        %v1756 = vrot.slane %v1603, %v1755
        %v1757 = vlaneseq
        %v1758 = vshrl.u32 %v1757, 7
        %v1759 = vsub.s32 6, %v1758
        %v1760 = vrot.slane %v1603, %v1759
        %v1761 = vlaneseq
        %v1762 = vshrl.u32 %v1761, 7
        %v1763 = vsub.s32 7, %v1762
        %v1764 = vrot.slane %v1603, %v1763
        %v1773 = vsub.f32 %v1736, %v1604
        %v1774 = vsub.f32 %v1740, %v1605
        %v1775 = vsub.f32 %v1744, %v1606
        %v1776 = vsub.f32 %v1748, %v1607
        %v1777 = vsub.f32 %v1752, %v1608
        %v1778 = vsub.f32 %v1756, %v1609
        %v1779 = vsub.f32 %v1760, %v1610
        %v1780 = vsub.f32 %v1764, %v1611
        %v1781 = vsub.f32 %v1736, %v1612
        %v1782 = vsub.f32 %v1740, %v1613
        %v1783 = vsub.f32 %v1744, %v1614
        %v1784 = vsub.f32 %v1748, %v1615
        %v1785 = vsub.f32 %v1752, %v1616
        %v1786 = vsub.f32 %v1756, %v1617
        %v1787 = vsub.f32 %v1760, %v1618
        %v1788 = vsub.f32 %v1764, %v1619
        %v1789 = vsub.f32 %v1736, %v1620
        %v1790 = vsub.f32 %v1740, %v1621
        %v1791 = vsub.f32 %v1744, %v1622
        %v1792 = vsub.f32 %v1748, %v1623
        %v1793 = vsub.f32 %v1752, %v1624
        %v1794 = vsub.f32 %v1756, %v1625
        %v1795 = vsub.f32 %v1760, %v1626
        %v1796 = vsub.f32 %v1764, %v1627
        %v1797 = vsub.f32 %v1736, %v1628
        %v1798 = vsub.f32 %v1740, %v1629
        %v1799 = vsub.f32 %v1744, %v1630
        %v1800 = vsub.f32 %v1748, %v1631
        %v1801 = vsub.f32 %v1752, %v1632
        %v1802 = vsub.f32 %v1756, %v1633
        %v1803 = vsub.f32 %v1760, %v1634
        %v1804 = vsub.f32 %v1764, %v1635
        %v1805 = vsub.f32 %v1736, %v1636
        %v1806 = vsub.f32 %v1740, %v1637
        %v1807 = vsub.f32 %v1744, %v1638
        %v1808 = vsub.f32 %v1748, %v1639
        %v1809 = vsub.f32 %v1752, %v1640
        %v1810 = vsub.f32 %v1756, %v1641
        %v1811 = vsub.f32 %v1760, %v1642
        %v1812 = vsub.f32 %v1764, %v1643
        %v1813 = vsub.f32 %v1736, %v1644
        %v1814 = vsub.f32 %v1740, %v1645
        %v1815 = vsub.f32 %v1744, %v1646
        %v1816 = vsub.f32 %v1748, %v1647
        %v1817 = vsub.f32 %v1752, %v1648
        %v1818 = vsub.f32 %v1756, %v1649
        %v1819 = vsub.f32 %v1760, %v1650
        %v1820 = vsub.f32 %v1764, %v1651
        %v1821 = vsub.f32 %v1736, %v1652
        %v1822 = vsub.f32 %v1740, %v1653
        %v1823 = vsub.f32 %v1744, %v1654
        %v1824 = vsub.f32 %v1748, %v1655
        %v1825 = vsub.f32 %v1752, %v1656
        %v1826 = vsub.f32 %v1756, %v1657
        %v1827 = vsub.f32 %v1760, %v1658
        %v1828 = vsub.f32 %v1764, %v1659
        %v1829 = vsub.f32 %v1736, %v1660
        %v1830 = vsub.f32 %v1740, %v1661
        %v1831 = vsub.f32 %v1744, %v1662
        %v1832 = vsub.f32 %v1748, %v1663
        %v1833 = vsub.f32 %v1752, %v1664
        %v1834 = vsub.f32 %v1756, %v1665
        %v1835 = vsub.f32 %v1760, %v1666
        %v1836 = vsub.f32 %v1764, %v1667
        %v1837 = vsub.f32 %v1736, %v1668
        %v1838 = vsub.f32 %v1740, %v1669
        %v1839 = vsub.f32 %v1744, %v1670
        %v1840 = vsub.f32 %v1748, %v1671
        %v1841 = vsub.f32 %v1752, %v1672
        %v1842 = vsub.f32 %v1756, %v1673
        %v1843 = vsub.f32 %v1760, %v1674
        %v1844 = vsub.f32 %v1764, %v1675
        %v1845 = vsub.f32 %v1736, %v1676
        %v1846 = vsub.f32 %v1740, %v1677
        %v1847 = vsub.f32 %v1744, %v1678
        %v1848 = vsub.f32 %v1748, %v1679
        %v1849 = vsub.f32 %v1752, %v1680
        %v1850 = vsub.f32 %v1756, %v1681
        %v1851 = vsub.f32 %v1760, %v1682
        %v1852 = vsub.f32 %v1764, %v1683
        %v1853 = vsub.f32 %v1736, %v1684
        %v1854 = vsub.f32 %v1740, %v1685
        %v1855 = vsub.f32 %v1744, %v1686
        %v1856 = vsub.f32 %v1748, %v1687
        %v1857 = vsub.f32 %v1752, %v1688
        %v1858 = vsub.f32 %v1756, %v1689
        %v1859 = vsub.f32 %v1760, %v1690
        %v1860 = vsub.f32 %v1764, %v1691
        %v1861 = vsub.f32 %v1736, %v1692
        %v1862 = vsub.f32 %v1740, %v1693
        %v1863 = vsub.f32 %v1744, %v1694
        %v1864 = vsub.f32 %v1748, %v1695
        %v1865 = vsub.f32 %v1752, %v1696
        %v1866 = vsub.f32 %v1756, %v1697
        %v1867 = vsub.f32 %v1760, %v1698
        %v1868 = vsub.f32 %v1764, %v1699
        %v1869 = vsub.f32 %v1736, %v1700
        %v1870 = vsub.f32 %v1740, %v1701
        %v1871 = vsub.f32 %v1744, %v1702
        %v1872 = vsub.f32 %v1748, %v1703
        %v1873 = vsub.f32 %v1752, %v1704
        %v1874 = vsub.f32 %v1756, %v1705
        %v1875 = vsub.f32 %v1760, %v1706
        %v1876 = vsub.f32 %v1764, %v1707
        %v1877 = vsub.f32 %v1736, %v1708
        %v1878 = vsub.f32 %v1740, %v1709
        %v1879 = vsub.f32 %v1744, %v1710
        %v1880 = vsub.f32 %v1748, %v1711
        %v1881 = vsub.f32 %v1752, %v1712
        %v1882 = vsub.f32 %v1756, %v1713
        %v1883 = vsub.f32 %v1760, %v1714
        %v1884 = vsub.f32 %v1764, %v1715
        %v1885 = vsub.f32 %v1736, %v1716
        %v1886 = vsub.f32 %v1740, %v1717
        %v1887 = vsub.f32 %v1744, %v1718
        %v1888 = vsub.f32 %v1748, %v1719
        %v1889 = vsub.f32 %v1752, %v1720
        %v1890 = vsub.f32 %v1756, %v1721
        %v1891 = vsub.f32 %v1760, %v1722
        %v1892 = vsub.f32 %v1764, %v1723
        %v1893 = vsub.f32 %v1736, %v1724
        %v1894 = vsub.f32 %v1740, %v1725
        %v1895 = vsub.f32 %v1744, %v1726
        %v1896 = vsub.f32 %v1748, %v1727
        %v1897 = vsub.f32 %v1752, %v1728
        %v1898 = vsub.f32 %v1756, %v1729
        %v1899 = vsub.f32 %v1760, %v1730
        %v1900 = vsub.f32 %v1764, %v1731
        %v1901 = vmin.f32 %v1773, %v1774
        %v1902 = vmin.f32 %v1901, %v1775
        %v1903 = vmin.f32 %v1902, %v1776
        %v1904 = vmin.f32 %v1903, %v1777
        %v1905 = vmin.f32 %v1904, %v1778
        %v1906 = vmin.f32 %v1905, %v1779
        %v1907 = vmin.f32 %v1906, %v1780
        %1908 = vmin.xlane.f32.xlu0 %v1907
        %v1909 = vpop.xlane.xlu0 %1908
        %v1910 = vmin.f32 %v1781, %v1782
        %v1911 = vmin.f32 %v1910, %v1783
        %v1912 = vmin.f32 %v1911, %v1784
        %v1913 = vmin.f32 %v1912, %v1785
        %v1914 = vmin.f32 %v1913, %v1786
        %v1915 = vmin.f32 %v1914, %v1787
        %v1916 = vmin.f32 %v1915, %v1788
        %1917 = vmin.xlane.f32.xlu0 %v1916
        %v1918 = vpop.xlane.xlu0 %1917
        %v1919 = vmin.f32 %v1789, %v1790
        %v1920 = vmin.f32 %v1919, %v1791
        %v1921 = vmin.f32 %v1920, %v1792
        %v1922 = vmin.f32 %v1921, %v1793
        %v1923 = vmin.f32 %v1922, %v1794
        %v1924 = vmin.f32 %v1923, %v1795
        %v1925 = vmin.f32 %v1924, %v1796
        %1926 = vmin.xlane.f32.xlu0 %v1925
        %v1927 = vpop.xlane.xlu0 %1926
        %v1928 = vmin.f32 %v1797, %v1798
        %v1929 = vmin.f32 %v1928, %v1799
        %v1930 = vmin.f32 %v1929, %v1800
        %v1931 = vmin.f32 %v1930, %v1801
        %v1932 = vmin.f32 %v1931, %v1802
        %v1933 = vmin.f32 %v1932, %v1803
        %v1934 = vmin.f32 %v1933, %v1804
        %1935 = vmin.xlane.f32.xlu0 %v1934
        %v1936 = vpop.xlane.xlu0 %1935
        %v1937 = vmin.f32 %v1805, %v1806
        %v1938 = vmin.f32 %v1937, %v1807
        %v1939 = vmin.f32 %v1938, %v1808
        %v1940 = vmin.f32 %v1939, %v1809
        %v1941 = vmin.f32 %v1940, %v1810
        %v1942 = vmin.f32 %v1941, %v1811
        %v1943 = vmin.f32 %v1942, %v1812
        %1944 = vmin.xlane.f32.xlu0 %v1943
        %v1945 = vpop.xlane.xlu0 %1944
        %v1946 = vmin.f32 %v1813, %v1814
        %v1947 = vmin.f32 %v1946, %v1815
        %v1948 = vmin.f32 %v1947, %v1816
        %v1949 = vmin.f32 %v1948, %v1817
        %v1950 = vmin.f32 %v1949, %v1818
        %v1951 = vmin.f32 %v1950, %v1819
        %v1952 = vmin.f32 %v1951, %v1820
        %1953 = vmin.xlane.f32.xlu0 %v1952
        %v1954 = vpop.xlane.xlu0 %1953
        %v1955 = vmin.f32 %v1821, %v1822
        %v1956 = vmin.f32 %v1955, %v1823
        %v1957 = vmin.f32 %v1956, %v1824
        %v1958 = vmin.f32 %v1957, %v1825
        %v1959 = vmin.f32 %v1958, %v1826
        %v1960 = vmin.f32 %v1959, %v1827
        %v1961 = vmin.f32 %v1960, %v1828
        %1962 = vmin.xlane.f32.xlu0 %v1961
        %v1963 = vpop.xlane.xlu0 %1962
        %v1964 = vmin.f32 %v1829, %v1830
        %v1965 = vmin.f32 %v1964, %v1831
        %v1966 = vmin.f32 %v1965, %v1832
        %v1967 = vmin.f32 %v1966, %v1833
        %v1968 = vmin.f32 %v1967, %v1834
        %v1969 = vmin.f32 %v1968, %v1835
        %v1970 = vmin.f32 %v1969, %v1836
        %1971 = vmin.xlane.f32.xlu0 %v1970
        %v1972 = vpop.xlane.xlu0 %1971
        %v1973 = vmin.f32 %v1837, %v1838
        %v1974 = vmin.f32 %v1973, %v1839
        %v1975 = vmin.f32 %v1974, %v1840
        %v1976 = vmin.f32 %v1975, %v1841
        %v1977 = vmin.f32 %v1976, %v1842
        %v1978 = vmin.f32 %v1977, %v1843
        %v1979 = vmin.f32 %v1978, %v1844
        %1980 = vmin.xlane.f32.xlu0 %v1979
        %v1981 = vpop.xlane.xlu0 %1980
        %v1982 = vmin.f32 %v1845, %v1846
        %v1983 = vmin.f32 %v1982, %v1847
        %v1984 = vmin.f32 %v1983, %v1848
        %v1985 = vmin.f32 %v1984, %v1849
        %v1986 = vmin.f32 %v1985, %v1850
        %v1987 = vmin.f32 %v1986, %v1851
        %v1988 = vmin.f32 %v1987, %v1852
        %1989 = vmin.xlane.f32.xlu0 %v1988
        %v1990 = vpop.xlane.xlu0 %1989
        %v1991 = vmin.f32 %v1853, %v1854
        %v1992 = vmin.f32 %v1991, %v1855
        %v1993 = vmin.f32 %v1992, %v1856
        %v1994 = vmin.f32 %v1993, %v1857
        %v1995 = vmin.f32 %v1994, %v1858
        %v1996 = vmin.f32 %v1995, %v1859
        %v1997 = vmin.f32 %v1996, %v1860
        %1998 = vmin.xlane.f32.xlu0 %v1997
        %v1999 = vpop.xlane.xlu0 %1998
        %v2000 = vmin.f32 %v1861, %v1862
        %v2001 = vmin.f32 %v2000, %v1863
        %v2002 = vmin.f32 %v2001, %v1864
        %v2003 = vmin.f32 %v2002, %v1865
        %v2004 = vmin.f32 %v2003, %v1866
        %v2005 = vmin.f32 %v2004, %v1867
        %v2006 = vmin.f32 %v2005, %v1868
        %2007 = vmin.xlane.f32.xlu0 %v2006
        %v2008 = vpop.xlane.xlu0 %2007
        %v2009 = vmin.f32 %v1869, %v1870
        %v2010 = vmin.f32 %v2009, %v1871
        %v2011 = vmin.f32 %v2010, %v1872
        %v2012 = vmin.f32 %v2011, %v1873
        %v2013 = vmin.f32 %v2012, %v1874
        %v2014 = vmin.f32 %v2013, %v1875
        %v2015 = vmin.f32 %v2014, %v1876
        %2016 = vmin.xlane.f32.xlu0 %v2015
        %v2017 = vpop.xlane.xlu0 %2016
        %v2018 = vmin.f32 %v1877, %v1878
        %v2019 = vmin.f32 %v2018, %v1879
        %v2020 = vmin.f32 %v2019, %v1880
        %v2021 = vmin.f32 %v2020, %v1881
        %v2022 = vmin.f32 %v2021, %v1882
        %v2023 = vmin.f32 %v2022, %v1883
        %v2024 = vmin.f32 %v2023, %v1884
        %2025 = vmin.xlane.f32.xlu0 %v2024
        %v2026 = vpop.xlane.xlu0 %2025
        %v2027 = vmin.f32 %v1885, %v1886
        %v2028 = vmin.f32 %v2027, %v1887
        %v2029 = vmin.f32 %v2028, %v1888
        %v2030 = vmin.f32 %v2029, %v1889
        %v2031 = vmin.f32 %v2030, %v1890
        %v2032 = vmin.f32 %v2031, %v1891
        %v2033 = vmin.f32 %v2032, %v1892
        %2034 = vmin.xlane.f32.xlu0 %v2033
        %v2035 = vpop.xlane.xlu0 %2034
        %v2036 = vmin.f32 %v1893, %v1894
        %v2037 = vmin.f32 %v2036, %v1895
        %v2038 = vmin.f32 %v2037, %v1896
        %v2039 = vmin.f32 %v2038, %v1897
        %v2040 = vmin.f32 %v2039, %v1898
        %v2041 = vmin.f32 %v2040, %v1899
        %v2042 = vmin.f32 %v2041, %v1900
        %2043 = vmin.xlane.f32.xlu0 %v2042
        %v2044 = vpop.xlane.xlu0 %2043
        %v2045 = vlaneseq
        %v2046 = vand.u32 %v2045, 127
        %v2047 = vadd.s32 %v2046, 128
        %v2048 = vadd.s32 %v2046, 256
        %v2049 = vadd.s32 %v2046, 384
        %v2050 = vadd.s32 %v2046, 512
        %v2051 = vadd.s32 %v2046, 640
        %v2052 = vadd.s32 %v2046, 768
        %v2053 = vadd.s32 %v2046, 896
        %v2054 = vcvt.s32.f32 %v2046
        %v2055 = vcvt.s32.f32 %v2047
        %v2056 = vcvt.s32.f32 %v2048
        %v2057 = vcvt.s32.f32 %v2049
        %v2058 = vcvt.s32.f32 %v2050
        %v2059 = vcvt.s32.f32 %v2051
        %v2060 = vcvt.s32.f32 %v2052
        %v2061 = vcvt.s32.f32 %v2053
        %vm2062 = vcmp.le.f32.partialorder %v1773, %v1909
        %vm2063 = vcmp.le.f32.partialorder %v1774, %v1909
        %vm2064 = vcmp.le.f32.partialorder %v1775, %v1909
        %vm2065 = vcmp.le.f32.partialorder %v1776, %v1909
        %vm2066 = vcmp.le.f32.partialorder %v1777, %v1909
        %vm2067 = vcmp.le.f32.partialorder %v1778, %v1909
        %vm2068 = vcmp.le.f32.partialorder %v1779, %v1909
        %vm2069 = vcmp.le.f32.partialorder %v1780, %v1909
        %vm2070 = vcmp.le.f32.partialorder %v1781, %v1918
        %vm2071 = vcmp.le.f32.partialorder %v1782, %v1918
        %vm2072 = vcmp.le.f32.partialorder %v1783, %v1918
        %vm2073 = vcmp.le.f32.partialorder %v1784, %v1918
        %vm2074 = vcmp.le.f32.partialorder %v1785, %v1918
        %vm2075 = vcmp.le.f32.partialorder %v1786, %v1918
        %vm2076 = vcmp.le.f32.partialorder %v1787, %v1918
        %vm2077 = vcmp.le.f32.partialorder %v1788, %v1918
        %vm2078 = vcmp.le.f32.partialorder %v1789, %v1927
        %vm2079 = vcmp.le.f32.partialorder %v1790, %v1927
        %vm2080 = vcmp.le.f32.partialorder %v1791, %v1927
        %vm2081 = vcmp.le.f32.partialorder %v1792, %v1927
        %vm2082 = vcmp.le.f32.partialorder %v1793, %v1927
        %vm2083 = vcmp.le.f32.partialorder %v1794, %v1927
        %vm2084 = vcmp.le.f32.partialorder %v1795, %v1927
        %vm2085 = vcmp.le.f32.partialorder %v1796, %v1927
        %vm2086 = vcmp.le.f32.partialorder %v1797, %v1936
        %vm2087 = vcmp.le.f32.partialorder %v1798, %v1936
        %vm2088 = vcmp.le.f32.partialorder %v1799, %v1936
        %vm2089 = vcmp.le.f32.partialorder %v1800, %v1936
        %vm2090 = vcmp.le.f32.partialorder %v1801, %v1936
        %vm2091 = vcmp.le.f32.partialorder %v1802, %v1936
        %vm2092 = vcmp.le.f32.partialorder %v1803, %v1936
        %vm2093 = vcmp.le.f32.partialorder %v1804, %v1936
        %vm2094 = vcmp.le.f32.partialorder %v1805, %v1945
        %vm2095 = vcmp.le.f32.partialorder %v1806, %v1945
        %vm2096 = vcmp.le.f32.partialorder %v1807, %v1945
        %vm2097 = vcmp.le.f32.partialorder %v1808, %v1945
        %vm2098 = vcmp.le.f32.partialorder %v1809, %v1945
        %vm2099 = vcmp.le.f32.partialorder %v1810, %v1945
        %vm2100 = vcmp.le.f32.partialorder %v1811, %v1945
        %vm2101 = vcmp.le.f32.partialorder %v1812, %v1945
        %vm2102 = vcmp.le.f32.partialorder %v1813, %v1954
        %vm2103 = vcmp.le.f32.partialorder %v1814, %v1954
        %vm2104 = vcmp.le.f32.partialorder %v1815, %v1954
        %vm2105 = vcmp.le.f32.partialorder %v1816, %v1954
        %vm2106 = vcmp.le.f32.partialorder %v1817, %v1954
        %vm2107 = vcmp.le.f32.partialorder %v1818, %v1954
        %vm2108 = vcmp.le.f32.partialorder %v1819, %v1954
        %vm2109 = vcmp.le.f32.partialorder %v1820, %v1954
        %vm2110 = vcmp.le.f32.partialorder %v1821, %v1963
        %vm2111 = vcmp.le.f32.partialorder %v1822, %v1963
        %vm2112 = vcmp.le.f32.partialorder %v1823, %v1963
        %vm2113 = vcmp.le.f32.partialorder %v1824, %v1963
        %vm2114 = vcmp.le.f32.partialorder %v1825, %v1963
        %vm2115 = vcmp.le.f32.partialorder %v1826, %v1963
        %vm2116 = vcmp.le.f32.partialorder %v1827, %v1963
        %vm2117 = vcmp.le.f32.partialorder %v1828, %v1963
        %vm2118 = vcmp.le.f32.partialorder %v1829, %v1972
        %vm2119 = vcmp.le.f32.partialorder %v1830, %v1972
        %vm2120 = vcmp.le.f32.partialorder %v1831, %v1972
        %vm2121 = vcmp.le.f32.partialorder %v1832, %v1972
        %vm2122 = vcmp.le.f32.partialorder %v1833, %v1972
        %vm2123 = vcmp.le.f32.partialorder %v1834, %v1972
        %vm2124 = vcmp.le.f32.partialorder %v1835, %v1972
        %vm2125 = vcmp.le.f32.partialorder %v1836, %v1972
        %vm2126 = vcmp.le.f32.partialorder %v1837, %v1981
        %vm2127 = vcmp.le.f32.partialorder %v1838, %v1981
        %vm2128 = vcmp.le.f32.partialorder %v1839, %v1981
        %vm2129 = vcmp.le.f32.partialorder %v1840, %v1981
        %vm2130 = vcmp.le.f32.partialorder %v1841, %v1981
        %vm2131 = vcmp.le.f32.partialorder %v1842, %v1981
        %vm2132 = vcmp.le.f32.partialorder %v1843, %v1981
        %vm2133 = vcmp.le.f32.partialorder %v1844, %v1981
        %vm2134 = vcmp.le.f32.partialorder %v1845, %v1990
        %vm2135 = vcmp.le.f32.partialorder %v1846, %v1990
        %vm2136 = vcmp.le.f32.partialorder %v1847, %v1990
        %vm2137 = vcmp.le.f32.partialorder %v1848, %v1990
        %vm2138 = vcmp.le.f32.partialorder %v1849, %v1990
        %vm2139 = vcmp.le.f32.partialorder %v1850, %v1990
        %vm2140 = vcmp.le.f32.partialorder %v1851, %v1990
        %vm2141 = vcmp.le.f32.partialorder %v1852, %v1990
        %vm2142 = vcmp.le.f32.partialorder %v1853, %v1999
        %vm2143 = vcmp.le.f32.partialorder %v1854, %v1999
        %vm2144 = vcmp.le.f32.partialorder %v1855, %v1999
        %vm2145 = vcmp.le.f32.partialorder %v1856, %v1999
        %vm2146 = vcmp.le.f32.partialorder %v1857, %v1999
        %vm2147 = vcmp.le.f32.partialorder %v1858, %v1999
        %vm2148 = vcmp.le.f32.partialorder %v1859, %v1999
        %vm2149 = vcmp.le.f32.partialorder %v1860, %v1999
        %vm2150 = vcmp.le.f32.partialorder %v1861, %v2008
        %vm2151 = vcmp.le.f32.partialorder %v1862, %v2008
        %vm2152 = vcmp.le.f32.partialorder %v1863, %v2008
        %vm2153 = vcmp.le.f32.partialorder %v1864, %v2008
        %vm2154 = vcmp.le.f32.partialorder %v1865, %v2008
        %vm2155 = vcmp.le.f32.partialorder %v1866, %v2008
        %vm2156 = vcmp.le.f32.partialorder %v1867, %v2008
        %vm2157 = vcmp.le.f32.partialorder %v1868, %v2008
        %vm2158 = vcmp.le.f32.partialorder %v1869, %v2017
        %vm2159 = vcmp.le.f32.partialorder %v1870, %v2017
        %vm2160 = vcmp.le.f32.partialorder %v1871, %v2017
        %vm2161 = vcmp.le.f32.partialorder %v1872, %v2017
        %vm2162 = vcmp.le.f32.partialorder %v1873, %v2017
        %vm2163 = vcmp.le.f32.partialorder %v1874, %v2017
        %vm2164 = vcmp.le.f32.partialorder %v1875, %v2017
        %vm2165 = vcmp.le.f32.partialorder %v1876, %v2017
        %vm2166 = vcmp.le.f32.partialorder %v1877, %v2026
        %vm2167 = vcmp.le.f32.partialorder %v1878, %v2026
        %vm2168 = vcmp.le.f32.partialorder %v1879, %v2026
        %vm2169 = vcmp.le.f32.partialorder %v1880, %v2026
        %vm2170 = vcmp.le.f32.partialorder %v1881, %v2026
        %vm2171 = vcmp.le.f32.partialorder %v1882, %v2026
        %vm2172 = vcmp.le.f32.partialorder %v1883, %v2026
        %vm2173 = vcmp.le.f32.partialorder %v1884, %v2026
        %vm2174 = vcmp.le.f32.partialorder %v1885, %v2035
        %vm2175 = vcmp.le.f32.partialorder %v1886, %v2035
        %vm2176 = vcmp.le.f32.partialorder %v1887, %v2035
        %vm2177 = vcmp.le.f32.partialorder %v1888, %v2035
        %vm2178 = vcmp.le.f32.partialorder %v1889, %v2035
        %vm2179 = vcmp.le.f32.partialorder %v1890, %v2035
        %vm2180 = vcmp.le.f32.partialorder %v1891, %v2035
        %vm2181 = vcmp.le.f32.partialorder %v1892, %v2035
        %vm2182 = vcmp.le.f32.partialorder %v1893, %v2044
        %vm2183 = vcmp.le.f32.partialorder %v1894, %v2044
        %vm2184 = vcmp.le.f32.partialorder %v1895, %v2044
        %vm2185 = vcmp.le.f32.partialorder %v1896, %v2044
        %vm2186 = vcmp.le.f32.partialorder %v1897, %v2044
        %vm2187 = vcmp.le.f32.partialorder %v1898, %v2044
        %vm2188 = vcmp.le.f32.partialorder %v1899, %v2044
        %vm2189 = vcmp.le.f32.partialorder %v1900, %v2044
        %v2190 = vsel %vm2062, %v2054, 1024.0
        %v2191 = vsel %vm2063, %v2055, 1024.0
        %v2192 = vsel %vm2064, %v2056, 1024.0
        %v2193 = vsel %vm2065, %v2057, 1024.0
        %v2194 = vsel %vm2066, %v2058, 1024.0
        %v2195 = vsel %vm2067, %v2059, 1024.0
        %v2196 = vsel %vm2068, %v2060, 1024.0
        %v2197 = vsel %vm2069, %v2061, 1024.0
        %v2198 = vsel %vm2070, %v2054, 1024.0
        %v2199 = vsel %vm2071, %v2055, 1024.0
        %v2200 = vsel %vm2072, %v2056, 1024.0
        %v2201 = vsel %vm2073, %v2057, 1024.0
        %v2202 = vsel %vm2074, %v2058, 1024.0
        %v2203 = vsel %vm2075, %v2059, 1024.0
        %v2204 = vsel %vm2076, %v2060, 1024.0
        %v2205 = vsel %vm2077, %v2061, 1024.0
        %v2206 = vsel %vm2078, %v2054, 1024.0
        %v2207 = vsel %vm2079, %v2055, 1024.0
        %v2208 = vsel %vm2080, %v2056, 1024.0
        %v2209 = vsel %vm2081, %v2057, 1024.0
        %v2210 = vsel %vm2082, %v2058, 1024.0
        %v2211 = vsel %vm2083, %v2059, 1024.0
        %v2212 = vsel %vm2084, %v2060, 1024.0
        %v2213 = vsel %vm2085, %v2061, 1024.0
        %v2214 = vsel %vm2086, %v2054, 1024.0
        %v2215 = vsel %vm2087, %v2055, 1024.0
        %v2216 = vsel %vm2088, %v2056, 1024.0
        %v2217 = vsel %vm2089, %v2057, 1024.0
        %v2218 = vsel %vm2090, %v2058, 1024.0
        %v2219 = vsel %vm2091, %v2059, 1024.0
        %v2220 = vsel %vm2092, %v2060, 1024.0
        %v2221 = vsel %vm2093, %v2061, 1024.0
        %v2222 = vsel %vm2094, %v2054, 1024.0
        %v2223 = vsel %vm2095, %v2055, 1024.0
        %v2224 = vsel %vm2096, %v2056, 1024.0
        %v2225 = vsel %vm2097, %v2057, 1024.0
        %v2226 = vsel %vm2098, %v2058, 1024.0
        %v2227 = vsel %vm2099, %v2059, 1024.0
        %v2228 = vsel %vm2100, %v2060, 1024.0
        %v2229 = vsel %vm2101, %v2061, 1024.0
        %v2230 = vsel %vm2102, %v2054, 1024.0
        %v2231 = vsel %vm2103, %v2055, 1024.0
        %v2232 = vsel %vm2104, %v2056, 1024.0
        %v2233 = vsel %vm2105, %v2057, 1024.0
        %v2234 = vsel %vm2106, %v2058, 1024.0
        %v2235 = vsel %vm2107, %v2059, 1024.0
        %v2236 = vsel %vm2108, %v2060, 1024.0
        %v2237 = vsel %vm2109, %v2061, 1024.0
        %v2238 = vsel %vm2110, %v2054, 1024.0
        %v2239 = vsel %vm2111, %v2055, 1024.0
        %v2240 = vsel %vm2112, %v2056, 1024.0
        %v2241 = vsel %vm2113, %v2057, 1024.0
        %v2242 = vsel %vm2114, %v2058, 1024.0
        %v2243 = vsel %vm2115, %v2059, 1024.0
        %v2244 = vsel %vm2116, %v2060, 1024.0
        %v2245 = vsel %vm2117, %v2061, 1024.0
        %v2246 = vsel %vm2118, %v2054, 1024.0
        %v2247 = vsel %vm2119, %v2055, 1024.0
        %v2248 = vsel %vm2120, %v2056, 1024.0
        %v2249 = vsel %vm2121, %v2057, 1024.0
        %v2250 = vsel %vm2122, %v2058, 1024.0
        %v2251 = vsel %vm2123, %v2059, 1024.0
        %v2252 = vsel %vm2124, %v2060, 1024.0
        %v2253 = vsel %vm2125, %v2061, 1024.0
        %v2254 = vsel %vm2126, %v2054, 1024.0
        %v2255 = vsel %vm2127, %v2055, 1024.0
        %v2256 = vsel %vm2128, %v2056, 1024.0
        %v2257 = vsel %vm2129, %v2057, 1024.0
        %v2258 = vsel %vm2130, %v2058, 1024.0
        %v2259 = vsel %vm2131, %v2059, 1024.0
        %v2260 = vsel %vm2132, %v2060, 1024.0
        %v2261 = vsel %vm2133, %v2061, 1024.0
        %v2262 = vsel %vm2134, %v2054, 1024.0
        %v2263 = vsel %vm2135, %v2055, 1024.0
        %v2264 = vsel %vm2136, %v2056, 1024.0
        %v2265 = vsel %vm2137, %v2057, 1024.0
        %v2266 = vsel %vm2138, %v2058, 1024.0
        %v2267 = vsel %vm2139, %v2059, 1024.0
        %v2268 = vsel %vm2140, %v2060, 1024.0
        %v2269 = vsel %vm2141, %v2061, 1024.0
        %v2270 = vsel %vm2142, %v2054, 1024.0
        %v2271 = vsel %vm2143, %v2055, 1024.0
        %v2272 = vsel %vm2144, %v2056, 1024.0
        %v2273 = vsel %vm2145, %v2057, 1024.0
        %v2274 = vsel %vm2146, %v2058, 1024.0
        %v2275 = vsel %vm2147, %v2059, 1024.0
        %v2276 = vsel %vm2148, %v2060, 1024.0
        %v2277 = vsel %vm2149, %v2061, 1024.0
        %v2278 = vsel %vm2150, %v2054, 1024.0
        %v2279 = vsel %vm2151, %v2055, 1024.0
        %v2280 = vsel %vm2152, %v2056, 1024.0
        %v2281 = vsel %vm2153, %v2057, 1024.0
        %v2282 = vsel %vm2154, %v2058, 1024.0
        %v2283 = vsel %vm2155, %v2059, 1024.0
        %v2284 = vsel %vm2156, %v2060, 1024.0
        %v2285 = vsel %vm2157, %v2061, 1024.0
        %v2286 = vsel %vm2158, %v2054, 1024.0
        %v2287 = vsel %vm2159, %v2055, 1024.0
        %v2288 = vsel %vm2160, %v2056, 1024.0
        %v2289 = vsel %vm2161, %v2057, 1024.0
        %v2290 = vsel %vm2162, %v2058, 1024.0
        %v2291 = vsel %vm2163, %v2059, 1024.0
        %v2292 = vsel %vm2164, %v2060, 1024.0
        %v2293 = vsel %vm2165, %v2061, 1024.0
        %v2294 = vsel %vm2166, %v2054, 1024.0
        %v2295 = vsel %vm2167, %v2055, 1024.0
        %v2296 = vsel %vm2168, %v2056, 1024.0
        %v2297 = vsel %vm2169, %v2057, 1024.0
        %v2298 = vsel %vm2170, %v2058, 1024.0
        %v2299 = vsel %vm2171, %v2059, 1024.0
        %v2300 = vsel %vm2172, %v2060, 1024.0
        %v2301 = vsel %vm2173, %v2061, 1024.0
        %v2302 = vsel %vm2174, %v2054, 1024.0
        %v2303 = vsel %vm2175, %v2055, 1024.0
        %v2304 = vsel %vm2176, %v2056, 1024.0
        %v2305 = vsel %vm2177, %v2057, 1024.0
        %v2306 = vsel %vm2178, %v2058, 1024.0
        %v2307 = vsel %vm2179, %v2059, 1024.0
        %v2308 = vsel %vm2180, %v2060, 1024.0
        %v2309 = vsel %vm2181, %v2061, 1024.0
        %v2310 = vsel %vm2182, %v2054, 1024.0
        %v2311 = vsel %vm2183, %v2055, 1024.0
        %v2312 = vsel %vm2184, %v2056, 1024.0
        %v2313 = vsel %vm2185, %v2057, 1024.0
        %v2314 = vsel %vm2186, %v2058, 1024.0
        %v2315 = vsel %vm2187, %v2059, 1024.0
        %v2316 = vsel %vm2188, %v2060, 1024.0
        %v2317 = vsel %vm2189, %v2061, 1024.0
        %v2318 = vmin.f32 %v2190, %v2191
        %v2319 = vmin.f32 %v2318, %v2192
        %v2320 = vmin.f32 %v2319, %v2193
        %v2321 = vmin.f32 %v2320, %v2194
        %v2322 = vmin.f32 %v2321, %v2195
        %v2323 = vmin.f32 %v2322, %v2196
        %v2324 = vmin.f32 %v2323, %v2197
        %2325 = vmin.xlane.f32.xlu0 %v2324
        %v2326 = vpop.xlane.xlu0 %2325
        %v2327 = vmin.f32 %v2198, %v2199
        %v2328 = vmin.f32 %v2327, %v2200
        %v2329 = vmin.f32 %v2328, %v2201
        %v2330 = vmin.f32 %v2329, %v2202
        %v2331 = vmin.f32 %v2330, %v2203
        %v2332 = vmin.f32 %v2331, %v2204
        %v2333 = vmin.f32 %v2332, %v2205
        %2334 = vmin.xlane.f32.xlu0 %v2333
        %v2335 = vpop.xlane.xlu0 %2334
        %v2336 = vmin.f32 %v2206, %v2207
        %v2337 = vmin.f32 %v2336, %v2208
        %v2338 = vmin.f32 %v2337, %v2209
        %v2339 = vmin.f32 %v2338, %v2210
        %v2340 = vmin.f32 %v2339, %v2211
        %v2341 = vmin.f32 %v2340, %v2212
        %v2342 = vmin.f32 %v2341, %v2213
        %2343 = vmin.xlane.f32.xlu0 %v2342
        %v2344 = vpop.xlane.xlu0 %2343
        %v2345 = vmin.f32 %v2214, %v2215
        %v2346 = vmin.f32 %v2345, %v2216
        %v2347 = vmin.f32 %v2346, %v2217
        %v2348 = vmin.f32 %v2347, %v2218
        %v2349 = vmin.f32 %v2348, %v2219
        %v2350 = vmin.f32 %v2349, %v2220
        %v2351 = vmin.f32 %v2350, %v2221
        %2352 = vmin.xlane.f32.xlu0 %v2351
        %v2353 = vpop.xlane.xlu0 %2352
        %v2354 = vmin.f32 %v2222, %v2223
        %v2355 = vmin.f32 %v2354, %v2224
        %v2356 = vmin.f32 %v2355, %v2225
        %v2357 = vmin.f32 %v2356, %v2226
        %v2358 = vmin.f32 %v2357, %v2227
        %v2359 = vmin.f32 %v2358, %v2228
        %v2360 = vmin.f32 %v2359, %v2229
        %2361 = vmin.xlane.f32.xlu0 %v2360
        %v2362 = vpop.xlane.xlu0 %2361
        %v2363 = vmin.f32 %v2230, %v2231
        %v2364 = vmin.f32 %v2363, %v2232
        %v2365 = vmin.f32 %v2364, %v2233
        %v2366 = vmin.f32 %v2365, %v2234
        %v2367 = vmin.f32 %v2366, %v2235
        %v2368 = vmin.f32 %v2367, %v2236
        %v2369 = vmin.f32 %v2368, %v2237
        %2370 = vmin.xlane.f32.xlu0 %v2369
        %v2371 = vpop.xlane.xlu0 %2370
        %v2372 = vmin.f32 %v2238, %v2239
        %v2373 = vmin.f32 %v2372, %v2240
        %v2374 = vmin.f32 %v2373, %v2241
        %v2375 = vmin.f32 %v2374, %v2242
        %v2376 = vmin.f32 %v2375, %v2243
        %v2377 = vmin.f32 %v2376, %v2244
        %v2378 = vmin.f32 %v2377, %v2245
        %2379 = vmin.xlane.f32.xlu0 %v2378
        %v2380 = vpop.xlane.xlu0 %2379
        %v2381 = vmin.f32 %v2246, %v2247
        %v2382 = vmin.f32 %v2381, %v2248
        %v2383 = vmin.f32 %v2382, %v2249
        %v2384 = vmin.f32 %v2383, %v2250
        %v2385 = vmin.f32 %v2384, %v2251
        %v2386 = vmin.f32 %v2385, %v2252
        %v2387 = vmin.f32 %v2386, %v2253
        %2388 = vmin.xlane.f32.xlu0 %v2387
        %v2389 = vpop.xlane.xlu0 %2388
        %v2390 = vmin.f32 %v2254, %v2255
        %v2391 = vmin.f32 %v2390, %v2256
        %v2392 = vmin.f32 %v2391, %v2257
        %v2393 = vmin.f32 %v2392, %v2258
        %v2394 = vmin.f32 %v2393, %v2259
        %v2395 = vmin.f32 %v2394, %v2260
        %v2396 = vmin.f32 %v2395, %v2261
        %2397 = vmin.xlane.f32.xlu0 %v2396
        %v2398 = vpop.xlane.xlu0 %2397
        %v2399 = vmin.f32 %v2262, %v2263
        %v2400 = vmin.f32 %v2399, %v2264
        %v2401 = vmin.f32 %v2400, %v2265
        %v2402 = vmin.f32 %v2401, %v2266
        %v2403 = vmin.f32 %v2402, %v2267
        %v2404 = vmin.f32 %v2403, %v2268
        %v2405 = vmin.f32 %v2404, %v2269
        %2406 = vmin.xlane.f32.xlu0 %v2405
        %v2407 = vpop.xlane.xlu0 %2406
        %v2408 = vmin.f32 %v2270, %v2271
        %v2409 = vmin.f32 %v2408, %v2272
        %v2410 = vmin.f32 %v2409, %v2273
        %v2411 = vmin.f32 %v2410, %v2274
        %v2412 = vmin.f32 %v2411, %v2275
        %v2413 = vmin.f32 %v2412, %v2276
        %v2414 = vmin.f32 %v2413, %v2277
        %2415 = vmin.xlane.f32.xlu0 %v2414
        %v2416 = vpop.xlane.xlu0 %2415
        %v2417 = vmin.f32 %v2278, %v2279
        %v2418 = vmin.f32 %v2417, %v2280
        %v2419 = vmin.f32 %v2418, %v2281
        %v2420 = vmin.f32 %v2419, %v2282
        %v2421 = vmin.f32 %v2420, %v2283
        %v2422 = vmin.f32 %v2421, %v2284
        %v2423 = vmin.f32 %v2422, %v2285
        %2424 = vmin.xlane.f32.xlu0 %v2423
        %v2425 = vpop.xlane.xlu0 %2424
        %v2426 = vmin.f32 %v2286, %v2287
        %v2427 = vmin.f32 %v2426, %v2288
        %v2428 = vmin.f32 %v2427, %v2289
        %v2429 = vmin.f32 %v2428, %v2290
        %v2430 = vmin.f32 %v2429, %v2291
        %v2431 = vmin.f32 %v2430, %v2292
        %v2432 = vmin.f32 %v2431, %v2293
        %2433 = vmin.xlane.f32.xlu0 %v2432
        %v2434 = vpop.xlane.xlu0 %2433
        %v2435 = vmin.f32 %v2294, %v2295
        %v2436 = vmin.f32 %v2435, %v2296
        %v2437 = vmin.f32 %v2436, %v2297
        %v2438 = vmin.f32 %v2437, %v2298
        %v2439 = vmin.f32 %v2438, %v2299
        %v2440 = vmin.f32 %v2439, %v2300
        %v2441 = vmin.f32 %v2440, %v2301
        %2442 = vmin.xlane.f32.xlu0 %v2441
        %v2443 = vpop.xlane.xlu0 %2442
        %v2444 = vmin.f32 %v2302, %v2303
        %v2445 = vmin.f32 %v2444, %v2304
        %v2446 = vmin.f32 %v2445, %v2305
        %v2447 = vmin.f32 %v2446, %v2306
        %v2448 = vmin.f32 %v2447, %v2307
        %v2449 = vmin.f32 %v2448, %v2308
        %v2450 = vmin.f32 %v2449, %v2309
        %2451 = vmin.xlane.f32.xlu0 %v2450
        %v2452 = vpop.xlane.xlu0 %2451
        %v2453 = vmin.f32 %v2310, %v2311
        %v2454 = vmin.f32 %v2453, %v2312
        %v2455 = vmin.f32 %v2454, %v2313
        %v2456 = vmin.f32 %v2455, %v2314
        %v2457 = vmin.f32 %v2456, %v2315
        %v2458 = vmin.f32 %v2457, %v2316
        %v2459 = vmin.f32 %v2458, %v2317
        %2460 = vmin.xlane.f32.xlu0 %v2459
        %v2461 = vpop.xlane.xlu0 %2460
        %vm2462 = vcmp.eq.f32.partialorder %v2054, %v2326
        %vm2463 = vcmp.eq.f32.partialorder %v2055, %v2326
        %vm2464 = vcmp.eq.f32.partialorder %v2056, %v2326
        %vm2465 = vcmp.eq.f32.partialorder %v2057, %v2326
        %vm2466 = vcmp.eq.f32.partialorder %v2058, %v2326
        %vm2467 = vcmp.eq.f32.partialorder %v2059, %v2326
        %vm2468 = vcmp.eq.f32.partialorder %v2060, %v2326
        %vm2469 = vcmp.eq.f32.partialorder %v2061, %v2326
        %vm2470 = vcmp.eq.f32.partialorder %v2054, %v2335
        %vm2471 = vcmp.eq.f32.partialorder %v2055, %v2335
        %vm2472 = vcmp.eq.f32.partialorder %v2056, %v2335
        %vm2473 = vcmp.eq.f32.partialorder %v2057, %v2335
        %vm2474 = vcmp.eq.f32.partialorder %v2058, %v2335
        %vm2475 = vcmp.eq.f32.partialorder %v2059, %v2335
        %vm2476 = vcmp.eq.f32.partialorder %v2060, %v2335
        %vm2477 = vcmp.eq.f32.partialorder %v2061, %v2335
        %vm2478 = vcmp.eq.f32.partialorder %v2054, %v2344
        %vm2479 = vcmp.eq.f32.partialorder %v2055, %v2344
        %vm2480 = vcmp.eq.f32.partialorder %v2056, %v2344
        %vm2481 = vcmp.eq.f32.partialorder %v2057, %v2344
        %vm2482 = vcmp.eq.f32.partialorder %v2058, %v2344
        %vm2483 = vcmp.eq.f32.partialorder %v2059, %v2344
        %vm2484 = vcmp.eq.f32.partialorder %v2060, %v2344
        %vm2485 = vcmp.eq.f32.partialorder %v2061, %v2344
        %vm2486 = vcmp.eq.f32.partialorder %v2054, %v2353
        %vm2487 = vcmp.eq.f32.partialorder %v2055, %v2353
        %vm2488 = vcmp.eq.f32.partialorder %v2056, %v2353
        %vm2489 = vcmp.eq.f32.partialorder %v2057, %v2353
        %vm2490 = vcmp.eq.f32.partialorder %v2058, %v2353
        %vm2491 = vcmp.eq.f32.partialorder %v2059, %v2353
        %vm2492 = vcmp.eq.f32.partialorder %v2060, %v2353
        %vm2493 = vcmp.eq.f32.partialorder %v2061, %v2353
        %vm2494 = vcmp.eq.f32.partialorder %v2054, %v2362
        %vm2495 = vcmp.eq.f32.partialorder %v2055, %v2362
        %vm2496 = vcmp.eq.f32.partialorder %v2056, %v2362
        %vm2497 = vcmp.eq.f32.partialorder %v2057, %v2362
        %vm2498 = vcmp.eq.f32.partialorder %v2058, %v2362
        %vm2499 = vcmp.eq.f32.partialorder %v2059, %v2362
        %vm2500 = vcmp.eq.f32.partialorder %v2060, %v2362
        %vm2501 = vcmp.eq.f32.partialorder %v2061, %v2362
        %vm2502 = vcmp.eq.f32.partialorder %v2054, %v2371
        %vm2503 = vcmp.eq.f32.partialorder %v2055, %v2371
        %vm2504 = vcmp.eq.f32.partialorder %v2056, %v2371
        %vm2505 = vcmp.eq.f32.partialorder %v2057, %v2371
        %vm2506 = vcmp.eq.f32.partialorder %v2058, %v2371
        %vm2507 = vcmp.eq.f32.partialorder %v2059, %v2371
        %vm2508 = vcmp.eq.f32.partialorder %v2060, %v2371
        %vm2509 = vcmp.eq.f32.partialorder %v2061, %v2371
        %vm2510 = vcmp.eq.f32.partialorder %v2054, %v2380
        %vm2511 = vcmp.eq.f32.partialorder %v2055, %v2380
        %vm2512 = vcmp.eq.f32.partialorder %v2056, %v2380
        %vm2513 = vcmp.eq.f32.partialorder %v2057, %v2380
        %vm2514 = vcmp.eq.f32.partialorder %v2058, %v2380
        %vm2515 = vcmp.eq.f32.partialorder %v2059, %v2380
        %vm2516 = vcmp.eq.f32.partialorder %v2060, %v2380
        %vm2517 = vcmp.eq.f32.partialorder %v2061, %v2380
        %vm2518 = vcmp.eq.f32.partialorder %v2054, %v2389
        %vm2519 = vcmp.eq.f32.partialorder %v2055, %v2389
        %vm2520 = vcmp.eq.f32.partialorder %v2056, %v2389
        %vm2521 = vcmp.eq.f32.partialorder %v2057, %v2389
        %vm2522 = vcmp.eq.f32.partialorder %v2058, %v2389
        %vm2523 = vcmp.eq.f32.partialorder %v2059, %v2389
        %vm2524 = vcmp.eq.f32.partialorder %v2060, %v2389
        %vm2525 = vcmp.eq.f32.partialorder %v2061, %v2389
        %vm2526 = vcmp.eq.f32.partialorder %v2054, %v2398
        %vm2527 = vcmp.eq.f32.partialorder %v2055, %v2398
        %vm2528 = vcmp.eq.f32.partialorder %v2056, %v2398
        %vm2529 = vcmp.eq.f32.partialorder %v2057, %v2398
        %vm2530 = vcmp.eq.f32.partialorder %v2058, %v2398
        %vm2531 = vcmp.eq.f32.partialorder %v2059, %v2398
        %vm2532 = vcmp.eq.f32.partialorder %v2060, %v2398
        %vm2533 = vcmp.eq.f32.partialorder %v2061, %v2398
        %vm2534 = vcmp.eq.f32.partialorder %v2054, %v2407
        %vm2535 = vcmp.eq.f32.partialorder %v2055, %v2407
        %vm2536 = vcmp.eq.f32.partialorder %v2056, %v2407
        %vm2537 = vcmp.eq.f32.partialorder %v2057, %v2407
        %vm2538 = vcmp.eq.f32.partialorder %v2058, %v2407
        %vm2539 = vcmp.eq.f32.partialorder %v2059, %v2407
        %vm2540 = vcmp.eq.f32.partialorder %v2060, %v2407
        %vm2541 = vcmp.eq.f32.partialorder %v2061, %v2407
        %vm2542 = vcmp.eq.f32.partialorder %v2054, %v2416
        %vm2543 = vcmp.eq.f32.partialorder %v2055, %v2416
        %vm2544 = vcmp.eq.f32.partialorder %v2056, %v2416
        %vm2545 = vcmp.eq.f32.partialorder %v2057, %v2416
        %vm2546 = vcmp.eq.f32.partialorder %v2058, %v2416
        %vm2547 = vcmp.eq.f32.partialorder %v2059, %v2416
        %vm2548 = vcmp.eq.f32.partialorder %v2060, %v2416
        %vm2549 = vcmp.eq.f32.partialorder %v2061, %v2416
        %vm2550 = vcmp.eq.f32.partialorder %v2054, %v2425
        %vm2551 = vcmp.eq.f32.partialorder %v2055, %v2425
        %vm2552 = vcmp.eq.f32.partialorder %v2056, %v2425
        %vm2553 = vcmp.eq.f32.partialorder %v2057, %v2425
        %vm2554 = vcmp.eq.f32.partialorder %v2058, %v2425
        %vm2555 = vcmp.eq.f32.partialorder %v2059, %v2425
        %vm2556 = vcmp.eq.f32.partialorder %v2060, %v2425
        %vm2557 = vcmp.eq.f32.partialorder %v2061, %v2425
        %vm2558 = vcmp.eq.f32.partialorder %v2054, %v2434
        %vm2559 = vcmp.eq.f32.partialorder %v2055, %v2434
        %vm2560 = vcmp.eq.f32.partialorder %v2056, %v2434
        %vm2561 = vcmp.eq.f32.partialorder %v2057, %v2434
        %vm2562 = vcmp.eq.f32.partialorder %v2058, %v2434
        %vm2563 = vcmp.eq.f32.partialorder %v2059, %v2434
        %vm2564 = vcmp.eq.f32.partialorder %v2060, %v2434
        %vm2565 = vcmp.eq.f32.partialorder %v2061, %v2434
        %vm2566 = vcmp.eq.f32.partialorder %v2054, %v2443
        %vm2567 = vcmp.eq.f32.partialorder %v2055, %v2443
        %vm2568 = vcmp.eq.f32.partialorder %v2056, %v2443
        %vm2569 = vcmp.eq.f32.partialorder %v2057, %v2443
        %vm2570 = vcmp.eq.f32.partialorder %v2058, %v2443
        %vm2571 = vcmp.eq.f32.partialorder %v2059, %v2443
        %vm2572 = vcmp.eq.f32.partialorder %v2060, %v2443
        %vm2573 = vcmp.eq.f32.partialorder %v2061, %v2443
        %vm2574 = vcmp.eq.f32.partialorder %v2054, %v2452
        %vm2575 = vcmp.eq.f32.partialorder %v2055, %v2452
        %vm2576 = vcmp.eq.f32.partialorder %v2056, %v2452
        %vm2577 = vcmp.eq.f32.partialorder %v2057, %v2452
        %vm2578 = vcmp.eq.f32.partialorder %v2058, %v2452
        %vm2579 = vcmp.eq.f32.partialorder %v2059, %v2452
        %vm2580 = vcmp.eq.f32.partialorder %v2060, %v2452
        %vm2581 = vcmp.eq.f32.partialorder %v2061, %v2452
        %vm2582 = vcmp.eq.f32.partialorder %v2054, %v2461
        %vm2583 = vcmp.eq.f32.partialorder %v2055, %v2461
        %vm2584 = vcmp.eq.f32.partialorder %v2056, %v2461
        %vm2585 = vcmp.eq.f32.partialorder %v2057, %v2461
        %vm2586 = vcmp.eq.f32.partialorder %v2058, %v2461
        %vm2587 = vcmp.eq.f32.partialorder %v2059, %v2461
        %vm2588 = vcmp.eq.f32.partialorder %v2060, %v2461
        %vm2589 = vcmp.eq.f32.partialorder %v2061, %v2461
        %v2590 = vsel %vm2462, 1, 0
        %v2591 = vsel %vm2463, 1, 0
        %v2592 = vsel %vm2464, 1, 0
        %v2593 = vsel %vm2465, 1, 0
        %v2594 = vsel %vm2466, 1, 0
        %v2595 = vsel %vm2467, 1, 0
        %v2596 = vsel %vm2468, 1, 0
        %v2597 = vsel %vm2469, 1, 0
        %v2598 = vsel %vm2470, 1, 0
        %v2599 = vsel %vm2471, 1, 0
        %v2600 = vsel %vm2472, 1, 0
        %v2601 = vsel %vm2473, 1, 0
        %v2602 = vsel %vm2474, 1, 0
        %v2603 = vsel %vm2475, 1, 0
        %v2604 = vsel %vm2476, 1, 0
        %v2605 = vsel %vm2477, 1, 0
        %v2606 = vsel %vm2478, 1, 0
        %v2607 = vsel %vm2479, 1, 0
        %v2608 = vsel %vm2480, 1, 0
        %v2609 = vsel %vm2481, 1, 0
        %v2610 = vsel %vm2482, 1, 0
        %v2611 = vsel %vm2483, 1, 0
        %v2612 = vsel %vm2484, 1, 0
        %v2613 = vsel %vm2485, 1, 0
        %v2614 = vsel %vm2486, 1, 0
        %v2615 = vsel %vm2487, 1, 0
        %v2616 = vsel %vm2488, 1, 0
        %v2617 = vsel %vm2489, 1, 0
        %v2618 = vsel %vm2490, 1, 0
        %v2619 = vsel %vm2491, 1, 0
        %v2620 = vsel %vm2492, 1, 0
        %v2621 = vsel %vm2493, 1, 0
        %v2622 = vsel %vm2494, 1, 0
        %v2623 = vsel %vm2495, 1, 0
        %v2624 = vsel %vm2496, 1, 0
        %v2625 = vsel %vm2497, 1, 0
        %v2626 = vsel %vm2498, 1, 0
        %v2627 = vsel %vm2499, 1, 0
        %v2628 = vsel %vm2500, 1, 0
        %v2629 = vsel %vm2501, 1, 0
        %v2630 = vsel %vm2502, 1, 0
        %v2631 = vsel %vm2503, 1, 0
        %v2632 = vsel %vm2504, 1, 0
        %v2633 = vsel %vm2505, 1, 0
        %v2634 = vsel %vm2506, 1, 0
        %v2635 = vsel %vm2507, 1, 0
        %v2636 = vsel %vm2508, 1, 0
        %v2637 = vsel %vm2509, 1, 0
        %v2638 = vsel %vm2510, 1, 0
        %v2639 = vsel %vm2511, 1, 0
        %v2640 = vsel %vm2512, 1, 0
        %v2641 = vsel %vm2513, 1, 0
        %v2642 = vsel %vm2514, 1, 0
        %v2643 = vsel %vm2515, 1, 0
        %v2644 = vsel %vm2516, 1, 0
        %v2645 = vsel %vm2517, 1, 0
        %v2646 = vsel %vm2518, 1, 0
        %v2647 = vsel %vm2519, 1, 0
        %v2648 = vsel %vm2520, 1, 0
        %v2649 = vsel %vm2521, 1, 0
        %v2650 = vsel %vm2522, 1, 0
        %v2651 = vsel %vm2523, 1, 0
        %v2652 = vsel %vm2524, 1, 0
        %v2653 = vsel %vm2525, 1, 0
        %v2654 = vsel %vm2526, 1, 0
        %v2655 = vsel %vm2527, 1, 0
        %v2656 = vsel %vm2528, 1, 0
        %v2657 = vsel %vm2529, 1, 0
        %v2658 = vsel %vm2530, 1, 0
        %v2659 = vsel %vm2531, 1, 0
        %v2660 = vsel %vm2532, 1, 0
        %v2661 = vsel %vm2533, 1, 0
        %v2662 = vsel %vm2534, 1, 0
        %v2663 = vsel %vm2535, 1, 0
        %v2664 = vsel %vm2536, 1, 0
        %v2665 = vsel %vm2537, 1, 0
        %v2666 = vsel %vm2538, 1, 0
        %v2667 = vsel %vm2539, 1, 0
        %v2668 = vsel %vm2540, 1, 0
        %v2669 = vsel %vm2541, 1, 0
        %v2670 = vsel %vm2542, 1, 0
        %v2671 = vsel %vm2543, 1, 0
        %v2672 = vsel %vm2544, 1, 0
        %v2673 = vsel %vm2545, 1, 0
        %v2674 = vsel %vm2546, 1, 0
        %v2675 = vsel %vm2547, 1, 0
        %v2676 = vsel %vm2548, 1, 0
        %v2677 = vsel %vm2549, 1, 0
        %v2678 = vsel %vm2550, 1, 0
        %v2679 = vsel %vm2551, 1, 0
        %v2680 = vsel %vm2552, 1, 0
        %v2681 = vsel %vm2553, 1, 0
        %v2682 = vsel %vm2554, 1, 0
        %v2683 = vsel %vm2555, 1, 0
        %v2684 = vsel %vm2556, 1, 0
        %v2685 = vsel %vm2557, 1, 0
        %v2686 = vsel %vm2558, 1, 0
        %v2687 = vsel %vm2559, 1, 0
        %v2688 = vsel %vm2560, 1, 0
        %v2689 = vsel %vm2561, 1, 0
        %v2690 = vsel %vm2562, 1, 0
        %v2691 = vsel %vm2563, 1, 0
        %v2692 = vsel %vm2564, 1, 0
        %v2693 = vsel %vm2565, 1, 0
        %v2694 = vsel %vm2566, 1, 0
        %v2695 = vsel %vm2567, 1, 0
        %v2696 = vsel %vm2568, 1, 0
        %v2697 = vsel %vm2569, 1, 0
        %v2698 = vsel %vm2570, 1, 0
        %v2699 = vsel %vm2571, 1, 0
        %v2700 = vsel %vm2572, 1, 0
        %v2701 = vsel %vm2573, 1, 0
        %v2702 = vsel %vm2574, 1, 0
        %v2703 = vsel %vm2575, 1, 0
        %v2704 = vsel %vm2576, 1, 0
        %v2705 = vsel %vm2577, 1, 0
        %v2706 = vsel %vm2578, 1, 0
        %v2707 = vsel %vm2579, 1, 0
        %v2708 = vsel %vm2580, 1, 0
        %v2709 = vsel %vm2581, 1, 0
        %v2710 = vsel %vm2582, 1, 0
        %v2711 = vsel %vm2583, 1, 0
        %v2712 = vsel %vm2584, 1, 0
        %v2713 = vsel %vm2585, 1, 0
        %v2714 = vsel %vm2586, 1, 0
        %v2715 = vsel %vm2587, 1, 0
        %v2716 = vsel %vm2588, 1, 0
        %v2717 = vsel %vm2589, 1, 0
        %v2718 = vcvt.s32.f32 %v2590
        %v2719 = vcvt.s32.f32 %v2591
        %v2720 = vcvt.s32.f32 %v2592
        %v2721 = vcvt.s32.f32 %v2593
        %v2722 = vcvt.s32.f32 %v2594
        %v2723 = vcvt.s32.f32 %v2595
        %v2724 = vcvt.s32.f32 %v2596
        %v2725 = vcvt.s32.f32 %v2597
        %v2726 = vcvt.s32.f32 %v2598
        %v2727 = vcvt.s32.f32 %v2599
        %v2728 = vcvt.s32.f32 %v2600
        %v2729 = vcvt.s32.f32 %v2601
        %v2730 = vcvt.s32.f32 %v2602
        %v2731 = vcvt.s32.f32 %v2603
        %v2732 = vcvt.s32.f32 %v2604
        %v2733 = vcvt.s32.f32 %v2605
        %v2734 = vcvt.s32.f32 %v2606
        %v2735 = vcvt.s32.f32 %v2607
        %v2736 = vcvt.s32.f32 %v2608
        %v2737 = vcvt.s32.f32 %v2609
        %v2738 = vcvt.s32.f32 %v2610
        %v2739 = vcvt.s32.f32 %v2611
        %v2740 = vcvt.s32.f32 %v2612
        %v2741 = vcvt.s32.f32 %v2613
        %v2742 = vcvt.s32.f32 %v2614
        %v2743 = vcvt.s32.f32 %v2615
        %v2744 = vcvt.s32.f32 %v2616
        %v2745 = vcvt.s32.f32 %v2617
        %v2746 = vcvt.s32.f32 %v2618
        %v2747 = vcvt.s32.f32 %v2619
        %v2748 = vcvt.s32.f32 %v2620
        %v2749 = vcvt.s32.f32 %v2621
        %v2750 = vcvt.s32.f32 %v2622
        %v2751 = vcvt.s32.f32 %v2623
        %v2752 = vcvt.s32.f32 %v2624
        %v2753 = vcvt.s32.f32 %v2625
        %v2754 = vcvt.s32.f32 %v2626
        %v2755 = vcvt.s32.f32 %v2627
        %v2756 = vcvt.s32.f32 %v2628
        %v2757 = vcvt.s32.f32 %v2629
        %v2758 = vcvt.s32.f32 %v2630
        %v2759 = vcvt.s32.f32 %v2631
        %v2760 = vcvt.s32.f32 %v2632
        %v2761 = vcvt.s32.f32 %v2633
        %v2762 = vcvt.s32.f32 %v2634
        %v2763 = vcvt.s32.f32 %v2635
        %v2764 = vcvt.s32.f32 %v2636
        %v2765 = vcvt.s32.f32 %v2637
        %v2766 = vcvt.s32.f32 %v2638
        %v2767 = vcvt.s32.f32 %v2639
        %v2768 = vcvt.s32.f32 %v2640
        %v2769 = vcvt.s32.f32 %v2641
        %v2770 = vcvt.s32.f32 %v2642
        %v2771 = vcvt.s32.f32 %v2643
        %v2772 = vcvt.s32.f32 %v2644
        %v2773 = vcvt.s32.f32 %v2645
        %v2774 = vcvt.s32.f32 %v2646
        %v2775 = vcvt.s32.f32 %v2647
        %v2776 = vcvt.s32.f32 %v2648
        %v2777 = vcvt.s32.f32 %v2649
        %v2778 = vcvt.s32.f32 %v2650
        %v2779 = vcvt.s32.f32 %v2651
        %v2780 = vcvt.s32.f32 %v2652
        %v2781 = vcvt.s32.f32 %v2653
        %v2782 = vcvt.s32.f32 %v2654
        %v2783 = vcvt.s32.f32 %v2655
        %v2784 = vcvt.s32.f32 %v2656
        %v2785 = vcvt.s32.f32 %v2657
        %v2786 = vcvt.s32.f32 %v2658
        %v2787 = vcvt.s32.f32 %v2659
        %v2788 = vcvt.s32.f32 %v2660
        %v2789 = vcvt.s32.f32 %v2661
        %v2790 = vcvt.s32.f32 %v2662
        %v2791 = vcvt.s32.f32 %v2663
        %v2792 = vcvt.s32.f32 %v2664
        %v2793 = vcvt.s32.f32 %v2665
        %v2794 = vcvt.s32.f32 %v2666
        %v2795 = vcvt.s32.f32 %v2667
        %v2796 = vcvt.s32.f32 %v2668
        %v2797 = vcvt.s32.f32 %v2669
        %v2798 = vcvt.s32.f32 %v2670
        %v2799 = vcvt.s32.f32 %v2671
        %v2800 = vcvt.s32.f32 %v2672
        %v2801 = vcvt.s32.f32 %v2673
        %v2802 = vcvt.s32.f32 %v2674
        %v2803 = vcvt.s32.f32 %v2675
        %v2804 = vcvt.s32.f32 %v2676
        %v2805 = vcvt.s32.f32 %v2677
        %v2806 = vcvt.s32.f32 %v2678
        %v2807 = vcvt.s32.f32 %v2679
        %v2808 = vcvt.s32.f32 %v2680
        %v2809 = vcvt.s32.f32 %v2681
        %v2810 = vcvt.s32.f32 %v2682
        %v2811 = vcvt.s32.f32 %v2683
        %v2812 = vcvt.s32.f32 %v2684
        %v2813 = vcvt.s32.f32 %v2685
        %v2814 = vcvt.s32.f32 %v2686
        %v2815 = vcvt.s32.f32 %v2687
        %v2816 = vcvt.s32.f32 %v2688
        %v2817 = vcvt.s32.f32 %v2689
        %v2818 = vcvt.s32.f32 %v2690
        %v2819 = vcvt.s32.f32 %v2691
        %v2820 = vcvt.s32.f32 %v2692
        %v2821 = vcvt.s32.f32 %v2693
        %v2822 = vcvt.s32.f32 %v2694
        %v2823 = vcvt.s32.f32 %v2695
        %v2824 = vcvt.s32.f32 %v2696
        %v2825 = vcvt.s32.f32 %v2697
        %v2826 = vcvt.s32.f32 %v2698
        %v2827 = vcvt.s32.f32 %v2699
        %v2828 = vcvt.s32.f32 %v2700
        %v2829 = vcvt.s32.f32 %v2701
        %v2830 = vcvt.s32.f32 %v2702
        %v2831 = vcvt.s32.f32 %v2703
        %v2832 = vcvt.s32.f32 %v2704
        %v2833 = vcvt.s32.f32 %v2705
        %v2834 = vcvt.s32.f32 %v2706
        %v2835 = vcvt.s32.f32 %v2707
        %v2836 = vcvt.s32.f32 %v2708
        %v2837 = vcvt.s32.f32 %v2709
        %v2838 = vcvt.s32.f32 %v2710
        %v2839 = vcvt.s32.f32 %v2711
        %v2840 = vcvt.s32.f32 %v2712
        %v2841 = vcvt.s32.f32 %v2713
        %v2842 = vcvt.s32.f32 %v2714
        %v2843 = vcvt.s32.f32 %v2715
        %v2844 = vcvt.s32.f32 %v2716
        %v2845 = vcvt.s32.f32 %v2717
        %v2846 = vpack.c.bf16 %v2726, %v2718
        %v2847 = vpack.c.bf16 %v2727, %v2719
        %v2848 = vpack.c.bf16 %v2728, %v2720
        %v2849 = vpack.c.bf16 %v2729, %v2721
        %v2850 = vpack.c.bf16 %v2730, %v2722
        %v2851 = vpack.c.bf16 %v2731, %v2723
        %v2852 = vpack.c.bf16 %v2732, %v2724
        %v2853 = vpack.c.bf16 %v2733, %v2725
        %v2854 = vpack.c.bf16 %v2742, %v2734
        %v2855 = vpack.c.bf16 %v2743, %v2735
        %v2856 = vpack.c.bf16 %v2744, %v2736
        %v2857 = vpack.c.bf16 %v2745, %v2737
        %v2858 = vpack.c.bf16 %v2746, %v2738
        %v2859 = vpack.c.bf16 %v2747, %v2739
        %v2860 = vpack.c.bf16 %v2748, %v2740
        %v2861 = vpack.c.bf16 %v2749, %v2741
        %v2862 = vpack.c.bf16 %v2758, %v2750
        %v2863 = vpack.c.bf16 %v2759, %v2751
        %v2864 = vpack.c.bf16 %v2760, %v2752
        %v2865 = vpack.c.bf16 %v2761, %v2753
        %v2866 = vpack.c.bf16 %v2762, %v2754
        %v2867 = vpack.c.bf16 %v2763, %v2755
        %v2868 = vpack.c.bf16 %v2764, %v2756
        %v2869 = vpack.c.bf16 %v2765, %v2757
        %v2870 = vpack.c.bf16 %v2774, %v2766
        %v2871 = vpack.c.bf16 %v2775, %v2767
        %v2872 = vpack.c.bf16 %v2776, %v2768
        %v2873 = vpack.c.bf16 %v2777, %v2769
        %v2874 = vpack.c.bf16 %v2778, %v2770
        %v2875 = vpack.c.bf16 %v2779, %v2771
        %v2876 = vpack.c.bf16 %v2780, %v2772
        %v2877 = vpack.c.bf16 %v2781, %v2773
        %v2878 = vpack.c.bf16 %v2790, %v2782
        %v2879 = vpack.c.bf16 %v2791, %v2783
        %v2880 = vpack.c.bf16 %v2792, %v2784
        %v2881 = vpack.c.bf16 %v2793, %v2785
        %v2882 = vpack.c.bf16 %v2794, %v2786
        %v2883 = vpack.c.bf16 %v2795, %v2787
        %v2884 = vpack.c.bf16 %v2796, %v2788
        %v2885 = vpack.c.bf16 %v2797, %v2789
        %v2886 = vpack.c.bf16 %v2806, %v2798
        %v2887 = vpack.c.bf16 %v2807, %v2799
        %v2888 = vpack.c.bf16 %v2808, %v2800
        %v2889 = vpack.c.bf16 %v2809, %v2801
        %v2890 = vpack.c.bf16 %v2810, %v2802
        %v2891 = vpack.c.bf16 %v2811, %v2803
        %v2892 = vpack.c.bf16 %v2812, %v2804
        %v2893 = vpack.c.bf16 %v2813, %v2805
        %v2894 = vpack.c.bf16 %v2822, %v2814
        %v2895 = vpack.c.bf16 %v2823, %v2815
        %v2896 = vpack.c.bf16 %v2824, %v2816
        %v2897 = vpack.c.bf16 %v2825, %v2817
        %v2898 = vpack.c.bf16 %v2826, %v2818
        %v2899 = vpack.c.bf16 %v2827, %v2819
        %v2900 = vpack.c.bf16 %v2828, %v2820
        %v2901 = vpack.c.bf16 %v2829, %v2821
        %v2902 = vpack.c.bf16 %v2838, %v2830
        %v2903 = vpack.c.bf16 %v2839, %v2831
        %v2904 = vpack.c.bf16 %v2840, %v2832
        %v2905 = vpack.c.bf16 %v2841, %v2833
        %v2906 = vpack.c.bf16 %v2842, %v2834
        %v2907 = vpack.c.bf16 %v2843, %v2835
        %v2908 = vpack.c.bf16 %v2844, %v2836
        %v2909 = vpack.c.bf16 %v2845, %v2837
        %v2910 = vld [vmem:[#allocation7] sm:$0xff]
        %v2911 = vld [vmem:[#allocation7 + $0x8] sm:$0xff]
        %v2912 = vld [vmem:[#allocation7 + $0x10] sm:$0xff]
        %v2913 = vld [vmem:[#allocation7 + $0x18] sm:$0xff]
        %v2914 = vld [vmem:[#allocation7 + $0x20] sm:$0xff]
        %v2915 = vld [vmem:[#allocation7 + $0x28] sm:$0xff]
        %v2916 = vld [vmem:[#allocation7 + $0x30] sm:$0xff]
        %v2917 = vld [vmem:[#allocation7 + $0x38] sm:$0xff]
        %v2918 = vld [vmem:[#allocation7 + $0x40] sm:$0xff]
        %v2919 = vld [vmem:[#allocation7 + $0x48] sm:$0xff]
        %v2920 = vld [vmem:[#allocation7 + $0x50] sm:$0xff]
        %v2921 = vld [vmem:[#allocation7 + $0x58] sm:$0xff]
        %v2922 = vld [vmem:[#allocation7 + $0x60] sm:$0xff]
        %v2923 = vld [vmem:[#allocation7 + $0x68] sm:$0xff]
        %v2924 = vld [vmem:[#allocation7 + $0x70] sm:$0xff]
        %v2925 = vld [vmem:[#allocation7 + $0x78] sm:$0xff]
        %v2926 = vld [vmem:[#allocation7 + $0x80] sm:$0xff]
        %v2927 = vld [vmem:[#allocation7 + $0x88] sm:$0xff]
        %v2928 = vld [vmem:[#allocation7 + $0x90] sm:$0xff]
        %v2929 = vld [vmem:[#allocation7 + $0x98] sm:$0xff]
        %v2930 = vld [vmem:[#allocation7 + $0xa0] sm:$0xff]
        %v2931 = vld [vmem:[#allocation7 + $0xa8] sm:$0xff]
        %v2932 = vld [vmem:[#allocation7 + $0xb0] sm:$0xff]
        %v2933 = vld [vmem:[#allocation7 + $0xb8] sm:$0xff]
        %v2934 = vld [vmem:[#allocation7 + $0xc0] sm:$0xff]
        %v2935 = vld [vmem:[#allocation7 + $0xc8] sm:$0xff]
        %v2936 = vld [vmem:[#allocation7 + $0xd0] sm:$0xff]
        %v2937 = vld [vmem:[#allocation7 + $0xd8] sm:$0xff]
        %v2938 = vld [vmem:[#allocation7 + $0xe0] sm:$0xff]
        %v2939 = vld [vmem:[#allocation7 + $0xe8] sm:$0xff]
        %v2940 = vld [vmem:[#allocation7 + $0xf0] sm:$0xff]
        %v2941 = vld [vmem:[#allocation7 + $0xf8] sm:$0xff]
        %v2942 = vld [vmem:[#allocation7 + $0x100] sm:$0xff]
        %v2943 = vld [vmem:[#allocation7 + $0x108] sm:$0xff]
        %v2944 = vld [vmem:[#allocation7 + $0x110] sm:$0xff]
        %v2945 = vld [vmem:[#allocation7 + $0x118] sm:$0xff]
        %v2946 = vld [vmem:[#allocation7 + $0x120] sm:$0xff]
        %v2947 = vld [vmem:[#allocation7 + $0x128] sm:$0xff]
        %v2948 = vld [vmem:[#allocation7 + $0x130] sm:$0xff]
        %v2949 = vld [vmem:[#allocation7 + $0x138] sm:$0xff]
        %v2950 = vld [vmem:[#allocation7 + $0x140] sm:$0xff]
        %v2951 = vld [vmem:[#allocation7 + $0x148] sm:$0xff]
        %v2952 = vld [vmem:[#allocation7 + $0x150] sm:$0xff]
        %v2953 = vld [vmem:[#allocation7 + $0x158] sm:$0xff]
        %v2954 = vld [vmem:[#allocation7 + $0x160] sm:$0xff]
        %v2955 = vld [vmem:[#allocation7 + $0x168] sm:$0xff]
        %v2956 = vld [vmem:[#allocation7 + $0x170] sm:$0xff]
        %v2957 = vld [vmem:[#allocation7 + $0x178] sm:$0xff]
        %v2958 = vld [vmem:[#allocation7 + $0x180] sm:$0xff]
        %v2959 = vld [vmem:[#allocation7 + $0x188] sm:$0xff]
        %v2960 = vld [vmem:[#allocation7 + $0x190] sm:$0xff]
        %v2961 = vld [vmem:[#allocation7 + $0x198] sm:$0xff]
        %v2962 = vld [vmem:[#allocation7 + $0x1a0] sm:$0xff]
        %v2963 = vld [vmem:[#allocation7 + $0x1a8] sm:$0xff]
        %v2964 = vld [vmem:[#allocation7 + $0x1b0] sm:$0xff]
        %v2965 = vld [vmem:[#allocation7 + $0x1b8] sm:$0xff]
        %v2966 = vld [vmem:[#allocation7 + $0x1c0] sm:$0xff]
        %v2967 = vld [vmem:[#allocation7 + $0x1c8] sm:$0xff]
        %v2968 = vld [vmem:[#allocation7 + $0x1d0] sm:$0xff]
        %v2969 = vld [vmem:[#allocation7 + $0x1d8] sm:$0xff]
        %v2970 = vld [vmem:[#allocation7 + $0x1e0] sm:$0xff]
        %v2971 = vld [vmem:[#allocation7 + $0x1e8] sm:$0xff]
        %v2972 = vld [vmem:[#allocation7 + $0x1f0] sm:$0xff]
        %v2973 = vld [vmem:[#allocation7 + $0x1f8] sm:$0xff]
        %v2974 = vld [vmem:[#allocation7 + $0x200] sm:$0xff]
        %v2975 = vld [vmem:[#allocation7 + $0x208] sm:$0xff]
        %v2976 = vld [vmem:[#allocation7 + $0x210] sm:$0xff]
        %v2977 = vld [vmem:[#allocation7 + $0x218] sm:$0xff]
        %v2978 = vld [vmem:[#allocation7 + $0x220] sm:$0xff]
        %v2979 = vld [vmem:[#allocation7 + $0x228] sm:$0xff]
        %v2980 = vld [vmem:[#allocation7 + $0x230] sm:$0xff]
        %v2981 = vld [vmem:[#allocation7 + $0x238] sm:$0xff]
        %v2982 = vld [vmem:[#allocation7 + $0x240] sm:$0xff]
        %v2983 = vld [vmem:[#allocation7 + $0x248] sm:$0xff]
        %v2984 = vld [vmem:[#allocation7 + $0x250] sm:$0xff]
        %v2985 = vld [vmem:[#allocation7 + $0x258] sm:$0xff]
        %v2986 = vld [vmem:[#allocation7 + $0x260] sm:$0xff]
        %v2987 = vld [vmem:[#allocation7 + $0x268] sm:$0xff]
        %v2988 = vld [vmem:[#allocation7 + $0x270] sm:$0xff]
        %v2989 = vld [vmem:[#allocation7 + $0x278] sm:$0xff]
        %v2990 = vld [vmem:[#allocation7 + $0x280] sm:$0xff]
        %v2991 = vld [vmem:[#allocation7 + $0x288] sm:$0xff]
        %v2992 = vld [vmem:[#allocation7 + $0x290] sm:$0xff]
        %v2993 = vld [vmem:[#allocation7 + $0x298] sm:$0xff]
        %v2994 = vld [vmem:[#allocation7 + $0x2a0] sm:$0xff]
        %v2995 = vld [vmem:[#allocation7 + $0x2a8] sm:$0xff]
        %v2996 = vld [vmem:[#allocation7 + $0x2b0] sm:$0xff]
        %v2997 = vld [vmem:[#allocation7 + $0x2b8] sm:$0xff]
        %v2998 = vld [vmem:[#allocation7 + $0x2c0] sm:$0xff]
        %v2999 = vld [vmem:[#allocation7 + $0x2c8] sm:$0xff]
        %v3000 = vld [vmem:[#allocation7 + $0x2d0] sm:$0xff]
        %v3001 = vld [vmem:[#allocation7 + $0x2d8] sm:$0xff]
        %v3002 = vld [vmem:[#allocation7 + $0x2e0] sm:$0xff]
        %v3003 = vld [vmem:[#allocation7 + $0x2e8] sm:$0xff]
        %v3004 = vld [vmem:[#allocation7 + $0x2f0] sm:$0xff]
        %v3005 = vld [vmem:[#allocation7 + $0x2f8] sm:$0xff]
        %v3006 = vld [vmem:[#allocation7 + $0x300] sm:$0xff]
        %v3007 = vld [vmem:[#allocation7 + $0x308] sm:$0xff]
        %v3008 = vld [vmem:[#allocation7 + $0x310] sm:$0xff]
        %v3009 = vld [vmem:[#allocation7 + $0x318] sm:$0xff]
        %v3010 = vld [vmem:[#allocation7 + $0x320] sm:$0xff]
        %v3011 = vld [vmem:[#allocation7 + $0x328] sm:$0xff]
        %v3012 = vld [vmem:[#allocation7 + $0x330] sm:$0xff]
        %v3013 = vld [vmem:[#allocation7 + $0x338] sm:$0xff]
        %v3014 = vld [vmem:[#allocation7 + $0x340] sm:$0xff]
        %v3015 = vld [vmem:[#allocation7 + $0x348] sm:$0xff]
        %v3016 = vld [vmem:[#allocation7 + $0x350] sm:$0xff]
        %v3017 = vld [vmem:[#allocation7 + $0x358] sm:$0xff]
        %v3018 = vld [vmem:[#allocation7 + $0x360] sm:$0xff]
        %v3019 = vld [vmem:[#allocation7 + $0x368] sm:$0xff]
        %v3020 = vld [vmem:[#allocation7 + $0x370] sm:$0xff]
        %v3021 = vld [vmem:[#allocation7 + $0x378] sm:$0xff]
        %v3022 = vld [vmem:[#allocation7 + $0x380] sm:$0xff]
        %v3023 = vld [vmem:[#allocation7 + $0x388] sm:$0xff]
        %v3024 = vld [vmem:[#allocation7 + $0x390] sm:$0xff]
        %v3025 = vld [vmem:[#allocation7 + $0x398] sm:$0xff]
        %v3026 = vld [vmem:[#allocation7 + $0x3a0] sm:$0xff]
        %v3027 = vld [vmem:[#allocation7 + $0x3a8] sm:$0xff]
        %v3028 = vld [vmem:[#allocation7 + $0x3b0] sm:$0xff]
        %v3029 = vld [vmem:[#allocation7 + $0x3b8] sm:$0xff]
        %v3030 = vld [vmem:[#allocation7 + $0x3c0] sm:$0xff]
        %v3031 = vld [vmem:[#allocation7 + $0x3c8] sm:$0xff]
        %v3032 = vld [vmem:[#allocation7 + $0x3d0] sm:$0xff]
        %v3033 = vld [vmem:[#allocation7 + $0x3d8] sm:$0xff]
        %v3034 = vld [vmem:[#allocation7 + $0x3e0] sm:$0xff]
        %v3035 = vld [vmem:[#allocation7 + $0x3e8] sm:$0xff]
        %v3036 = vld [vmem:[#allocation7 + $0x3f0] sm:$0xff]
        %v3037 = vld [vmem:[#allocation7 + $0x3f8] sm:$0xff]
        %v3166 = vunpack.c.l.b16 %v2910
        %v3167 = vunpack.c.h.b16 %v2910
        %v3168 = vunpack.c.l.b16 %v2911
        %v3169 = vunpack.c.h.b16 %v2911
        %v3170 = vunpack.c.l.b16 %v2912
        %v3171 = vunpack.c.h.b16 %v2912
        %v3172 = vunpack.c.l.b16 %v2913
        %v3173 = vunpack.c.h.b16 %v2913
        %v3174 = vunpack.c.l.b16 %v2914
        %v3175 = vunpack.c.h.b16 %v2914
        %v3176 = vunpack.c.l.b16 %v2915
        %v3177 = vunpack.c.h.b16 %v2915
        %v3178 = vunpack.c.l.b16 %v2916
        %v3179 = vunpack.c.h.b16 %v2916
        %v3180 = vunpack.c.l.b16 %v2917
        %v3181 = vunpack.c.h.b16 %v2917
        %v3182 = vunpack.c.l.b16 %v2918
        %v3183 = vunpack.c.h.b16 %v2918
        %v3184 = vunpack.c.l.b16 %v2919
        %v3185 = vunpack.c.h.b16 %v2919
        %v3186 = vunpack.c.l.b16 %v2920
        %v3187 = vunpack.c.h.b16 %v2920
        %v3188 = vunpack.c.l.b16 %v2921
        %v3189 = vunpack.c.h.b16 %v2921
        %v3190 = vunpack.c.l.b16 %v2922
        %v3191 = vunpack.c.h.b16 %v2922
        %v3192 = vunpack.c.l.b16 %v2923
        %v3193 = vunpack.c.h.b16 %v2923
        %v3194 = vunpack.c.l.b16 %v2924
        %v3195 = vunpack.c.h.b16 %v2924
        %v3196 = vunpack.c.l.b16 %v2925
        %v3197 = vunpack.c.h.b16 %v2925
        %v3198 = vunpack.c.l.b16 %v2926
        %v3199 = vunpack.c.h.b16 %v2926
        %v3200 = vunpack.c.l.b16 %v2927
        %v3201 = vunpack.c.h.b16 %v2927
        %v3202 = vunpack.c.l.b16 %v2928
        %v3203 = vunpack.c.h.b16 %v2928
        %v3204 = vunpack.c.l.b16 %v2929
        %v3205 = vunpack.c.h.b16 %v2929
        %v3206 = vunpack.c.l.b16 %v2930
        %v3207 = vunpack.c.h.b16 %v2930
        %v3208 = vunpack.c.l.b16 %v2931
        %v3209 = vunpack.c.h.b16 %v2931
        %v3210 = vunpack.c.l.b16 %v2932
        %v3211 = vunpack.c.h.b16 %v2932
        %v3212 = vunpack.c.l.b16 %v2933
        %v3213 = vunpack.c.h.b16 %v2933
        %v3214 = vunpack.c.l.b16 %v2934
        %v3215 = vunpack.c.h.b16 %v2934
        %v3216 = vunpack.c.l.b16 %v2935
        %v3217 = vunpack.c.h.b16 %v2935
        %v3218 = vunpack.c.l.b16 %v2936
        %v3219 = vunpack.c.h.b16 %v2936
        %v3220 = vunpack.c.l.b16 %v2937
        %v3221 = vunpack.c.h.b16 %v2937
        %v3222 = vunpack.c.l.b16 %v2938
        %v3223 = vunpack.c.h.b16 %v2938
        %v3224 = vunpack.c.l.b16 %v2939
        %v3225 = vunpack.c.h.b16 %v2939
        %v3226 = vunpack.c.l.b16 %v2940
        %v3227 = vunpack.c.h.b16 %v2940
        %v3228 = vunpack.c.l.b16 %v2941
        %v3229 = vunpack.c.h.b16 %v2941
        %v3230 = vunpack.c.l.b16 %v2942
        %v3231 = vunpack.c.h.b16 %v2942
        %v3232 = vunpack.c.l.b16 %v2943
        %v3233 = vunpack.c.h.b16 %v2943
        %v3234 = vunpack.c.l.b16 %v2944
        %v3235 = vunpack.c.h.b16 %v2944
        %v3236 = vunpack.c.l.b16 %v2945
        %v3237 = vunpack.c.h.b16 %v2945
        %v3238 = vunpack.c.l.b16 %v2946
        %v3239 = vunpack.c.h.b16 %v2946
        %v3240 = vunpack.c.l.b16 %v2947
        %v3241 = vunpack.c.h.b16 %v2947
        %v3242 = vunpack.c.l.b16 %v2948
        %v3243 = vunpack.c.h.b16 %v2948
        %v3244 = vunpack.c.l.b16 %v2949
        %v3245 = vunpack.c.h.b16 %v2949
        %v3246 = vunpack.c.l.b16 %v2950
        %v3247 = vunpack.c.h.b16 %v2950
        %v3248 = vunpack.c.l.b16 %v2951
        %v3249 = vunpack.c.h.b16 %v2951
        %v3250 = vunpack.c.l.b16 %v2952
        %v3251 = vunpack.c.h.b16 %v2952
        %v3252 = vunpack.c.l.b16 %v2953
        %v3253 = vunpack.c.h.b16 %v2953
        %v3254 = vunpack.c.l.b16 %v2954
        %v3255 = vunpack.c.h.b16 %v2954
        %v3256 = vunpack.c.l.b16 %v2955
        %v3257 = vunpack.c.h.b16 %v2955
        %v3258 = vunpack.c.l.b16 %v2956
        %v3259 = vunpack.c.h.b16 %v2956
        %v3260 = vunpack.c.l.b16 %v2957
        %v3261 = vunpack.c.h.b16 %v2957
        %v3262 = vunpack.c.l.b16 %v2958
        %v3263 = vunpack.c.h.b16 %v2958
        %v3264 = vunpack.c.l.b16 %v2959
        %v3265 = vunpack.c.h.b16 %v2959
        %v3266 = vunpack.c.l.b16 %v2960
        %v3267 = vunpack.c.h.b16 %v2960
        %v3268 = vunpack.c.l.b16 %v2961
        %v3269 = vunpack.c.h.b16 %v2961
        %v3270 = vunpack.c.l.b16 %v2962
        %v3271 = vunpack.c.h.b16 %v2962
        %v3272 = vunpack.c.l.b16 %v2963
        %v3273 = vunpack.c.h.b16 %v2963
        %v3274 = vunpack.c.l.b16 %v2964
        %v3275 = vunpack.c.h.b16 %v2964
        %v3276 = vunpack.c.l.b16 %v2965
        %v3277 = vunpack.c.h.b16 %v2965
        %v3278 = vunpack.c.l.b16 %v2966
        %v3279 = vunpack.c.h.b16 %v2966
        %v3280 = vunpack.c.l.b16 %v2967
        %v3281 = vunpack.c.h.b16 %v2967
        %v3282 = vunpack.c.l.b16 %v2968
        %v3283 = vunpack.c.h.b16 %v2968
        %v3284 = vunpack.c.l.b16 %v2969
        %v3285 = vunpack.c.h.b16 %v2969
        %v3286 = vunpack.c.l.b16 %v2970
        %v3287 = vunpack.c.h.b16 %v2970
        %v3288 = vunpack.c.l.b16 %v2971
        %v3289 = vunpack.c.h.b16 %v2971
        %v3290 = vunpack.c.l.b16 %v2972
        %v3291 = vunpack.c.h.b16 %v2972
        %v3292 = vunpack.c.l.b16 %v2973
        %v3293 = vunpack.c.h.b16 %v2973
        %v3294 = vunpack.c.l.b16 %v2974
        %v3295 = vunpack.c.h.b16 %v2974
        %v3296 = vunpack.c.l.b16 %v2975
        %v3297 = vunpack.c.h.b16 %v2975
        %v3298 = vunpack.c.l.b16 %v2976
        %v3299 = vunpack.c.h.b16 %v2976
        %v3300 = vunpack.c.l.b16 %v2977
        %v3301 = vunpack.c.h.b16 %v2977
        %v3302 = vunpack.c.l.b16 %v2978
        %v3303 = vunpack.c.h.b16 %v2978
        %v3304 = vunpack.c.l.b16 %v2979
        %v3305 = vunpack.c.h.b16 %v2979
        %v3306 = vunpack.c.l.b16 %v2980
        %v3307 = vunpack.c.h.b16 %v2980
        %v3308 = vunpack.c.l.b16 %v2981
        %v3309 = vunpack.c.h.b16 %v2981
        %v3310 = vunpack.c.l.b16 %v2982
        %v3311 = vunpack.c.h.b16 %v2982
        %v3312 = vunpack.c.l.b16 %v2983
        %v3313 = vunpack.c.h.b16 %v2983
        %v3314 = vunpack.c.l.b16 %v2984
        %v3315 = vunpack.c.h.b16 %v2984
        %v3316 = vunpack.c.l.b16 %v2985
        %v3317 = vunpack.c.h.b16 %v2985
        %v3318 = vunpack.c.l.b16 %v2986
        %v3319 = vunpack.c.h.b16 %v2986
        %v3320 = vunpack.c.l.b16 %v2987
        %v3321 = vunpack.c.h.b16 %v2987
        %v3322 = vunpack.c.l.b16 %v2988
        %v3323 = vunpack.c.h.b16 %v2988
        %v3324 = vunpack.c.l.b16 %v2989
        %v3325 = vunpack.c.h.b16 %v2989
        %v3326 = vunpack.c.l.b16 %v2990
        %v3327 = vunpack.c.h.b16 %v2990
        %v3328 = vunpack.c.l.b16 %v2991
        %v3329 = vunpack.c.h.b16 %v2991
        %v3330 = vunpack.c.l.b16 %v2992
        %v3331 = vunpack.c.h.b16 %v2992
        %v3332 = vunpack.c.l.b16 %v2993
        %v3333 = vunpack.c.h.b16 %v2993
        %v3334 = vunpack.c.l.b16 %v2994
        %v3335 = vunpack.c.h.b16 %v2994
        %v3336 = vunpack.c.l.b16 %v2995
        %v3337 = vunpack.c.h.b16 %v2995
        %v3338 = vunpack.c.l.b16 %v2996
        %v3339 = vunpack.c.h.b16 %v2996
        %v3340 = vunpack.c.l.b16 %v2997
        %v3341 = vunpack.c.h.b16 %v2997
        %v3342 = vunpack.c.l.b16 %v2998
        %v3343 = vunpack.c.h.b16 %v2998
        %v3344 = vunpack.c.l.b16 %v2999
        %v3345 = vunpack.c.h.b16 %v2999
        %v3346 = vunpack.c.l.b16 %v3000
        %v3347 = vunpack.c.h.b16 %v3000
        %v3348 = vunpack.c.l.b16 %v3001
        %v3349 = vunpack.c.h.b16 %v3001
        %v3350 = vunpack.c.l.b16 %v3002
        %v3351 = vunpack.c.h.b16 %v3002
        %v3352 = vunpack.c.l.b16 %v3003
        %v3353 = vunpack.c.h.b16 %v3003
        %v3354 = vunpack.c.l.b16 %v3004
        %v3355 = vunpack.c.h.b16 %v3004
        %v3356 = vunpack.c.l.b16 %v3005
        %v3357 = vunpack.c.h.b16 %v3005
        %v3358 = vunpack.c.l.b16 %v3006
        %v3359 = vunpack.c.h.b16 %v3006
        %v3360 = vunpack.c.l.b16 %v3007
        %v3361 = vunpack.c.h.b16 %v3007
        %v3362 = vunpack.c.l.b16 %v3008
        %v3363 = vunpack.c.h.b16 %v3008
        %v3364 = vunpack.c.l.b16 %v3009
        %v3365 = vunpack.c.h.b16 %v3009
        %v3366 = vunpack.c.l.b16 %v3010
        %v3367 = vunpack.c.h.b16 %v3010
        %v3368 = vunpack.c.l.b16 %v3011
        %v3369 = vunpack.c.h.b16 %v3011
        %v3370 = vunpack.c.l.b16 %v3012
        %v3371 = vunpack.c.h.b16 %v3012
        %v3372 = vunpack.c.l.b16 %v3013
        %v3373 = vunpack.c.h.b16 %v3013
        %v3374 = vunpack.c.l.b16 %v3014
        %v3375 = vunpack.c.h.b16 %v3014
        %v3376 = vunpack.c.l.b16 %v3015
        %v3377 = vunpack.c.h.b16 %v3015
        %v3378 = vunpack.c.l.b16 %v3016
        %v3379 = vunpack.c.h.b16 %v3016
        %v3380 = vunpack.c.l.b16 %v3017
        %v3381 = vunpack.c.h.b16 %v3017
        %v3382 = vunpack.c.l.b16 %v3018
        %v3383 = vunpack.c.h.b16 %v3018
        %v3384 = vunpack.c.l.b16 %v3019
        %v3385 = vunpack.c.h.b16 %v3019
        %v3386 = vunpack.c.l.b16 %v3020
        %v3387 = vunpack.c.h.b16 %v3020
        %v3388 = vunpack.c.l.b16 %v3021
        %v3389 = vunpack.c.h.b16 %v3021
        %v3390 = vunpack.c.l.b16 %v3022
        %v3391 = vunpack.c.h.b16 %v3022
        %v3392 = vunpack.c.l.b16 %v3023
        %v3393 = vunpack.c.h.b16 %v3023
        %v3394 = vunpack.c.l.b16 %v3024
        %v3395 = vunpack.c.h.b16 %v3024
        %v3396 = vunpack.c.l.b16 %v3025
        %v3397 = vunpack.c.h.b16 %v3025
        %v3398 = vunpack.c.l.b16 %v3026
        %v3399 = vunpack.c.h.b16 %v3026
        %v3400 = vunpack.c.l.b16 %v3027
        %v3401 = vunpack.c.h.b16 %v3027
        %v3402 = vunpack.c.l.b16 %v3028
        %v3403 = vunpack.c.h.b16 %v3028
        %v3404 = vunpack.c.l.b16 %v3029
        %v3405 = vunpack.c.h.b16 %v3029
        %v3406 = vunpack.c.l.b16 %v3030
        %v3407 = vunpack.c.h.b16 %v3030
        %v3408 = vunpack.c.l.b16 %v3031
        %v3409 = vunpack.c.h.b16 %v3031
        %v3410 = vunpack.c.l.b16 %v3032
        %v3411 = vunpack.c.h.b16 %v3032
        %v3412 = vunpack.c.l.b16 %v3033
        %v3413 = vunpack.c.h.b16 %v3033
        %v3414 = vunpack.c.l.b16 %v3034
        %v3415 = vunpack.c.h.b16 %v3034
        %v3416 = vunpack.c.l.b16 %v3035
        %v3417 = vunpack.c.h.b16 %v3035
        %v3418 = vunpack.c.l.b16 %v3036
        %v3419 = vunpack.c.h.b16 %v3036
        %v3420 = vunpack.c.l.b16 %v3037
        %v3421 = vunpack.c.h.b16 %v3037
        %v3422 = vpack.c.b16 %v3168, %v3166
        %v3423 = vpack.c.b16 %v3169, %v3167
        %v3424 = vpack.c.b16 %v3172, %v3170
        %v3425 = vpack.c.b16 %v3173, %v3171
        %v3426 = vpack.c.b16 %v3176, %v3174
        %v3427 = vpack.c.b16 %v3177, %v3175
        %v3428 = vpack.c.b16 %v3180, %v3178
        %v3429 = vpack.c.b16 %v3181, %v3179
        %v3430 = vpack.c.b16 %v3184, %v3182
        %v3431 = vpack.c.b16 %v3185, %v3183
        %v3432 = vpack.c.b16 %v3188, %v3186
        %v3433 = vpack.c.b16 %v3189, %v3187
        %v3434 = vpack.c.b16 %v3192, %v3190
        %v3435 = vpack.c.b16 %v3193, %v3191
        %v3436 = vpack.c.b16 %v3196, %v3194
        %v3437 = vpack.c.b16 %v3197, %v3195
        %v3438 = vpack.c.b16 %v3200, %v3198
        %v3439 = vpack.c.b16 %v3201, %v3199
        %v3440 = vpack.c.b16 %v3204, %v3202
        %v3441 = vpack.c.b16 %v3205, %v3203
        %v3442 = vpack.c.b16 %v3208, %v3206
        %v3443 = vpack.c.b16 %v3209, %v3207
        %v3444 = vpack.c.b16 %v3212, %v3210
        %v3445 = vpack.c.b16 %v3213, %v3211
        %v3446 = vpack.c.b16 %v3216, %v3214
        %v3447 = vpack.c.b16 %v3217, %v3215
        %v3448 = vpack.c.b16 %v3220, %v3218
        %v3449 = vpack.c.b16 %v3221, %v3219
        %v3450 = vpack.c.b16 %v3224, %v3222
        %v3451 = vpack.c.b16 %v3225, %v3223
        %v3452 = vpack.c.b16 %v3228, %v3226
        %v3453 = vpack.c.b16 %v3229, %v3227
        %v3454 = vpack.c.b16 %v3232, %v3230
        %v3455 = vpack.c.b16 %v3233, %v3231
        %v3456 = vpack.c.b16 %v3236, %v3234
        %v3457 = vpack.c.b16 %v3237, %v3235
        %v3458 = vpack.c.b16 %v3240, %v3238
        %v3459 = vpack.c.b16 %v3241, %v3239
        %v3460 = vpack.c.b16 %v3244, %v3242
        %v3461 = vpack.c.b16 %v3245, %v3243
        %v3462 = vpack.c.b16 %v3248, %v3246
        %v3463 = vpack.c.b16 %v3249, %v3247
        %v3464 = vpack.c.b16 %v3252, %v3250
        %v3465 = vpack.c.b16 %v3253, %v3251
        %v3466 = vpack.c.b16 %v3256, %v3254
        %v3467 = vpack.c.b16 %v3257, %v3255
        %v3468 = vpack.c.b16 %v3260, %v3258
        %v3469 = vpack.c.b16 %v3261, %v3259
        %v3470 = vpack.c.b16 %v3264, %v3262
        %v3471 = vpack.c.b16 %v3265, %v3263
        %v3472 = vpack.c.b16 %v3268, %v3266
        %v3473 = vpack.c.b16 %v3269, %v3267
        %v3474 = vpack.c.b16 %v3272, %v3270
        %v3475 = vpack.c.b16 %v3273, %v3271
        %v3476 = vpack.c.b16 %v3276, %v3274
        %v3477 = vpack.c.b16 %v3277, %v3275
        %v3478 = vpack.c.b16 %v3280, %v3278
        %v3479 = vpack.c.b16 %v3281, %v3279
        %v3480 = vpack.c.b16 %v3284, %v3282
        %v3481 = vpack.c.b16 %v3285, %v3283
        %v3482 = vpack.c.b16 %v3288, %v3286
        %v3483 = vpack.c.b16 %v3289, %v3287
        %v3484 = vpack.c.b16 %v3292, %v3290
        %v3485 = vpack.c.b16 %v3293, %v3291
        %v3486 = vpack.c.b16 %v3296, %v3294
        %v3487 = vpack.c.b16 %v3297, %v3295
        %v3488 = vpack.c.b16 %v3300, %v3298
        %v3489 = vpack.c.b16 %v3301, %v3299
        %v3490 = vpack.c.b16 %v3304, %v3302
        %v3491 = vpack.c.b16 %v3305, %v3303
        %v3492 = vpack.c.b16 %v3308, %v3306
        %v3493 = vpack.c.b16 %v3309, %v3307
        %v3494 = vpack.c.b16 %v3312, %v3310
        %v3495 = vpack.c.b16 %v3313, %v3311
        %v3496 = vpack.c.b16 %v3316, %v3314
        %v3497 = vpack.c.b16 %v3317, %v3315
        %v3498 = vpack.c.b16 %v3320, %v3318
        %v3499 = vpack.c.b16 %v3321, %v3319
        %v3500 = vpack.c.b16 %v3324, %v3322
        %v3501 = vpack.c.b16 %v3325, %v3323
        %v3502 = vpack.c.b16 %v3328, %v3326
        %v3503 = vpack.c.b16 %v3329, %v3327
        %v3504 = vpack.c.b16 %v3332, %v3330
        %v3505 = vpack.c.b16 %v3333, %v3331
        %v3506 = vpack.c.b16 %v3336, %v3334
        %v3507 = vpack.c.b16 %v3337, %v3335
        %v3508 = vpack.c.b16 %v3340, %v3338
        %v3509 = vpack.c.b16 %v3341, %v3339
        %v3510 = vpack.c.b16 %v3344, %v3342
        %v3511 = vpack.c.b16 %v3345, %v3343
        %v3512 = vpack.c.b16 %v3348, %v3346
        %v3513 = vpack.c.b16 %v3349, %v3347
        %v3514 = vpack.c.b16 %v3352, %v3350
        %v3515 = vpack.c.b16 %v3353, %v3351
        %v3516 = vpack.c.b16 %v3356, %v3354
        %v3517 = vpack.c.b16 %v3357, %v3355
        %v3518 = vpack.c.b16 %v3360, %v3358
        %v3519 = vpack.c.b16 %v3361, %v3359
        %v3520 = vpack.c.b16 %v3364, %v3362
        %v3521 = vpack.c.b16 %v3365, %v3363
        %v3522 = vpack.c.b16 %v3368, %v3366
        %v3523 = vpack.c.b16 %v3369, %v3367
        %v3524 = vpack.c.b16 %v3372, %v3370
        %v3525 = vpack.c.b16 %v3373, %v3371
        %v3526 = vpack.c.b16 %v3376, %v3374
        %v3527 = vpack.c.b16 %v3377, %v3375
        %v3528 = vpack.c.b16 %v3380, %v3378
        %v3529 = vpack.c.b16 %v3381, %v3379
        %v3530 = vpack.c.b16 %v3384, %v3382
        %v3531 = vpack.c.b16 %v3385, %v3383
        %v3532 = vpack.c.b16 %v3388, %v3386
        %v3533 = vpack.c.b16 %v3389, %v3387
        %v3534 = vpack.c.b16 %v3392, %v3390
        %v3535 = vpack.c.b16 %v3393, %v3391
        %v3536 = vpack.c.b16 %v3396, %v3394
        %v3537 = vpack.c.b16 %v3397, %v3395
        %v3538 = vpack.c.b16 %v3400, %v3398
        %v3539 = vpack.c.b16 %v3401, %v3399
        %v3540 = vpack.c.b16 %v3404, %v3402
        %v3541 = vpack.c.b16 %v3405, %v3403
        %v3542 = vpack.c.b16 %v3408, %v3406
        %v3543 = vpack.c.b16 %v3409, %v3407
        %v3544 = vpack.c.b16 %v3412, %v3410
        %v3545 = vpack.c.b16 %v3413, %v3411
        %v3546 = vpack.c.b16 %v3416, %v3414
        %v3547 = vpack.c.b16 %v3417, %v3415
        %v3548 = vpack.c.b16 %v3420, %v3418
        %v3549 = vpack.c.b16 %v3421, %v3419
        %3678 = vmatprep.subr.bf16.mxu0 %v3423
        %3679 = vmatpush1.bf16.msra.mxu0 %v3422
        %3680 = vmatprep.subr.bf16.mxu0 %v3425
        %3681 = vmatpush1.bf16.msra.mxu0 %v3424
        %3682 = vmatprep.subr.bf16.mxu0 %v3427
        %3683 = vmatpush1.bf16.msra.mxu0 %v3426
        %3684 = vmatprep.subr.bf16.mxu0 %v3429
        %3685 = vmatpush1.bf16.msra.mxu0 %v3428
        %3686 = vmatprep.subr.bf16.mxu0 %v3431
        %3687 = vmatpush1.bf16.msra.mxu0 %v3430
        %3688 = vmatprep.subr.bf16.mxu0 %v3433
        %3689 = vmatpush1.bf16.msra.mxu0 %v3432
        %3690 = vmatprep.subr.bf16.mxu0 %v3435
        %3691 = vmatpush1.bf16.msra.mxu0 %v3434
        %3692 = vmatprep.subr.bf16.mxu0 %v3437
        %3693 = vmatpush1.bf16.msra.mxu0 %v3436
        %3694 = vmatprep.subr.bf16.mxu0 %v3439
        %3695 = vmatpush1.bf16.msra.mxu0 %v3438
        %3696 = vmatprep.subr.bf16.mxu0 %v3441
        %3697 = vmatpush1.bf16.msra.mxu0 %v3440
        %3698 = vmatprep.subr.bf16.mxu0 %v3443
        %3699 = vmatpush1.bf16.msra.mxu0 %v3442
        %3700 = vmatprep.subr.bf16.mxu0 %v3445
        %3701 = vmatpush1.bf16.msra.mxu0 %v3444
        %3702 = vmatprep.subr.bf16.mxu0 %v3447
        %3703 = vmatpush1.bf16.msra.mxu0 %v3446
        %3704 = vmatprep.subr.bf16.mxu0 %v3449
        %3705 = vmatpush1.bf16.msra.mxu0 %v3448
        %3706 = vmatprep.subr.bf16.mxu0 %v3451
        %3707 = vmatpush1.bf16.msra.mxu0 %v3450
        %3708 = vmatprep.subr.bf16.mxu0 %v3453
        %3709 = vmatpush1.bf16.msra.mxu0 %v3452
        %3710 = vmatprep.mubr.bf16.mxu0 %v2847
        %3711 = vmatmul.mubr.bf16.gmra.mrb[0].mxu0 %v2846
        %v3712 = vpop.f32.mrb[0].mxu0
        %v3713 = vadd.f32 0.0, %v3712
        %v3714 = vpop.f32.mrb[0].mxu0
        %v3715 = vadd.f32 0.0, %v3714
        %v3716 = vpop.f32.mrb[0].mxu0
        %v3717 = vadd.f32 0.0, %v3716
        %v3718 = vpop.f32.mrb[0].mxu0
        %v3719 = vadd.f32 0.0, %v3718
        %3720 = vmatprep.mubr.bf16.mxu0 %v2855
        %3721 = vmatmul.mubr.bf16.gmra.mrb[0].mxu0 %v2854
        %v3722 = vpop.f32.mrb[0].mxu0
        %v3723 = vadd.f32 0.0, %v3722
        %v3724 = vpop.f32.mrb[0].mxu0
        %v3725 = vadd.f32 0.0, %v3724
        %v3726 = vpop.f32.mrb[0].mxu0
        %v3727 = vadd.f32 0.0, %v3726
        %v3728 = vpop.f32.mrb[0].mxu0
        %v3729 = vadd.f32 0.0, %v3728
        %3730 = vmatprep.mubr.bf16.mxu0 %v2863
        %3731 = vmatmul.mubr.bf16.gmra.mrb[0].mxu0 %v2862
        %v3732 = vpop.f32.mrb[0].mxu0
        %v3733 = vadd.f32 0.0, %v3732
        %v3734 = vpop.f32.mrb[0].mxu0
        %v3735 = vadd.f32 0.0, %v3734
        %v3736 = vpop.f32.mrb[0].mxu0
        %v3737 = vadd.f32 0.0, %v3736
        %v3738 = vpop.f32.mrb[0].mxu0
        %v3739 = vadd.f32 0.0, %v3738
        %3740 = vmatprep.mubr.bf16.mxu0 %v2871
        %3741 = vmatmul.mubr.bf16.gmra.mrb[0].mxu0 %v2870
        %v3742 = vpop.f32.mrb[0].mxu0
        %v3743 = vadd.f32 0.0, %v3742
        %v3744 = vpop.f32.mrb[0].mxu0
        %v3745 = vadd.f32 0.0, %v3744
        %v3746 = vpop.f32.mrb[0].mxu0
        %v3747 = vadd.f32 0.0, %v3746
        %v3748 = vpop.f32.mrb[0].mxu0
        %v3749 = vadd.f32 0.0, %v3748
        %3750 = vmatprep.mubr.bf16.mxu0 %v2879
        %3751 = vmatmul.mubr.bf16.gmra.mrb[0].mxu0 %v2878
        %v3752 = vpop.f32.mrb[0].mxu0
        %v3753 = vadd.f32 0.0, %v3752
        %v3754 = vpop.f32.mrb[0].mxu0
        %v3755 = vadd.f32 0.0, %v3754
        %v3756 = vpop.f32.mrb[0].mxu0
        %v3757 = vadd.f32 0.0, %v3756
        %v3758 = vpop.f32.mrb[0].mxu0
        %v3759 = vadd.f32 0.0, %v3758
        %3760 = vmatprep.mubr.bf16.mxu0 %v2887
        %3761 = vmatmul.mubr.bf16.gmra.mrb[0].mxu0 %v2886
        %v3762 = vpop.f32.mrb[0].mxu0
        %v3763 = vadd.f32 0.0, %v3762
        %v3764 = vpop.f32.mrb[0].mxu0
        %v3765 = vadd.f32 0.0, %v3764
        %v3766 = vpop.f32.mrb[0].mxu0
        %v3767 = vadd.f32 0.0, %v3766
        %v3768 = vpop.f32.mrb[0].mxu0
        %v3769 = vadd.f32 0.0, %v3768
        %3770 = vmatprep.mubr.bf16.mxu0 %v2895
        %3771 = vmatmul.mubr.bf16.gmra.mrb[0].mxu0 %v2894
        %v3772 = vpop.f32.mrb[0].mxu0
        %v3773 = vadd.f32 0.0, %v3772
        %v3774 = vpop.f32.mrb[0].mxu0
        %v3775 = vadd.f32 0.0, %v3774
        %v3776 = vpop.f32.mrb[0].mxu0
        %v3777 = vadd.f32 0.0, %v3776
        %v3778 = vpop.f32.mrb[0].mxu0
        %v3779 = vadd.f32 0.0, %v3778
        %3780 = vmatprep.mubr.bf16.mxu0 %v2903
        %3781 = vmatmul.mubr.bf16.gmra.mrb[0].mxu0 %v2902
        %v3782 = vpop.f32.mrb[0].mxu0
        %v3783 = vadd.f32 0.0, %v3782
        %v3784 = vpop.f32.mrb[0].mxu0
        %v3785 = vadd.f32 0.0, %v3784
        %v3786 = vpop.f32.mrb[0].mxu0
        %v3787 = vadd.f32 0.0, %v3786
        %v3788 = vpop.f32.mrb[0].mxu0
        %v3789 = vadd.f32 0.0, %v3788
        %3790 = vdwg.mxu0
        %3791 = vmatprep.subr.bf16.mxu0 %v3455
        %3792 = vmatpush1.bf16.msra.mxu0 %v3454
        %3793 = vmatprep.subr.bf16.mxu0 %v3457
        %3794 = vmatpush1.bf16.msra.mxu0 %v3456
        %3795 = vmatprep.subr.bf16.mxu0 %v3459
        %3796 = vmatpush1.bf16.msra.mxu0 %v3458
        %3797 = vmatprep.subr.bf16.mxu0 %v3461
        %3798 = vmatpush1.bf16.msra.mxu0 %v3460
        %3799 = vmatprep.subr.bf16.mxu0 %v3463
        %3800 = vmatpush1.bf16.msra.mxu0 %v3462
        %3801 = vmatprep.subr.bf16.mxu0 %v3465
        %3802 = vmatpush1.bf16.msra.mxu0 %v3464
        %3803 = vmatprep.subr.bf16.mxu0 %v3467
        %3804 = vmatpush1.bf16.msra.mxu0 %v3466
        %3805 = vmatprep.subr.bf16.mxu0 %v3469
        %3806 = vmatpush1.bf16.msra.mxu0 %v3468
        %3807 = vmatprep.subr.bf16.mxu0 %v3471
        %3808 = vmatpush1.bf16.msra.mxu0 %v3470
        %3809 = vmatprep.subr.bf16.mxu0 %v3473
        %3810 = vmatpush1.bf16.msra.mxu0 %v3472
        %3811 = vmatprep.subr.bf16.mxu0 %v3475
        %3812 = vmatpush1.bf16.msra.mxu0 %v3474
        %3813 = vmatprep.subr.bf16.mxu0 %v3477
        %3814 = vmatpush1.bf16.msra.mxu0 %v3476
        %3815 = vmatprep.subr.bf16.mxu0 %v3479
        %3816 = vmatpush1.bf16.msra.mxu0 %v3478
        %3817 = vmatprep.subr.bf16.mxu0 %v3481
        %3818 = vmatpush1.bf16.msra.mxu0 %v3480
        %3819 = vmatprep.subr.bf16.mxu0 %v3483
        %3820 = vmatpush1.bf16.msra.mxu0 %v3482
        %3821 = vmatprep.subr.bf16.mxu0 %v3485
        %3822 = vmatpush1.bf16.msra.mxu0 %v3484
        %3823 = vmatprep.mubr.bf16.mxu0 %v2849
        %3824 = vmatmul.mubr.bf16.gmra.mrb[0].mxu0 %v2848
        %v3825 = vpop.f32.mrb[0].mxu0
        %v3826 = vadd.f32 %v3713, %v3825
        %v3827 = vpop.f32.mrb[0].mxu0
        %v3828 = vadd.f32 %v3715, %v3827
        %v3829 = vpop.f32.mrb[0].mxu0
        %v3830 = vadd.f32 %v3717, %v3829
        %v3831 = vpop.f32.mrb[0].mxu0
        %v3832 = vadd.f32 %v3719, %v3831
        %3833 = vmatprep.mubr.bf16.mxu0 %v2857
        %3834 = vmatmul.mubr.bf16.gmra.mrb[0].mxu0 %v2856
        %v3835 = vpop.f32.mrb[0].mxu0
        %v3836 = vadd.f32 %v3723, %v3835
        %v3837 = vpop.f32.mrb[0].mxu0
        %v3838 = vadd.f32 %v3725, %v3837
        %v3839 = vpop.f32.mrb[0].mxu0
        %v3840 = vadd.f32 %v3727, %v3839
        %v3841 = vpop.f32.mrb[0].mxu0
        %v3842 = vadd.f32 %v3729, %v3841
        %3843 = vmatprep.mubr.bf16.mxu0 %v2865
        %3844 = vmatmul.mubr.bf16.gmra.mrb[0].mxu0 %v2864
        %v3845 = vpop.f32.mrb[0].mxu0
        %v3846 = vadd.f32 %v3733, %v3845
        %v3847 = vpop.f32.mrb[0].mxu0
        %v3848 = vadd.f32 %v3735, %v3847
        %v3849 = vpop.f32.mrb[0].mxu0
        %v3850 = vadd.f32 %v3737, %v3849
        %v3851 = vpop.f32.mrb[0].mxu0
        %v3852 = vadd.f32 %v3739, %v3851
        %3853 = vmatprep.mubr.bf16.mxu0 %v2873
        %3854 = vmatmul.mubr.bf16.gmra.mrb[0].mxu0 %v2872
        %v3855 = vpop.f32.mrb[0].mxu0
        %v3856 = vadd.f32 %v3743, %v3855
        %v3857 = vpop.f32.mrb[0].mxu0
        %v3858 = vadd.f32 %v3745, %v3857
        %v3859 = vpop.f32.mrb[0].mxu0
        %v3860 = vadd.f32 %v3747, %v3859
        %v3861 = vpop.f32.mrb[0].mxu0
        %v3862 = vadd.f32 %v3749, %v3861
        %3863 = vmatprep.mubr.bf16.mxu0 %v2881
        %3864 = vmatmul.mubr.bf16.gmra.mrb[0].mxu0 %v2880
        %v3865 = vpop.f32.mrb[0].mxu0
        %v3866 = vadd.f32 %v3753, %v3865
        %v3867 = vpop.f32.mrb[0].mxu0
        %v3868 = vadd.f32 %v3755, %v3867
        %v3869 = vpop.f32.mrb[0].mxu0
        %v3870 = vadd.f32 %v3757, %v3869
        %v3871 = vpop.f32.mrb[0].mxu0
        %v3872 = vadd.f32 %v3759, %v3871
        %3873 = vmatprep.mubr.bf16.mxu0 %v2889
        %3874 = vmatmul.mubr.bf16.gmra.mrb[0].mxu0 %v2888
        %v3875 = vpop.f32.mrb[0].mxu0
        %v3876 = vadd.f32 %v3763, %v3875
        %v3877 = vpop.f32.mrb[0].mxu0
        %v3878 = vadd.f32 %v3765, %v3877
        %v3879 = vpop.f32.mrb[0].mxu0
        %v3880 = vadd.f32 %v3767, %v3879
        %v3881 = vpop.f32.mrb[0].mxu0
        %v3882 = vadd.f32 %v3769, %v3881
        %3883 = vmatprep.mubr.bf16.mxu0 %v2897
        %3884 = vmatmul.mubr.bf16.gmra.mrb[0].mxu0 %v2896
        %v3885 = vpop.f32.mrb[0].mxu0
        %v3886 = vadd.f32 %v3773, %v3885
        %v3887 = vpop.f32.mrb[0].mxu0
        %v3888 = vadd.f32 %v3775, %v3887
        %v3889 = vpop.f32.mrb[0].mxu0
        %v3890 = vadd.f32 %v3777, %v3889
        %v3891 = vpop.f32.mrb[0].mxu0
        %v3892 = vadd.f32 %v3779, %v3891
        %3893 = vmatprep.mubr.bf16.mxu0 %v2905
        %3894 = vmatmul.mubr.bf16.gmra.mrb[0].mxu0 %v2904
        %v3895 = vpop.f32.mrb[0].mxu0
        %v3896 = vadd.f32 %v3783, %v3895
        %v3897 = vpop.f32.mrb[0].mxu0
        %v3898 = vadd.f32 %v3785, %v3897
        %v3899 = vpop.f32.mrb[0].mxu0
        %v3900 = vadd.f32 %v3787, %v3899
        %v3901 = vpop.f32.mrb[0].mxu0
        %v3902 = vadd.f32 %v3789, %v3901
        %3903 = vdwg.mxu0
        %3904 = vmatprep.subr.bf16.mxu0 %v3487
        %3905 = vmatpush1.bf16.msra.mxu0 %v3486
        %3906 = vmatprep.subr.bf16.mxu0 %v3489
        %3907 = vmatpush1.bf16.msra.mxu0 %v3488
        %3908 = vmatprep.subr.bf16.mxu0 %v3491
        %3909 = vmatpush1.bf16.msra.mxu0 %v3490
        %3910 = vmatprep.subr.bf16.mxu0 %v3493
        %3911 = vmatpush1.bf16.msra.mxu0 %v3492
        %3912 = vmatprep.subr.bf16.mxu0 %v3495
        %3913 = vmatpush1.bf16.msra.mxu0 %v3494
        %3914 = vmatprep.subr.bf16.mxu0 %v3497
        %3915 = vmatpush1.bf16.msra.mxu0 %v3496
        %3916 = vmatprep.subr.bf16.mxu0 %v3499
        %3917 = vmatpush1.bf16.msra.mxu0 %v3498
        %3918 = vmatprep.subr.bf16.mxu0 %v3501
        %3919 = vmatpush1.bf16.msra.mxu0 %v3500
        %3920 = vmatprep.subr.bf16.mxu0 %v3503
        %3921 = vmatpush1.bf16.msra.mxu0 %v3502
        %3922 = vmatprep.subr.bf16.mxu0 %v3505
        %3923 = vmatpush1.bf16.msra.mxu0 %v3504
        %3924 = vmatprep.subr.bf16.mxu0 %v3507
        %3925 = vmatpush1.bf16.msra.mxu0 %v3506
        %3926 = vmatprep.subr.bf16.mxu0 %v3509
        %3927 = vmatpush1.bf16.msra.mxu0 %v3508
        %3928 = vmatprep.subr.bf16.mxu0 %v3511
        %3929 = vmatpush1.bf16.msra.mxu0 %v3510
        %3930 = vmatprep.subr.bf16.mxu0 %v3513
        %3931 = vmatpush1.bf16.msra.mxu0 %v3512
        %3932 = vmatprep.subr.bf16.mxu0 %v3515
        %3933 = vmatpush1.bf16.msra.mxu0 %v3514
        %3934 = vmatprep.subr.bf16.mxu0 %v3517
        %3935 = vmatpush1.bf16.msra.mxu0 %v3516
        %3936 = vmatprep.mubr.bf16.mxu0 %v2851
        %3937 = vmatmul.mubr.bf16.gmra.mrb[0].mxu0 %v2850
        %v3938 = vpop.f32.mrb[0].mxu0
        %v3939 = vadd.f32 %v3826, %v3938
        %v3940 = vpop.f32.mrb[0].mxu0
        %v3941 = vadd.f32 %v3828, %v3940
        %v3942 = vpop.f32.mrb[0].mxu0
        %v3943 = vadd.f32 %v3830, %v3942
        %v3944 = vpop.f32.mrb[0].mxu0
        %v3945 = vadd.f32 %v3832, %v3944
        %3946 = vmatprep.mubr.bf16.mxu0 %v2859
        %3947 = vmatmul.mubr.bf16.gmra.mrb[0].mxu0 %v2858
        %v3948 = vpop.f32.mrb[0].mxu0
        %v3949 = vadd.f32 %v3836, %v3948
        %v3950 = vpop.f32.mrb[0].mxu0
        %v3951 = vadd.f32 %v3838, %v3950
        %v3952 = vpop.f32.mrb[0].mxu0
        %v3953 = vadd.f32 %v3840, %v3952
        %v3954 = vpop.f32.mrb[0].mxu0
        %v3955 = vadd.f32 %v3842, %v3954
        %3956 = vmatprep.mubr.bf16.mxu0 %v2867
        %3957 = vmatmul.mubr.bf16.gmra.mrb[0].mxu0 %v2866
        %v3958 = vpop.f32.mrb[0].mxu0
        %v3959 = vadd.f32 %v3846, %v3958
        %v3960 = vpop.f32.mrb[0].mxu0
        %v3961 = vadd.f32 %v3848, %v3960
        %v3962 = vpop.f32.mrb[0].mxu0
        %v3963 = vadd.f32 %v3850, %v3962
        %v3964 = vpop.f32.mrb[0].mxu0
        %v3965 = vadd.f32 %v3852, %v3964
        %3966 = vmatprep.mubr.bf16.mxu0 %v2875
        %3967 = vmatmul.mubr.bf16.gmra.mrb[0].mxu0 %v2874
        %v3968 = vpop.f32.mrb[0].mxu0
        %v3969 = vadd.f32 %v3856, %v3968
        %v3970 = vpop.f32.mrb[0].mxu0
        %v3971 = vadd.f32 %v3858, %v3970
        %v3972 = vpop.f32.mrb[0].mxu0
        %v3973 = vadd.f32 %v3860, %v3972
        %v3974 = vpop.f32.mrb[0].mxu0
        %v3975 = vadd.f32 %v3862, %v3974
        %3976 = vmatprep.mubr.bf16.mxu0 %v2883
        %3977 = vmatmul.mubr.bf16.gmra.mrb[0].mxu0 %v2882
        %v3978 = vpop.f32.mrb[0].mxu0
        %v3979 = vadd.f32 %v3866, %v3978
        %v3980 = vpop.f32.mrb[0].mxu0
        %v3981 = vadd.f32 %v3868, %v3980
        %v3982 = vpop.f32.mrb[0].mxu0
        %v3983 = vadd.f32 %v3870, %v3982
        %v3984 = vpop.f32.mrb[0].mxu0
        %v3985 = vadd.f32 %v3872, %v3984
        %3986 = vmatprep.mubr.bf16.mxu0 %v2891
        %3987 = vmatmul.mubr.bf16.gmra.mrb[0].mxu0 %v2890
        %v3988 = vpop.f32.mrb[0].mxu0
        %v3989 = vadd.f32 %v3876, %v3988
        %v3990 = vpop.f32.mrb[0].mxu0
        %v3991 = vadd.f32 %v3878, %v3990
        %v3992 = vpop.f32.mrb[0].mxu0
        %v3993 = vadd.f32 %v3880, %v3992
        %v3994 = vpop.f32.mrb[0].mxu0
        %v3995 = vadd.f32 %v3882, %v3994
        %3996 = vmatprep.mubr.bf16.mxu0 %v2899
        %3997 = vmatmul.mubr.bf16.gmra.mrb[0].mxu0 %v2898
        %v3998 = vpop.f32.mrb[0].mxu0
        %v3999 = vadd.f32 %v3886, %v3998
        %v4000 = vpop.f32.mrb[0].mxu0
        %v4001 = vadd.f32 %v3888, %v4000
        %v4002 = vpop.f32.mrb[0].mxu0
        %v4003 = vadd.f32 %v3890, %v4002
        %v4004 = vpop.f32.mrb[0].mxu0
        %v4005 = vadd.f32 %v3892, %v4004
        %4006 = vmatprep.mubr.bf16.mxu0 %v2907
        %4007 = vmatmul.mubr.bf16.gmra.mrb[0].mxu0 %v2906
        %v4008 = vpop.f32.mrb[0].mxu0
        %v4009 = vadd.f32 %v3896, %v4008
        %v4010 = vpop.f32.mrb[0].mxu0
        %v4011 = vadd.f32 %v3898, %v4010
        %v4012 = vpop.f32.mrb[0].mxu0
        %v4013 = vadd.f32 %v3900, %v4012
        %v4014 = vpop.f32.mrb[0].mxu0
        %v4015 = vadd.f32 %v3902, %v4014
        %4016 = vdwg.mxu0
        %4017 = vmatprep.subr.bf16.mxu0 %v3519
        %4018 = vmatpush1.bf16.msra.mxu0 %v3518
        %4019 = vmatprep.subr.bf16.mxu0 %v3521
        %4020 = vmatpush1.bf16.msra.mxu0 %v3520
        %4021 = vmatprep.subr.bf16.mxu0 %v3523
        %4022 = vmatpush1.bf16.msra.mxu0 %v3522
        %4023 = vmatprep.subr.bf16.mxu0 %v3525
        %4024 = vmatpush1.bf16.msra.mxu0 %v3524
        %4025 = vmatprep.subr.bf16.mxu0 %v3527
        %4026 = vmatpush1.bf16.msra.mxu0 %v3526
        %4027 = vmatprep.subr.bf16.mxu0 %v3529
        %4028 = vmatpush1.bf16.msra.mxu0 %v3528
        %4029 = vmatprep.subr.bf16.mxu0 %v3531
        %4030 = vmatpush1.bf16.msra.mxu0 %v3530
        %4031 = vmatprep.subr.bf16.mxu0 %v3533
        %4032 = vmatpush1.bf16.msra.mxu0 %v3532
        %4033 = vmatprep.subr.bf16.mxu0 %v3535
        %4034 = vmatpush1.bf16.msra.mxu0 %v3534
        %4035 = vmatprep.subr.bf16.mxu0 %v3537
        %4036 = vmatpush1.bf16.msra.mxu0 %v3536
        %4037 = vmatprep.subr.bf16.mxu0 %v3539
        %4038 = vmatpush1.bf16.msra.mxu0 %v3538
        %4039 = vmatprep.subr.bf16.mxu0 %v3541
        %4040 = vmatpush1.bf16.msra.mxu0 %v3540
        %4041 = vmatprep.subr.bf16.mxu0 %v3543
        %4042 = vmatpush1.bf16.msra.mxu0 %v3542
        %4043 = vmatprep.subr.bf16.mxu0 %v3545
        %4044 = vmatpush1.bf16.msra.mxu0 %v3544
        %4045 = vmatprep.subr.bf16.mxu0 %v3547
        %4046 = vmatpush1.bf16.msra.mxu0 %v3546
        %4047 = vmatprep.subr.bf16.mxu0 %v3549
        %4048 = vmatpush1.bf16.msra.mxu0 %v3548
        %4049 = vmatprep.mubr.bf16.mxu0 %v2853
        %4050 = vmatmul.mubr.bf16.gmra.mrb[0].mxu0 %v2852
        %v4051 = vpop.f32.mrb[0].mxu0
        %v4052 = vadd.f32 %v3939, %v4051
        %v4053 = vpop.f32.mrb[0].mxu0
        %v4054 = vadd.f32 %v3941, %v4053
        %v4055 = vpop.f32.mrb[0].mxu0
        %v4056 = vadd.f32 %v3943, %v4055
        %v4057 = vpop.f32.mrb[0].mxu0
        %v4058 = vadd.f32 %v3945, %v4057
        %4059 = vmatprep.mubr.bf16.mxu0 %v2861
        %4060 = vmatmul.mubr.bf16.gmra.mrb[0].mxu0 %v2860
        %v4061 = vpop.f32.mrb[0].mxu0
        %v4062 = vadd.f32 %v3949, %v4061
        %v4063 = vpop.f32.mrb[0].mxu0
        %v4064 = vadd.f32 %v3951, %v4063
        %v4065 = vpop.f32.mrb[0].mxu0
        %v4066 = vadd.f32 %v3953, %v4065
        %v4067 = vpop.f32.mrb[0].mxu0
        %v4068 = vadd.f32 %v3955, %v4067
        %4069 = vmatprep.mubr.bf16.mxu0 %v2869
        %4070 = vmatmul.mubr.bf16.gmra.mrb[0].mxu0 %v2868
        %v4071 = vpop.f32.mrb[0].mxu0
        %v4072 = vadd.f32 %v3959, %v4071
        %v4073 = vpop.f32.mrb[0].mxu0
        %v4074 = vadd.f32 %v3961, %v4073
        %v4075 = vpop.f32.mrb[0].mxu0
        %v4076 = vadd.f32 %v3963, %v4075
        %v4077 = vpop.f32.mrb[0].mxu0
        %v4078 = vadd.f32 %v3965, %v4077
        %4079 = vmatprep.mubr.bf16.mxu0 %v2877
        %4080 = vmatmul.mubr.bf16.gmra.mrb[0].mxu0 %v2876
        %v4081 = vpop.f32.mrb[0].mxu0
        %v4082 = vadd.f32 %v3969, %v4081
        %v4083 = vpop.f32.mrb[0].mxu0
        %v4084 = vadd.f32 %v3971, %v4083
        %v4085 = vpop.f32.mrb[0].mxu0
        %v4086 = vadd.f32 %v3973, %v4085
        %v4087 = vpop.f32.mrb[0].mxu0
        %v4088 = vadd.f32 %v3975, %v4087
        %4089 = vmatprep.mubr.bf16.mxu0 %v2885
        %4090 = vmatmul.mubr.bf16.gmra.mrb[0].mxu0 %v2884
        %v4091 = vpop.f32.mrb[0].mxu0
        %v4092 = vadd.f32 %v3979, %v4091
        %v4093 = vpop.f32.mrb[0].mxu0
        %v4094 = vadd.f32 %v3981, %v4093
        %v4095 = vpop.f32.mrb[0].mxu0
        %v4096 = vadd.f32 %v3983, %v4095
        %v4097 = vpop.f32.mrb[0].mxu0
        %v4098 = vadd.f32 %v3985, %v4097
        %4099 = vmatprep.mubr.bf16.mxu0 %v2893
        %4100 = vmatmul.mubr.bf16.gmra.mrb[0].mxu0 %v2892
        %v4101 = vpop.f32.mrb[0].mxu0
        %v4102 = vadd.f32 %v3989, %v4101
        %v4103 = vpop.f32.mrb[0].mxu0
        %v4104 = vadd.f32 %v3991, %v4103
        %v4105 = vpop.f32.mrb[0].mxu0
        %v4106 = vadd.f32 %v3993, %v4105
        %v4107 = vpop.f32.mrb[0].mxu0
        %v4108 = vadd.f32 %v3995, %v4107
        %4109 = vmatprep.mubr.bf16.mxu0 %v2901
        %4110 = vmatmul.mubr.bf16.gmra.mrb[0].mxu0 %v2900
        %v4111 = vpop.f32.mrb[0].mxu0
        %v4112 = vadd.f32 %v3999, %v4111
        %v4113 = vpop.f32.mrb[0].mxu0
        %v4114 = vadd.f32 %v4001, %v4113
        %v4115 = vpop.f32.mrb[0].mxu0
        %v4116 = vadd.f32 %v4003, %v4115
        %v4117 = vpop.f32.mrb[0].mxu0
        %v4118 = vadd.f32 %v4005, %v4117
        %4119 = vmatprep.mubr.bf16.mxu0 %v2909
        %4120 = vmatmul.mubr.bf16.gmra.mrb[0].mxu0 %v2908
        %v4121 = vpop.f32.mrb[0].mxu0
        %v4122 = vadd.f32 %v4009, %v4121
        %v4123 = vpop.f32.mrb[0].mxu0
        %v4124 = vadd.f32 %v4011, %v4123
        %v4125 = vpop.f32.mrb[0].mxu0
        %v4126 = vadd.f32 %v4013, %v4125
        %v4127 = vpop.f32.mrb[0].mxu0
        %v4128 = vadd.f32 %v4015, %v4127
        %4129 = vdwg.mxu0
        %4130 = vst [vmem:[%s316] sm:$0xff] %v4052
        %4131 = vst [vmem:[%s316 + $0x8] sm:$0xff] %v4054
        %4132 = vst [vmem:[%s316 + $0x10] sm:$0xff] %v4056
        %4133 = vst [vmem:[%s316 + $0x18] sm:$0xff] %v4058
        %4134 = vst [vmem:[%s316 + $0x20] sm:$0xff] %v4062
        %4135 = vst [vmem:[%s316 + $0x28] sm:$0xff] %v4064
        %4136 = vst [vmem:[%s316 + $0x30] sm:$0xff] %v4066
        %4137 = vst [vmem:[%s316 + $0x38] sm:$0xff] %v4068
        %4138 = vst [vmem:[%s316 + $0x40] sm:$0xff] %v4072
        %4139 = vst [vmem:[%s316 + $0x48] sm:$0xff] %v4074
        %4140 = vst [vmem:[%s316 + $0x50] sm:$0xff] %v4076
        %4141 = vst [vmem:[%s316 + $0x58] sm:$0xff] %v4078
        %4142 = vst [vmem:[%s316 + $0x60] sm:$0xff] %v4082
        %4143 = vst [vmem:[%s316 + $0x68] sm:$0xff] %v4084
        %4144 = vst [vmem:[%s316 + $0x70] sm:$0xff] %v4086
        %4145 = vst [vmem:[%s316 + $0x78] sm:$0xff] %v4088
        %4146 = vst [vmem:[%s316 + $0x80] sm:$0xff] %v4092
        %4147 = vst [vmem:[%s316 + $0x88] sm:$0xff] %v4094
        %4148 = vst [vmem:[%s316 + $0x90] sm:$0xff] %v4096
        %4149 = vst [vmem:[%s316 + $0x98] sm:$0xff] %v4098
        %4150 = vst [vmem:[%s316 + $0xa0] sm:$0xff] %v4102
        %4151 = vst [vmem:[%s316 + $0xa8] sm:$0xff] %v4104
        %4152 = vst [vmem:[%s316 + $0xb0] sm:$0xff] %v4106
        %4153 = vst [vmem:[%s316 + $0xb8] sm:$0xff] %v4108
        %4154 = vst [vmem:[%s316 + $0xc0] sm:$0xff] %v4112
        %4155 = vst [vmem:[%s316 + $0xc8] sm:$0xff] %v4114
        %4156 = vst [vmem:[%s316 + $0xd0] sm:$0xff] %v4116
        %4157 = vst [vmem:[%s316 + $0xd8] sm:$0xff] %v4118
        %4158 = vst [vmem:[%s316 + $0xe0] sm:$0xff] %v4122
        %4159 = vst [vmem:[%s316 + $0xe8] sm:$0xff] %v4124
        %4160 = vst [vmem:[%s316 + $0xf0] sm:$0xff] %v4126
        %4161 = vst [vmem:[%s316 + $0xf8] sm:$0xff] %v4128
        %v4162 = vcvt.f32.s32.to.zero.pseudo %v2326
        %v4163 = vcvt.f32.s32.to.zero.pseudo %v2335
        %v4164 = vcvt.f32.s32.to.zero.pseudo %v2344
        %v4165 = vcvt.f32.s32.to.zero.pseudo %v2353
        %v4166 = vcvt.f32.s32.to.zero.pseudo %v2362
        %v4167 = vcvt.f32.s32.to.zero.pseudo %v2371
        %v4168 = vcvt.f32.s32.to.zero.pseudo %v2380
        %v4169 = vcvt.f32.s32.to.zero.pseudo %v2389
        %v4170 = vcvt.f32.s32.to.zero.pseudo %v2398
        %v4171 = vcvt.f32.s32.to.zero.pseudo %v2407
        %v4172 = vcvt.f32.s32.to.zero.pseudo %v2416
        %v4173 = vcvt.f32.s32.to.zero.pseudo %v2425
        %v4174 = vcvt.f32.s32.to.zero.pseudo %v2434
        %v4175 = vcvt.f32.s32.to.zero.pseudo %v2443
        %v4176 = vcvt.f32.s32.to.zero.pseudo %v2452
        %v4177 = vcvt.f32.s32.to.zero.pseudo %v2461
        %vm4178 = vcmask 7168
        %4179 = vst.msk [vmem:[%s323] sm:$0xff] %vm4178, %v4162
        %4180 = vst.msk [vmem:[%s323 + $0x8] sm:$0xff] %vm4178, %v4163
        %4181 = vst.msk [vmem:[%s323 + $0x10] sm:$0xff] %vm4178, %v4164
        %4182 = vst.msk [vmem:[%s323 + $0x18] sm:$0xff] %vm4178, %v4165
        %4183 = vst.msk [vmem:[%s323 + $0x20] sm:$0xff] %vm4178, %v4166
        %4184 = vst.msk [vmem:[%s323 + $0x28] sm:$0xff] %vm4178, %v4167
        %4185 = vst.msk [vmem:[%s323 + $0x30] sm:$0xff] %vm4178, %v4168
        %4186 = vst.msk [vmem:[%s323 + $0x38] sm:$0xff] %vm4178, %v4169
        %4187 = vst.msk [vmem:[%s323 + $0x40] sm:$0xff] %vm4178, %v4170
        %4188 = vst.msk [vmem:[%s323 + $0x48] sm:$0xff] %vm4178, %v4171
        %4189 = vst.msk [vmem:[%s323 + $0x50] sm:$0xff] %vm4178, %v4172
        %4190 = vst.msk [vmem:[%s323 + $0x58] sm:$0xff] %vm4178, %v4173
        %4191 = vst.msk [vmem:[%s323 + $0x60] sm:$0xff] %vm4178, %v4174
        %4192 = vst.msk [vmem:[%s323 + $0x68] sm:$0xff] %vm4178, %v4175
        %4193 = vst.msk [vmem:[%s323 + $0x70] sm:$0xff] %vm4178, %v4176
        %4194 = vst.msk [vmem:[%s323 + $0x78] sm:$0xff] %vm4178, %v4177
        %v4195 = vsub.f32 %v4052, %v335
        %v4196 = vsub.f32 %v4054, %v336
        %v4197 = vsub.f32 %v4056, %v337
        %v4198 = vsub.f32 %v4058, %v338
        %v4199 = vsub.f32 %v4062, %v339
        %v4200 = vsub.f32 %v4064, %v340
        %v4201 = vsub.f32 %v4066, %v341
        %v4202 = vsub.f32 %v4068, %v342
        %v4203 = vsub.f32 %v4072, %v343
        %v4204 = vsub.f32 %v4074, %v344
        %v4205 = vsub.f32 %v4076, %v345
        %v4206 = vsub.f32 %v4078, %v346
        %v4207 = vsub.f32 %v4082, %v347
        %v4208 = vsub.f32 %v4084, %v348
        %v4209 = vsub.f32 %v4086, %v349
        %v4210 = vsub.f32 %v4088, %v350
        %v4211 = vsub.f32 %v4092, %v351
        %v4212 = vsub.f32 %v4094, %v352
        %v4213 = vsub.f32 %v4096, %v353
        %v4214 = vsub.f32 %v4098, %v354
        %v4215 = vsub.f32 %v4102, %v355
        %v4216 = vsub.f32 %v4104, %v356
        %v4217 = vsub.f32 %v4106, %v357
        %v4218 = vsub.f32 %v4108, %v358
        %v4219 = vsub.f32 %v4112, %v359
        %v4220 = vsub.f32 %v4114, %v360
        %v4221 = vsub.f32 %v4116, %v361
        %v4222 = vsub.f32 %v4118, %v362
        %v4223 = vsub.f32 %v4122, %v363
        %v4224 = vsub.f32 %v4124, %v364
        %v4225 = vsub.f32 %v4126, %v365
        %v4226 = vsub.f32 %v4128, %v366
        %v4227 = vmul.f32 %v4195, %v4195
        %v4228 = vmul.f32 %v4196, %v4196
        %v4229 = vmul.f32 %v4197, %v4197
        %v4230 = vmul.f32 %v4198, %v4198
        %v4231 = vmul.f32 %v4199, %v4199
        %v4232 = vmul.f32 %v4200, %v4200
        %v4233 = vmul.f32 %v4201, %v4201
        %v4234 = vmul.f32 %v4202, %v4202
        %v4235 = vmul.f32 %v4203, %v4203
        %v4236 = vmul.f32 %v4204, %v4204
        %v4237 = vmul.f32 %v4205, %v4205
        %v4238 = vmul.f32 %v4206, %v4206
        %v4239 = vmul.f32 %v4207, %v4207
        %v4240 = vmul.f32 %v4208, %v4208
        %v4241 = vmul.f32 %v4209, %v4209
        %v4242 = vmul.f32 %v4210, %v4210
        %v4243 = vmul.f32 %v4211, %v4211
        %v4244 = vmul.f32 %v4212, %v4212
        %v4245 = vmul.f32 %v4213, %v4213
        %v4246 = vmul.f32 %v4214, %v4214
        %v4247 = vmul.f32 %v4215, %v4215
        %v4248 = vmul.f32 %v4216, %v4216
        %v4249 = vmul.f32 %v4217, %v4217
        %v4250 = vmul.f32 %v4218, %v4218
        %v4251 = vmul.f32 %v4219, %v4219
        %v4252 = vmul.f32 %v4220, %v4220
        %v4253 = vmul.f32 %v4221, %v4221
        %v4254 = vmul.f32 %v4222, %v4222
        %v4255 = vmul.f32 %v4223, %v4223
        %v4256 = vmul.f32 %v4224, %v4224
        %v4257 = vmul.f32 %v4225, %v4225
        %v4258 = vmul.f32 %v4226, %v4226
        %v4259 = vadd.f32 %v4227, %v4228
        %4260 = vadd.xlane.f32.xlu0 %v4259
        %v4261 = vpop.xlane.xlu0 %4260
        %v4262 = vadd.f32 %v4229, %v4230
        %4263 = vadd.xlane.f32.xlu0 %v4262
        %v4264 = vpop.xlane.xlu0 %4263
        %v4265 = vadd.f32 %v4231, %v4232
        %4266 = vadd.xlane.f32.xlu0 %v4265
        %v4267 = vpop.xlane.xlu0 %4266
        %v4268 = vadd.f32 %v4233, %v4234
        %4269 = vadd.xlane.f32.xlu0 %v4268
        %v4270 = vpop.xlane.xlu0 %4269
        %v4271 = vadd.f32 %v4235, %v4236
        %4272 = vadd.xlane.f32.xlu0 %v4271
        %v4273 = vpop.xlane.xlu0 %4272
        %v4274 = vadd.f32 %v4237, %v4238
        %4275 = vadd.xlane.f32.xlu0 %v4274
        %v4276 = vpop.xlane.xlu0 %4275
        %v4277 = vadd.f32 %v4239, %v4240
        %4278 = vadd.xlane.f32.xlu0 %v4277
        %v4279 = vpop.xlane.xlu0 %4278
        %v4280 = vadd.f32 %v4241, %v4242
        %4281 = vadd.xlane.f32.xlu0 %v4280
        %v4282 = vpop.xlane.xlu0 %4281
        %v4283 = vadd.f32 %v4243, %v4244
        %4284 = vadd.xlane.f32.xlu0 %v4283
        %v4285 = vpop.xlane.xlu0 %4284
        %v4286 = vadd.f32 %v4245, %v4246
        %4287 = vadd.xlane.f32.xlu0 %v4286
        %v4288 = vpop.xlane.xlu0 %4287
        %v4289 = vadd.f32 %v4247, %v4248
        %4290 = vadd.xlane.f32.xlu0 %v4289
        %v4291 = vpop.xlane.xlu0 %4290
        %v4292 = vadd.f32 %v4249, %v4250
        %4293 = vadd.xlane.f32.xlu0 %v4292
        %v4294 = vpop.xlane.xlu0 %4293
        %v4295 = vadd.f32 %v4251, %v4252
        %4296 = vadd.xlane.f32.xlu0 %v4295
        %v4297 = vpop.xlane.xlu0 %4296
        %v4298 = vadd.f32 %v4253, %v4254
        %4299 = vadd.xlane.f32.xlu0 %v4298
        %v4300 = vpop.xlane.xlu0 %4299
        %v4301 = vadd.f32 %v4255, %v4256
        %4302 = vadd.xlane.f32.xlu0 %v4301
        %v4303 = vpop.xlane.xlu0 %4302
        %v4304 = vadd.f32 %v4257, %v4258
        %4305 = vadd.xlane.f32.xlu0 %v4304
        %v4306 = vpop.xlane.xlu0 %4305
        %4307 = vst.msk [vmem:[%s330] sm:$0xff] %vm4178, %v4261
        %4308 = vst.msk [vmem:[%s330 + $0x8] sm:$0xff] %vm4178, %v4264
        %4309 = vst.msk [vmem:[%s330 + $0x10] sm:$0xff] %vm4178, %v4267
        %4310 = vst.msk [vmem:[%s330 + $0x18] sm:$0xff] %vm4178, %v4270
        %4311 = vst.msk [vmem:[%s330 + $0x20] sm:$0xff] %vm4178, %v4273
        %4312 = vst.msk [vmem:[%s330 + $0x28] sm:$0xff] %vm4178, %v4276
        %4313 = vst.msk [vmem:[%s330 + $0x30] sm:$0xff] %vm4178, %v4279
        %4314 = vst.msk [vmem:[%s330 + $0x38] sm:$0xff] %vm4178, %v4282
        %4315 = vst.msk [vmem:[%s330 + $0x40] sm:$0xff] %vm4178, %v4285
        %4316 = vst.msk [vmem:[%s330 + $0x48] sm:$0xff] %vm4178, %v4288
        %4317 = vst.msk [vmem:[%s330 + $0x50] sm:$0xff] %vm4178, %v4291
        %4318 = vst.msk [vmem:[%s330 + $0x58] sm:$0xff] %vm4178, %v4294
        %4319 = vst.msk [vmem:[%s330 + $0x60] sm:$0xff] %vm4178, %v4297
        %4320 = vst.msk [vmem:[%s330 + $0x68] sm:$0xff] %vm4178, %v4300
        %4321 = vst.msk [vmem:[%s330 + $0x70] sm:$0xff] %vm4178, %v4303
        %4322 = vst.msk [vmem:[%s330 + $0x78] sm:$0xff] %vm4178, %v4306
        %s4323 = sand.u32 %s126, 1
        %s4324 = scalar_lea.sflag [#allocation4], %s4323
        %s4325 = sand.u32 %s126, 1
        %s4326 = smul.addr %s4325, 256
        %s4327 = scalar_lea.vmem [#allocation10], %s4326
        %s4328 = sand.u32 %s29, 1
        %s4329 = scalar_lea.sflag [#allocation12], %s4328
        %s4330 = sand.u32 %s152, 1
        %s4331 = smul.addr %s4330, 128
        %s4332 = scalar_lea.vmem [#allocation11], %s4331
        %s4333 = sand.u32 %s29, 1
        %s4334 = scalar_lea.sflag [#allocation12], %s4333
        %s4335 = sand.u32 %s178, 1
        %s4336 = smul.addr %s4335, 128
        %s4337 = scalar_lea.vmem [#allocation13], %s4336
        // Predicated region
        $region53: #{vq_forward.1} parent=35 // pred_check
          %p4338 = pneg %p136
        $region54: #{vq_forward.1} parent=35 // pred_check_branch
          %4340 = sbr.rel (%p4338) target = $region56
        $region55: #{vq_forward.1} parent=35 // pred_region
          %s4341 = smul.u32 16, %s29
          %s4343 = ssub.s32 4096, 4096
          %4344 = vsyncadd %s4324, %s4343
          %s4345 = smul.addr %s4341, 2
          %s4346 = smul.addr %s4345, 128
          %s4347 = scalar_lea.hbm %s4, %s4346
          %s4348 = sshll.u32 %s4327, 4
          %s4349 = int_to_ptr.vmem [resolvable:$true] %s4348
          %4354 = dma.vmem_to_hbm [thread:$0]  %s4349, 4096, %s4347, %s4324, 256, 256, 16
        $region56: #{vq_forward.1} parent=35 // pred_fallthru
          _
        // Predicated region
        $region57: #{vq_forward.1} parent=35 // pred_check
          %p4355 = pneg %p162
        $region58: #{vq_forward.1} parent=35 // pred_check_branch
          %4357 = sbr.rel (%p4355) target = $region60
        $region59: #{vq_forward.1} parent=35 // pred_region
          %s4358 = smul.u32 16, %s29
          %s4360 = ssub.s32 2048, 2048
          %4361 = vsyncadd %s4329, %s4360
          %s4362 = smul.addr %s4358, 128
          %s4363 = scalar_lea.hbm %s5, %s4362
          %s4364 = sshll.u32 %s4332, 4
          %s4365 = int_to_ptr.vmem [resolvable:$true] %s4364
          %4370 = dma.vmem_to_hbm [thread:$0]  %s4365, 2048, %s4363, %s4329, 128, 128, 8
        $region60: #{vq_forward.1} parent=35 // pred_fallthru
          _
        // Predicated region
        $region61: #{vq_forward.1} parent=35 // pred_check
          %p4371 = pneg %p188
        $region62: #{vq_forward.1} parent=35 // pred_check_branch
          %4373 = sbr.rel (%p4371) target = $region64
        $region63: #{vq_forward.1} parent=35 // pred_region
          %s4374 = smul.u32 16, %s29
          %s4376 = ssub.s32 2048, 2048
          %4377 = vsyncadd %s4334, %s4376
          %s4378 = smul.addr %s4374, 128
          %s4379 = scalar_lea.hbm %s6, %s4378
          %s4380 = sshll.u32 %s4337, 4
          %s4381 = int_to_ptr.vmem [resolvable:$true] %s4380
          %4386 = dma.vmem_to_hbm [thread:$0]  %s4381, 2048, %s4379, %s4334, 128, 128, 8
        $region64: #{vq_forward.1} parent=35 // pred_fallthru
          _
      $region36: #{vq_forward.1} parent=5 // pred_fallthru
        _
      %p4387 = scmp.le.s32.totalorder 2, %s24
      // Predicated region
      $region65: #{vq_forward.1} parent=5 // pred_check
        %p4388 = pneg %p4387
      $region66: #{vq_forward.1} parent=5 // pred_check_branch
        %4390 = sbr.rel (%p4388) target = $region68
      $region67: #{vq_forward.1} parent=5 // pred_region
        %s4391 = ssub.s32 %s24, 2
        // Predicated region
        $region69: #{vq_forward.1} parent=67 // pred_check
          %p4392 = pneg %p142
        $region70: #{vq_forward.1} parent=67 // pred_check_branch
          %4394 = sbr.rel (%p4392) target = $region72
        $region71: #{vq_forward.1} parent=67 // pred_region
          %s4395 = sand.u32 %s127, 1
          %s4396 = scalar_lea.sflag [#allocation4], %s4395
          %s4397 = sand.u32 %s127, 1
          %s4398 = smul.addr %s4397, 256
          %s4399 = scalar_lea.vmem [#allocation10], %s4398
          %4400 = dma.done %s4396, 4096
        $region72: #{vq_forward.1} parent=67 // pred_fallthru
          _
        // Predicated region
        $region73: #{vq_forward.1} parent=67 // pred_check
          %p4401 = pneg %p168
        $region74: #{vq_forward.1} parent=67 // pred_check_branch
          %4403 = sbr.rel (%p4401) target = $region76
        $region75: #{vq_forward.1} parent=67 // pred_region
          %s4404 = sand.u32 %s30, 1
          %s4405 = scalar_lea.sflag [#allocation12], %s4404
          %s4406 = sand.u32 %s153, 1
          %s4407 = smul.addr %s4406, 128
          %s4408 = scalar_lea.vmem [#allocation11], %s4407
          %4409 = dma.done %s4405, 2048
        $region76: #{vq_forward.1} parent=67 // pred_fallthru
          _
        // Predicated region
        $region77: #{vq_forward.1} parent=67 // pred_check
          %p4410 = pneg %p194
        $region78: #{vq_forward.1} parent=67 // pred_check_branch
          %4412 = sbr.rel (%p4410) target = $region80
        $region79: #{vq_forward.1} parent=67 // pred_region
          %s4413 = sand.u32 %s30, 1
          %s4414 = scalar_lea.sflag [#allocation12], %s4413
          %s4415 = sand.u32 %s179, 1
          %s4416 = smul.addr %s4415, 128
          %s4417 = scalar_lea.vmem [#allocation13], %s4416
          %4418 = dma.done %s4414, 2048
        $region80: #{vq_forward.1} parent=67 // pred_fallthru
          _
      $region68: #{vq_forward.1} parent=5 // pred_fallthru
        _
    $region6: #{vq_forward.1} parent=1 // loop_footer
      %s28 = sadd.s32 1, %s24
    $region7: #{vq_forward.1} parent=1 // loop_footer_branch
      %23 = sbr.rel target = $region3
    $region8: #{vq_forward.1} parent=1 // loop_exit
      _
    %4419 = vsyncpa [#allocation3], 1
    %s4420 = scalar_lea.sflag [#allocation3], 1
    %4421 = vsyncpa %s4420, 1
    %4422 = vsyncpa [#allocation6], 1
    %4423 = vsyncpa [#allocation9], 1
    %4424 = vsyncpa [#allocation4], 1
    %s4425 = scalar_lea.sflag [#allocation4], 1
    %4426 = vsyncpa %s4425, 1
    %4427 = vsyncpa [#allocation12], 1
    %s4428 = scalar_lea.sflag [#allocation12], 1
    %4429 = vsyncpa %s4428, 1

</llo_original>
